<compile_context>
chip_gen: v7x
topology: tpu7x:2x2x1
jax: 0.10.0
libtpu: 0.0.40
codegen_flags: <defaults>
</compile_context>

<pallas_src>
import math

import jax
import jax.numpy as jnp
from jax import lax
from jax.experimental import pallas as pl
from jax.experimental.pallas import tpu as pltpu


def _round_up(x, m):
    return ((x + m - 1) // m) * m


def _pad_to(x, shape):
    return jnp.pad(x, [(0, s - d) for d, s in zip(x.shape, shape)])


def _pad_gate_cols(w, H, Hp):
    """(..., 3H) -> (..., 3Hp): each GRU gate block zero-padded to Hp lanes."""
    blocks = []
    for g in range(3):
        blk = w[..., g * H:(g + 1) * H]
        blocks.append(_pad_to(blk, blk.shape[:-1] + (Hp,)))
    return jnp.concatenate(blocks, axis=-1)


def _make_decoder_kernel(T, Tb, Hp):
    """Kernel factory (closes over static sizes)."""
    f32, bf16 = jnp.float32, jnp.bfloat16
    has_tail = (T % Tb) != 0

    def kernel(gi_ref, pre_ref, enc_ref, pk_ref, mask_ref, h0_ref,
               whq_ref, wctx_ref, wpreh_ref, bhh_ref, ven_ref,
               dec_ref, preo_ref, hid_ref, h_scr):
        t_blk = pl.program_id(1)
        Sp = enc_ref.shape[1]

        # (Re)initialise the carried hidden state on the first T-block of each
        # batch block.
        @pl.when(t_blk == 0)
        def _():
            h_scr[...] = h0_ref[...]

        # Per-grid-step invariant loads.  The big buffers stay bf16 — no f32
        # copies are materialised; promotion happens inside the expressions.
        proj_key = pk_ref[...]                   # (Bb, Sp, Hp) bf16
        enc_hid = enc_ref[...]                   # (Bb, Sp, Cp) bf16
        valid = mask_ref[...] > 0.0              # (Bb, Sp) bool
        v_en = ven_ref[...].reshape(1, 1, Hp)    # (1, 1, Hp) f32
        w_hq = whq_ref[...]                      # (Hp, 4Hp) f32 (recurrent path in f32)
        w_ctx = wctx_ref[...]                    # (Cp, 4Hp) bf16
        w_preh = wpreh_ref[...]                  # (Hp, Hp)  bf16
        bhh = bhh_ref[...]                       # (1, 3Hp)  f32
        neg_big = jnp.float32(-1e30)             # finite -> no inf-inf NaN risk

        def step(i, hidden):
            # ---- fused recurrent matmul: [attention query | GRU gh(r,z,n)] ----
            # Kept f32 so bf16 rounding does not compound through the recurrence.
            hq = jnp.dot(hidden, w_hq, preferred_element_type=f32)      # (Bb, 4Hp)
            q = hq[:, :Hp]
            gh = hq[:, Hp:] + bhh                                       # (Bb, 3Hp)

            # ---- Bahdanau attention (f32 VPU/EUP math; bf16 kept on v5e too) ----
            energy = jnp.tanh(q[:, None, :] + proj_key)                 # (Bb, Sp, Hp)
            scores = jnp.sum(energy * v_en, axis=-1)                    # (Bb, Sp)
            scores = jnp.where(valid, scores, neg_big)
            scores = scores - jnp.max(scores, axis=-1, keepdims=True)
            p = jnp.exp(scores)
            alphas = p * pl.reciprocal(jnp.sum(p, axis=-1, keepdims=True),
                                       approx=True)                     # (Bb, Sp)
            if Sp >= 64:
                # Large-S: ride the MXU for the weighted sum over source positions.
                context = jnp.einsum('bqs,bsc->bqc',
                                     alphas.astype(bf16)[:, None, :], enc_hid,
                                     preferred_element_type=f32)[:, 0, :]
            else:
                # Small-S (toy config): VPU mul + sublane reduce is cheaper.
                context = jnp.sum(alphas[:, :, None] * enc_hid.astype(f32),
                                  axis=1)                               # (Bb, Cp)

            # ---- fused context matmul: [GRU gi context part | pre_output ctx] ----
            ctx_proj = jnp.dot(context.astype(bf16), w_ctx,
                               preferred_element_type=f32)              # (Bb, 4Hp)
            gi = gi_ref[i].astype(f32) + ctx_proj[:, :3 * Hp]           # (Bb, 3Hp)

            # ---- GRU gates, PyTorch order (r, z, n); lane-aligned Hp slices ----
            r = jax.nn.sigmoid(gi[:, :Hp] + gh[:, :Hp])
            z = jax.nn.sigmoid(gi[:, Hp:2 * Hp] + gh[:, Hp:2 * Hp])
            n = jnp.tanh(gi[:, 2 * Hp:] + r * gh[:, 2 * Hp:])
            h_new = (1.0 - z) * n + z * hidden                          # (Bb, Hp)

            if has_tail:
                # Freeze the state on zero-padded tail steps of the last block.
                h_new = jnp.where(t_blk * Tb + i < T, h_new, hidden)

            dec_ref[i] = h_new.astype(dec_ref.dtype)

            # ---- pre_output = [emb | h_new | context] @ W_pre (split/accum) ----
            pre = (pre_ref[i].astype(f32)
                   + jnp.dot(h_new.astype(bf16), w_preh,
                             preferred_element_type=f32)
                   + ctx_proj[:, 3 * Hp:])                              # (Bb, Hp)
            preo_ref[i] = pre.astype(preo_ref.dtype)
            return h_new

        h_final = lax.fori_loop(0, Tb, step, h_scr[...], unroll=min(Tb, 8))
        h_scr[...] = h_final
        # hid_ref maps to the same block for every t-block -> stays resident;
        # the value written on the last t-block is what lands in HBM.
        hid_ref[...] = h_final.astype(hid_ref.dtype)

    return kernel


def decoder_forward(trg_embed, encoder_hidden, encoder_final, src_mask, params,
                    block_t=8, block_b=None):
    """trg_embed: [B,T,E], encoder_hidden: [B,S,2H], encoder_final: [B,2H], src_mask: [B,S]."""
    B, T, E = trg_embed.shape
    _, S, H2 = encoder_hidden.shape
    H = H2 // 2
    f32, bf16 = jnp.float32, jnp.bfloat16

    Hp = _round_up(H, 128)          # lane-pad hidden dim
    Cp = _round_up(2 * H, 128)      # lane-pad context / encoder feature dim
    Sp = _round_up(S, 8)            # sublane-pad source length
    Tb = max(1, min(block_t, T))    # decode steps per grid block
    Tp = _round_up(T, Tb)
    Bb = B if block_b is None else block_b   # batch block (B//2 to split on v7x 2-TC)
    assert B % Bb == 0 and (Bb == B or Bb % 8 == 0)
    nb, nt = B // Bb, Tp // Tb

    # ---- one-time XLA precompute (big MXU matmuls off the serial path) ----
    h0 = jnp.tanh(encoder_final @ params["W_bridge"] + params["b_bridge"])   # (B, H)
    proj_key = jnp.einsum('bsk,kh->bsh', encoder_hidden, params["W_key"])    # (B, S, H)

    trg_tm = jnp.transpose(trg_embed, (1, 0, 2))                             # (T, B, E)
    flat = trg_tm.reshape(T * B, E)
    W_ih, W_pre = params["W_ih"], params["W_pre"]
    gi_emb = (flat @ W_ih[:E]).reshape(T, B, 3 * H) + params["b_ih"]         # (T, B, 3H)
    pre_emb = (flat @ W_pre[:E]).reshape(T, B, H)                            # (T, B, H)

    # ---- zero-pad to lane/sublane-friendly shapes & per-gate 128-lane layout ----
    gi_emb_p = _pad_to(_pad_gate_cols(gi_emb, H, Hp), (Tp, B, 3 * Hp)).astype(bf16)
    pre_emb_p = _pad_to(pre_emb, (Tp, B, Hp)).astype(bf16)
    enc_hid_p = _pad_to(encoder_hidden, (B, Sp, Cp)).astype(bf16)
    proj_key_p = _pad_to(proj_key, (B, Sp, Hp)).astype(bf16)
    mask_p = _pad_to(src_mask.astype(f32), (B, Sp))
    h0_p = _pad_to(h0, (B, Hp)).astype(f32)

    # Fused shared-LHS weights (column blocks padded to Hp -> lane-aligned slices).
    w_hq = jnp.concatenate(
        [_pad_to(params["W_query"], (Hp, Hp)),
         _pad_to(_pad_gate_cols(params["W_hh"], H, Hp), (Hp, 3 * Hp))],
        axis=1).astype(f32)                                    # (Hp, 4Hp) recurrent path
    w_ctx = jnp.concatenate(
        [_pad_to(_pad_gate_cols(W_ih[E:], H, Hp), (Cp, 3 * Hp)),
         _pad_to(W_pre[E + H:], (Cp, Hp))],
        axis=1).astype(bf16)                                   # (Cp, 4Hp)
    w_preh = _pad_to(W_pre[E:E + H], (Hp, Hp)).astype(bf16)    # (Hp, Hp)
    b_hh_p = _pad_gate_cols(params["b_hh"], H, Hp).astype(f32)  # (1, 3Hp)
    v_en_p = _pad_to(params["v_energy"], (1, Hp)).astype(f32)   # (1, Hp)

    in_specs = [
        pl.BlockSpec((Tb, Bb, 3 * Hp), lambda b, t: (t, b, 0)),   # gi_emb  (streamed)
        pl.BlockSpec((Tb, Bb, Hp), lambda b, t: (t, b, 0)),       # pre_emb (streamed)
        pl.BlockSpec((Bb, Sp, Cp), lambda b, t: (b, 0, 0)),       # enc_hid (resident)
        pl.BlockSpec((Bb, Sp, Hp), lambda b, t: (b, 0, 0)),       # proj_key
        pl.BlockSpec((Bb, Sp), lambda b, t: (b, 0)),              # mask
        pl.BlockSpec((Bb, Hp), lambda b, t: (b, 0)),              # h0
        pl.BlockSpec((Hp, 4 * Hp), lambda b, t: (0, 0)),          # W_hq  (weights)
        pl.BlockSpec((Cp, 4 * Hp), lambda b, t: (0, 0)),          # W_ctx
        pl.BlockSpec((Hp, Hp), lambda b, t: (0, 0)),              # W_preh
        pl.BlockSpec((1, 3 * Hp), lambda b, t: (0, 0)),           # b_hh
        pl.BlockSpec((1, Hp), lambda b, t: (0, 0)),               # v_energy
    ]
    out_specs = (
        pl.BlockSpec((Tb, Bb, Hp), lambda b, t: (t, b, 0)),       # decoder states
        pl.BlockSpec((Tb, Bb, Hp), lambda b, t: (t, b, 0)),       # pre_output vectors
        pl.BlockSpec((Bb, Hp), lambda b, t: (b, 0)),              # final hidden
    )

    def _nbytes(shape, dt):
        return math.prod(shape) * jnp.dtype(dt).itemsize
    block_bytes = (
        _nbytes((Tb, Bb, 3 * Hp), bf16) + _nbytes((Tb, Bb, Hp), bf16)
        + _nbytes((Bb, Sp, Cp), bf16) + _nbytes((Bb, Sp, Hp), bf16)
        + _nbytes((Bb, Sp), f32) + _nbytes((Bb, Hp), f32)
        + _nbytes((Hp, 4 * Hp), f32) + _nbytes((Cp, 4 * Hp), bf16)
        + _nbytes((Hp, Hp), bf16) + _nbytes((1, 3 * Hp), f32) + _nbytes((1, Hp), f32)
        + 2 * _nbytes((Tb, Bb, Hp), f32) + 2 * _nbytes((Bb, Hp), f32))
    # 4x for double-buffering + headroom; clamp to v7x's 64 MiB physical VMEM.
    vmem_limit = int(min(max(4 * block_bytes, 32 << 20), 64 << 20))

    kernel = _make_decoder_kernel(T, Tb, Hp)
    dec_t, pre_t, hid = pl.pallas_call(
        kernel,
        grid=(nb, nt),
        in_specs=in_specs,
        out_specs=out_specs,
        out_shape=(
            jax.ShapeDtypeStruct((Tp, B, Hp), f32),
            jax.ShapeDtypeStruct((Tp, B, Hp), f32),
            jax.ShapeDtypeStruct((B, Hp), f32),
        ),
        scratch_shapes=[pltpu.VMEM((Bb, Hp), f32)],               # carried hidden
        compiler_params=pltpu.CompilerParams(
            dimension_semantics=("parallel", "arbitrary"),
            vmem_limit_bytes=vmem_limit),
    )(gi_emb_p, pre_emb_p, enc_hid_p, proj_key_p, mask_p, h0_p,
      w_hq, w_ctx, w_preh, b_hh_p, v_en_p)

    # strip padding, back to batch-first (B, T, H); hidden to (1, B, H) like nn.GRU
    dec_states = jnp.transpose(dec_t[:T, :, :H], (1, 0, 2))
    pre_outputs = jnp.transpose(pre_t[:T, :, :H], (1, 0, 2))
    hidden = hid[None, :, :H]
    return dec_states, hidden, pre_outputs


def decoder_reference(trg_embed, encoder_hidden, encoder_final, src_mask, params):
    """Pure-JAX f32 reference matching the PyTorch forward (eval mode)."""
    B, T, E = trg_embed.shape
    H = params["W_query"].shape[0]
    hidden = jnp.tanh(encoder_final @ params["W_bridge"] + params["b_bridge"])
    proj_key = encoder_hidden @ params["W_key"]
    dec_states, pre_outs = [], []
    for i in range(T):
        prev = trg_embed[:, i]
        q = hidden @ params["W_query"]
        scores = jnp.sum(jnp.tanh(q[:, None, :] + proj_key)
                         * params["v_energy"][None, :, :], axis=-1)
        scores = jnp.where(src_mask > 0.0, scores, -jnp.inf)
        alphas = jax.nn.softmax(scores, axis=-1)
        context = jnp.sum(alphas[:, :, None] * encoder_hidden, axis=1)
        x = jnp.concatenate([prev, context], axis=-1)
        gi = x @ params["W_ih"] + params["b_ih"]
        gh = hidden @ params["W_hh"] + params["b_hh"]
        r = jax.nn.sigmoid(gi[:, :H] + gh[:, :H])
        z = jax.nn.sigmoid(gi[:, H:2 * H] + gh[:, H:2 * H])
        n = jnp.tanh(gi[:, 2 * H:] + r * gh[:, 2 * H:])
        hidden = (1.0 - z) * n + z * hidden
        dec_states.append(hidden)
        pre_outs.append(jnp.concatenate([prev, hidden, context], axis=-1) @ params["W_pre"])
    return (jnp.stack(dec_states, axis=1), hidden[None], jnp.stack(pre_outs, axis=1))


if __name__ == "__main__":
    # Small shapes consistent with the module: batch=8, emb=16, hidden=32,
    # src sequence S=10, decode length T=6 (== sequence_length - 1).
    B, T, S, E, H = 8, 6, 10, 16, 32
    key = jax.random.PRNGKey(0)
    ks = jax.random.split(key, 16)

    scale = 0.1
    params = {
        "W_key":    scale * jax.random.normal(ks[0], (2 * H, H), jnp.float32),
        "W_query":  scale * jax.random.normal(ks[1], (H, H), jnp.float32),
        "v_energy": scale * jax.random.normal(ks[2], (1, H), jnp.float32),
        "W_bridge": scale * jax.random.normal(ks[3], (2 * H, H), jnp.float32),
        "b_bridge": scale * jax.random.normal(ks[4], (1, H), jnp.float32),
        "W_ih":     scale * jax.random.normal(ks[5], (E + 2 * H, 3 * H), jnp.float32),
        "W_hh":     scale * jax.random.normal(ks[6], (H, 3 * H), jnp.float32),
        "b_ih":     scale * jax.random.normal(ks[7], (1, 3 * H), jnp.float32),
        "b_hh":     scale * jax.random.normal(ks[8], (1, 3 * H), jnp.float32),
        "W_pre":    scale * jax.random.normal(ks[9], (E + 3 * H, H), jnp.float32),
    }

    trg_embed = jax.random.normal(ks[10], (B, T, E), jnp.float32)
    encoder_hidden = jax.random.normal(ks[11], (B, S, 2 * H), jnp.float32)
    encoder_final = jax.random.normal(ks[12], (B, 2 * H), jnp.float32)
    # valid lengths between 3 and S (at least one valid position per row)
    lengths = 3 + jax.random.randint(ks[13], (B,), 0, S - 2)
    src_mask = (jnp.arange(S)[None, :] < lengths[:, None]).astype(jnp.float32)

    # block_t=4 -> two T-blocks (exercises the carried-state grid + tail masking)
    run = jax.jit(lambda *a: decoder_forward(*a, block_t=4))
    dec_states, hidden, pre_outputs = run(trg_embed, encoder_hidden, encoder_final,
                                          src_mask, params)
    jax.block_until_ready((dec_states, hidden, pre_outputs))

    ref_dec, ref_hid, ref_pre = decoder_reference(trg_embed, encoder_hidden,
                                                  encoder_final, src_mask, params)

    assert dec_states.shape == (B, T, H)
    assert hidden.shape == (1, B, H)
    assert pre_outputs.shape == (B, T, H)
    # feed-forward matmuls run in bf16 (f32 accumulate) -> slightly looser tolerance
    assert jnp.allclose(dec_states, ref_dec, atol=2e-2, rtol=2e-2)
    assert jnp.allclose(hidden, ref_hid, atol=2e-2, rtol=2e-2)
    assert jnp.allclose(pre_outputs, ref_pre, atol=2e-2, rtol=2e-2)

    print("KERNEL_OK")
</pallas_src>

<mosaic_0001>
module attributes {stable_mosaic.version = 11 : i64} {
  func.func @kernel(%arg0: i32, %arg1: i32, %arg2: memref<4x8x384xbf16, #tpu.memory_space<vmem>>, %arg3: memref<4x8x128xbf16, #tpu.memory_space<vmem>>, %arg4: memref<8x16x128xbf16, #tpu.memory_space<vmem>>, %arg5: memref<8x16x128xbf16, #tpu.memory_space<vmem>>, %arg6: memref<8x16xf32, #tpu.memory_space<vmem>>, %arg7: memref<8x128xf32, #tpu.memory_space<vmem>>, %arg8: memref<128x512xf32, #tpu.memory_space<vmem>>, %arg9: memref<128x512xbf16, #tpu.memory_space<vmem>>, %arg10: memref<128x128xbf16, #tpu.memory_space<vmem>>, %arg11: memref<1x384xf32, #tpu.memory_space<vmem>>, %arg12: memref<1x128xf32, #tpu.memory_space<vmem>>, %arg13: memref<4x8x128xf32, #tpu.memory_space<vmem>>, %arg14: memref<4x8x128xf32, #tpu.memory_space<vmem>>, %arg15: memref<8x128xf32, #tpu.memory_space<vmem>>, %arg16: memref<8x128xf32, #tpu.memory_space<vmem>>) attributes {dimension_semantics = [#tpu.dimension_semantics<parallel>, #tpu.dimension_semantics<arbitrary>], iteration_bounds = array<i64: 1, 2>, scalar_prefetch = 0 : i64, scratch_operands = 1 : i64, tpu.core_type = #tpu.core_type<tc>, window_params = [{transform_indices = @transform_0, window_bounds = array<i64: 4, 8, 384>}, {transform_indices = @transform_1, window_bounds = array<i64: 4, 8, 128>}, {transform_indices = @transform_2, window_bounds = array<i64: 8, 16, 128>}, {transform_indices = @transform_3, window_bounds = array<i64: 8, 16, 128>}, {transform_indices = @transform_4, window_bounds = array<i64: 8, 16>}, {transform_indices = @transform_5, window_bounds = array<i64: 8, 128>}, {pipeline_mode = #tpu.pipeline_mode<synchronous>, transform_indices = @transform_6, window_bounds = array<i64: 128, 512>}, {pipeline_mode = #tpu.pipeline_mode<synchronous>, transform_indices = @transform_7, window_bounds = array<i64: 128, 512>}, {pipeline_mode = #tpu.pipeline_mode<synchronous>, transform_indices = @transform_8, window_bounds = array<i64: 128, 128>}, {pipeline_mode = #tpu.pipeline_mode<synchronous>, transform_indices = @transform_9, window_bounds = array<i64: 1, 384>}, {pipeline_mode = #tpu.pipeline_mode<synchronous>, transform_indices = @transform_10, window_bounds = array<i64: 1, 128>}, {transform_indices = @transform_11, window_bounds = array<i64: 4, 8, 128>}, {transform_indices = @transform_12, window_bounds = array<i64: 4, 8, 128>}, {transform_indices = @transform_13, window_bounds = array<i64: 8, 128>}]} {
    %c0_i32 = arith.constant 0 : i32
    %0 = arith.cmpi eq, %arg1, %c0_i32 : i32
    %1 = arith.extui %0 : i1 to i32
    %c0_i32_0 = arith.constant 0 : i32
    %2 = arith.cmpi ne, %1, %c0_i32_0 : i32
    scf.if %2 {
      %c0_105 = arith.constant 0 : index
      %c0_106 = arith.constant 0 : index
      %357 = vector.load %arg7[%c0_105, %c0_106] : memref<8x128xf32, #tpu.memory_space<vmem>>, vector<8x128xf32>
      %c0_107 = arith.constant 0 : index
      %c0_108 = arith.constant 0 : index
      %358 = vector.load %arg16[%c0_107, %c0_108] : memref<8x128xf32, #tpu.memory_space<vmem>>, vector<8x128xf32>
      tpu.vector_store %arg16[%c0_107, %c0_108], %357 {strides = array<i32>} : memref<8x128xf32, #tpu.memory_space<vmem>>, vector<8x128xf32>,
    } else {
    }
    %c0 = arith.constant 0 : index
    %c0_1 = arith.constant 0 : index
    %c0_2 = arith.constant 0 : index
    %3 = vector.load %arg5[%c0, %c0_1, %c0_2] : memref<8x16x128xbf16, #tpu.memory_space<vmem>>, vector<8x16x128xbf16>
    %c0_3 = arith.constant 0 : index
    %c0_4 = arith.constant 0 : index
    %c0_5 = arith.constant 0 : index
    %4 = vector.load %arg4[%c0_3, %c0_4, %c0_5] : memref<8x16x128xbf16, #tpu.memory_space<vmem>>, vector<8x16x128xbf16>
    %c0_6 = arith.constant 0 : index
    %c0_7 = arith.constant 0 : index
    %5 = vector.load %arg6[%c0_6, %c0_7] : memref<8x16xf32, #tpu.memory_space<vmem>>, vector<8x16xf32>
    %cst = arith.constant 0.000000e+00 : f32
    %6 = vector.broadcast %cst : f32 to vector<8x16xf32>
    %7 = arith.cmpf ogt, %5, %6 : vector<8x16xf32>
    %c0_8 = arith.constant 0 : index
    %c0_9 = arith.constant 0 : index
    %8 = vector.load %arg12[%c0_8, %c0_9] : memref<1x128xf32, #tpu.memory_space<vmem>>, vector<1x128xf32>
    %9 = vector.shape_cast %8 : vector<1x128xf32> to vector<1x1x128xf32>
    %c0_10 = arith.constant 0 : index
    %c0_11 = arith.constant 0 : index
    %10 = vector.load %arg8[%c0_10, %c0_11] : memref<128x512xf32, #tpu.memory_space<vmem>>, vector<128x512xf32>
    %c0_12 = arith.constant 0 : index
    %c0_13 = arith.constant 0 : index
    %11 = vector.load %arg9[%c0_12, %c0_13] : memref<128x512xbf16, #tpu.memory_space<vmem>>, vector<128x512xbf16>
    %c0_14 = arith.constant 0 : index
    %c0_15 = arith.constant 0 : index
    %12 = vector.load %arg10[%c0_14, %c0_15] : memref<128x128xbf16, #tpu.memory_space<vmem>>, vector<128x128xbf16>
    %c0_16 = arith.constant 0 : index
    %c0_17 = arith.constant 0 : index
    %13 = vector.load %arg11[%c0_16, %c0_17] : memref<1x384xf32, #tpu.memory_space<vmem>>, vector<1x384xf32>
    %c0_18 = arith.constant 0 : index
    %c0_19 = arith.constant 0 : index
    %14 = vector.load %arg16[%c0_18, %c0_19] : memref<8x128xf32, #tpu.memory_space<vmem>>, vector<8x128xf32>
    %cst_20 = arith.constant -1.000000e+30 : f32
    %c0_i32_21 = arith.constant 0 : i32
    %cst_22 = arith.constant dense<0.000000e+00> : vector<8x512xf32>
    %15 = tpu.matmul %14, %10, %cst_22 {dimension_numbers = #tpu.dot_dimension_numbers<[1], [0], [0], [1], [0, 0, 1, 1], [], []>} : vector<8x128xf32>, vector<128x512xf32>, vector<8x512xf32> -> vector<8x512xf32>
    %16 = vector.extract_strided_slice %15 {offsets = [0, 0], sizes = [8, 128], strides = [1, 1]} : vector<8x512xf32> to vector<8x128xf32>
    %17 = vector.extract_strided_slice %15 {offsets = [0, 128], sizes = [8, 384], strides = [1, 1]} : vector<8x512xf32> to vector<8x384xf32>
    %18 = vector.broadcast %13 : vector<1x384xf32> to vector<8x384xf32>
    %19 = arith.addf %17, %18 : vector<8x384xf32>
    %20 = vector.shape_cast %16 : vector<8x128xf32> to vector<8x1x128xf32>
    %21 = arith.extf %3 : vector<8x16x128xbf16> to vector<8x16x128xf32>
    %22 = vector.broadcast %20 : vector<8x1x128xf32> to vector<8x16x128xf32>
    %23 = arith.addf %22, %21 : vector<8x16x128xf32>
    %24 = math.tanh %23 : vector<8x16x128xf32>
    %25 = vector.broadcast %9 : vector<1x1x128xf32> to vector<8x16x128xf32>
    %26 = arith.mulf %24, %25 : vector<8x16x128xf32>
    %cst_23 = arith.constant dense<0.000000e+00> : vector<8x16xf32>
    %27 = vector.multi_reduction <add>, %26, %cst_23 [2] : vector<8x16x128xf32> to vector<8x16xf32>
    %28 = vector.broadcast %cst_20 : f32 to vector<8x16xf32>
    %29 = arith.select %7, %27, %28 : vector<8x16xi1>, vector<8x16xf32>
    %cst_24 = arith.constant dense<0xFF800000> : vector<8xf32>
    %30 = vector.multi_reduction <maximumf>, %29, %cst_24 [1] : vector<8x16xf32> to vector<8xf32>
    %31 = vector.shape_cast %30 : vector<8xf32> to vector<8x1xf32>
    %32 = vector.broadcast %31 : vector<8x1xf32> to vector<8x16xf32>
    %33 = arith.subf %29, %32 : vector<8x16xf32>
    %34 = math.exp %33 : vector<8x16xf32>
    %cst_25 = arith.constant dense<0.000000e+00> : vector<8xf32>
    %35 = vector.multi_reduction <add>, %34, %cst_25 [1] : vector<8x16xf32> to vector<8xf32>
    %36 = vector.shape_cast %35 : vector<8xf32> to vector<8x1xf32>
    %37 = tpu.reciprocal %36 {approx = true} : vector<8x1xf32> -> vector<8x1xf32>
    %38 = vector.broadcast %37 : vector<8x1xf32> to vector<8x16xf32>
    %39 = arith.mulf %34, %38 : vector<8x16xf32>
    %40 = vector.shape_cast %39 : vector<8x16xf32> to vector<8x16x1xf32>
    %41 = arith.extf %4 : vector<8x16x128xbf16> to vector<8x16x128xf32>
    %42 = vector.broadcast %40 : vector<8x16x1xf32> to vector<8x16x128xf32>
    %43 = arith.mulf %42, %41 : vector<8x16x128xf32>
    %cst_26 = arith.constant dense<0.000000e+00> : vector<8x128xf32>
    %44 = vector.multi_reduction <add>, %43, %cst_26 [1] : vector<8x16x128xf32> to vector<8x128xf32>
    %45 = arith.truncf %44 : vector<8x128xf32> to vector<8x128xbf16>
    %cst_27 = arith.constant dense<0.000000e+00> : vector<8x512xf32>
    %46 = tpu.matmul %45, %11, %cst_27 {dimension_numbers = #tpu.dot_dimension_numbers<[1], [0], [0], [1], [0, 0, 1, 1], [], []>} : vector<8x128xbf16>, vector<128x512xbf16>, vector<8x512xf32> -> vector<8x512xf32>
    %47 = arith.index_cast %c0_i32_21 : i32 to index
    %c0_28 = arith.constant 0 : index
    %c0_29 = arith.constant 0 : index
    %48 = vector.load %arg2[%47, %c0_28, %c0_29] : memref<4x8x384xbf16, #tpu.memory_space<vmem>>, vector<1x8x384xbf16>
    %49 = vector.shape_cast %48 : vector<1x8x384xbf16> to vector<8x384xbf16>
    %50 = arith.extf %49 : vector<8x384xbf16> to vector<8x384xf32>
    %51 = vector.extract_strided_slice %46 {offsets = [0, 0], sizes = [8, 384], strides = [1, 1]} : vector<8x512xf32> to vector<8x384xf32>
    %52 = arith.addf %50, %51 : vector<8x384xf32>
    %53 = vector.extract_strided_slice %52 {offsets = [0, 0], sizes = [8, 128], strides = [1, 1]} : vector<8x384xf32> to vector<8x128xf32>
    %54 = vector.extract_strided_slice %19 {offsets = [0, 0], sizes = [8, 128], strides = [1, 1]} : vector<8x384xf32> to vector<8x128xf32>
    %55 = arith.addf %53, %54 : vector<8x128xf32>
    %56 = arith.negf %55 : vector<8x128xf32>
    %57 = math.exp %56 : vector<8x128xf32>
    %cst_30 = arith.constant 1.000000e+00 : f32
    %58 = vector.broadcast %cst_30 : f32 to vector<8x128xf32>
    %59 = arith.addf %58, %57 : vector<8x128xf32>
    %60 = arith.divf %58, %59 : vector<8x128xf32>
    %61 = vector.extract_strided_slice %52 {offsets = [0, 128], sizes = [8, 128], strides = [1, 1]} : vector<8x384xf32> to vector<8x128xf32>
    %62 = vector.extract_strided_slice %19 {offsets = [0, 128], sizes = [8, 128], strides = [1, 1]} : vector<8x384xf32> to vector<8x128xf32>
    %63 = arith.addf %61, %62 : vector<8x128xf32>
    %64 = arith.negf %63 : vector<8x128xf32>
    %65 = math.exp %64 : vector<8x128xf32>
    %cst_31 = arith.constant 1.000000e+00 : f32
    %66 = vector.broadcast %cst_31 : f32 to vector<8x128xf32>
    %67 = arith.addf %66, %65 : vector<8x128xf32>
    %68 = arith.divf %66, %67 : vector<8x128xf32>
    %69 = vector.extract_strided_slice %52 {offsets = [0, 256], sizes = [8, 128], strides = [1, 1]} : vector<8x384xf32> to vector<8x128xf32>
    %70 = vector.extract_strided_slice %19 {offsets = [0, 256], sizes = [8, 128], strides = [1, 1]} : vector<8x384xf32> to vector<8x128xf32>
    %71 = arith.mulf %60, %70 : vector<8x128xf32>
    %72 = arith.addf %69, %71 : vector<8x128xf32>
    %73 = math.tanh %72 : vector<8x128xf32>
    %cst_32 = arith.constant 1.000000e+00 : f32
    %74 = vector.broadcast %cst_32 : f32 to vector<8x128xf32>
    %75 = arith.subf %74, %68 : vector<8x128xf32>
    %76 = arith.mulf %75, %73 : vector<8x128xf32>
    %77 = arith.mulf %68, %14 : vector<8x128xf32>
    %78 = arith.addf %76, %77 : vector<8x128xf32>
    %c4_i32 = arith.constant 4 : i32
    %79 = arith.muli %arg1, %c4_i32 : i32
    %80 = arith.addi %79, %c0_i32_21 : i32
    %c6_i32 = arith.constant 6 : i32
    %81 = arith.cmpi slt, %80, %c6_i32 : i32
    %82 = arith.select %81, %78, %14 : vector<8x128xf32>
    %83 = arith.index_cast %c0_i32_21 : i32 to index
    %c0_33 = arith.constant 0 : index
    %c0_34 = arith.constant 0 : index
    %84 = vector.load %arg13[%83, %c0_33, %c0_34] : memref<4x8x128xf32, #tpu.memory_space<vmem>>, vector<1x8x128xf32>
    %85 = vector.shape_cast %84 : vector<1x8x128xf32> to vector<8x128xf32>
    %86 = vector.shape_cast %82 : vector<8x128xf32> to vector<1x8x128xf32>
    tpu.vector_store %arg13[%83, %c0_33, %c0_34], %86 {strides = array<i32>} : memref<4x8x128xf32, #tpu.memory_space<vmem>>, vector<1x8x128xf32>,
    %87 = arith.index_cast %c0_i32_21 : i32 to index
    %c0_35 = arith.constant 0 : index
    %c0_36 = arith.constant 0 : index
    %88 = vector.load %arg3[%87, %c0_35, %c0_36] : memref<4x8x128xbf16, #tpu.memory_space<vmem>>, vector<1x8x128xbf16>
    %89 = vector.shape_cast %88 : vector<1x8x128xbf16> to vector<8x128xbf16>
    %90 = arith.extf %89 : vector<8x128xbf16> to vector<8x128xf32>
    %91 = arith.truncf %82 : vector<8x128xf32> to vector<8x128xbf16>
    %cst_37 = arith.constant dense<0.000000e+00> : vector<8x128xf32>
    %92 = tpu.matmul %91, %12, %cst_37 {dimension_numbers = #tpu.dot_dimension_numbers<[1], [0], [0], [1], [0, 0, 1, 1], [], []>} : vector<8x128xbf16>, vector<128x128xbf16>, vector<8x128xf32> -> vector<8x128xf32>
    %93 = arith.addf %90, %92 : vector<8x128xf32>
    %94 = vector.extract_strided_slice %46 {offsets = [0, 384], sizes = [8, 128], strides = [1, 1]} : vector<8x512xf32> to vector<8x128xf32>
    %95 = arith.addf %93, %94 : vector<8x128xf32>
    %96 = arith.index_cast %c0_i32_21 : i32 to index
    %c0_38 = arith.constant 0 : index
    %c0_39 = arith.constant 0 : index
    %97 = vector.load %arg14[%96, %c0_38, %c0_39] : memref<4x8x128xf32, #tpu.memory_space<vmem>>, vector<1x8x128xf32>
    %98 = vector.shape_cast %97 : vector<1x8x128xf32> to vector<8x128xf32>
    %99 = vector.shape_cast %95 : vector<8x128xf32> to vector<1x8x128xf32>
    tpu.vector_store %arg14[%96, %c0_38, %c0_39], %99 {strides = array<i32>} : memref<4x8x128xf32, #tpu.memory_space<vmem>>, vector<1x8x128xf32>,
    %c1_i32 = arith.constant 1 : i32
    %cst_40 = arith.constant dense<0.000000e+00> : vector<8x512xf32>
    %100 = tpu.matmul %82, %10, %cst_40 {dimension_numbers = #tpu.dot_dimension_numbers<[1], [0], [0], [1], [0, 0, 1, 1], [], []>} : vector<8x128xf32>, vector<128x512xf32>, vector<8x512xf32> -> vector<8x512xf32>
    %101 = vector.extract_strided_slice %100 {offsets = [0, 0], sizes = [8, 128], strides = [1, 1]} : vector<8x512xf32> to vector<8x128xf32>
    %102 = vector.extract_strided_slice %100 {offsets = [0, 128], sizes = [8, 384], strides = [1, 1]} : vector<8x512xf32> to vector<8x384xf32>
    %103 = vector.broadcast %13 : vector<1x384xf32> to vector<8x384xf32>
    %104 = arith.addf %102, %103 : vector<8x384xf32>
    %105 = vector.shape_cast %101 : vector<8x128xf32> to vector<8x1x128xf32>
    %106 = arith.extf %3 : vector<8x16x128xbf16> to vector<8x16x128xf32>
    %107 = vector.broadcast %105 : vector<8x1x128xf32> to vector<8x16x128xf32>
    %108 = arith.addf %107, %106 : vector<8x16x128xf32>
    %109 = math.tanh %108 : vector<8x16x128xf32>
    %110 = vector.broadcast %9 : vector<1x1x128xf32> to vector<8x16x128xf32>
    %111 = arith.mulf %109, %110 : vector<8x16x128xf32>
    %cst_41 = arith.constant dense<0.000000e+00> : vector<8x16xf32>
    %112 = vector.multi_reduction <add>, %111, %cst_41 [2] : vector<8x16x128xf32> to vector<8x16xf32>
    %113 = vector.broadcast %cst_20 : f32 to vector<8x16xf32>
    %114 = arith.select %7, %112, %113 : vector<8x16xi1>, vector<8x16xf32>
    %cst_42 = arith.constant dense<0xFF800000> : vector<8xf32>
    %115 = vector.multi_reduction <maximumf>, %114, %cst_42 [1] : vector<8x16xf32> to vector<8xf32>
    %116 = vector.shape_cast %115 : vector<8xf32> to vector<8x1xf32>
    %117 = vector.broadcast %116 : vector<8x1xf32> to vector<8x16xf32>
    %118 = arith.subf %114, %117 : vector<8x16xf32>
    %119 = math.exp %118 : vector<8x16xf32>
    %cst_43 = arith.constant dense<0.000000e+00> : vector<8xf32>
    %120 = vector.multi_reduction <add>, %119, %cst_43 [1] : vector<8x16xf32> to vector<8xf32>
    %121 = vector.shape_cast %120 : vector<8xf32> to vector<8x1xf32>
    %122 = tpu.reciprocal %121 {approx = true} : vector<8x1xf32> -> vector<8x1xf32>
    %123 = vector.broadcast %122 : vector<8x1xf32> to vector<8x16xf32>
    %124 = arith.mulf %119, %123 : vector<8x16xf32>
    %125 = vector.shape_cast %124 : vector<8x16xf32> to vector<8x16x1xf32>
    %126 = arith.extf %4 : vector<8x16x128xbf16> to vector<8x16x128xf32>
    %127 = vector.broadcast %125 : vector<8x16x1xf32> to vector<8x16x128xf32>
    %128 = arith.mulf %127, %126 : vector<8x16x128xf32>
    %cst_44 = arith.constant dense<0.000000e+00> : vector<8x128xf32>
    %129 = vector.multi_reduction <add>, %128, %cst_44 [1] : vector<8x16x128xf32> to vector<8x128xf32>
    %130 = arith.truncf %129 : vector<8x128xf32> to vector<8x128xbf16>
    %cst_45 = arith.constant dense<0.000000e+00> : vector<8x512xf32>
    %131 = tpu.matmul %130, %11, %cst_45 {dimension_numbers = #tpu.dot_dimension_numbers<[1], [0], [0], [1], [0, 0, 1, 1], [], []>} : vector<8x128xbf16>, vector<128x512xbf16>, vector<8x512xf32> -> vector<8x512xf32>
    %132 = arith.index_cast %c1_i32 : i32 to index
    %c0_46 = arith.constant 0 : index
    %c0_47 = arith.constant 0 : index
    %133 = vector.load %arg2[%132, %c0_46, %c0_47] : memref<4x8x384xbf16, #tpu.memory_space<vmem>>, vector<1x8x384xbf16>
    %134 = vector.shape_cast %133 : vector<1x8x384xbf16> to vector<8x384xbf16>
    %135 = arith.extf %134 : vector<8x384xbf16> to vector<8x384xf32>
    %136 = vector.extract_strided_slice %131 {offsets = [0, 0], sizes = [8, 384], strides = [1, 1]} : vector<8x512xf32> to vector<8x384xf32>
    %137 = arith.addf %135, %136 : vector<8x384xf32>
    %138 = vector.extract_strided_slice %137 {offsets = [0, 0], sizes = [8, 128], strides = [1, 1]} : vector<8x384xf32> to vector<8x128xf32>
    %139 = vector.extract_strided_slice %104 {offsets = [0, 0], sizes = [8, 128], strides = [1, 1]} : vector<8x384xf32> to vector<8x128xf32>
    %140 = arith.addf %138, %139 : vector<8x128xf32>
    %141 = arith.negf %140 : vector<8x128xf32>
    %142 = math.exp %141 : vector<8x128xf32>
    %cst_48 = arith.constant 1.000000e+00 : f32
    %143 = vector.broadcast %cst_48 : f32 to vector<8x128xf32>
    %144 = arith.addf %143, %142 : vector<8x128xf32>
    %145 = arith.divf %143, %144 : vector<8x128xf32>
    %146 = vector.extract_strided_slice %137 {offsets = [0, 128], sizes = [8, 128], strides = [1, 1]} : vector<8x384xf32> to vector<8x128xf32>
    %147 = vector.extract_strided_slice %104 {offsets = [0, 128], sizes = [8, 128], strides = [1, 1]} : vector<8x384xf32> to vector<8x128xf32>
    %148 = arith.addf %146, %147 : vector<8x128xf32>
    %149 = arith.negf %148 : vector<8x128xf32>
    %150 = math.exp %149 : vector<8x128xf32>
    %cst_49 = arith.constant 1.000000e+00 : f32
    %151 = vector.broadcast %cst_49 : f32 to vector<8x128xf32>
    %152 = arith.addf %151, %150 : vector<8x128xf32>
    %153 = arith.divf %151, %152 : vector<8x128xf32>
    %154 = vector.extract_strided_slice %137 {offsets = [0, 256], sizes = [8, 128], strides = [1, 1]} : vector<8x384xf32> to vector<8x128xf32>
    %155 = vector.extract_strided_slice %104 {offsets = [0, 256], sizes = [8, 128], strides = [1, 1]} : vector<8x384xf32> to vector<8x128xf32>
    %156 = arith.mulf %145, %155 : vector<8x128xf32>
    %157 = arith.addf %154, %156 : vector<8x128xf32>
    %158 = math.tanh %157 : vector<8x128xf32>
    %cst_50 = arith.constant 1.000000e+00 : f32
    %159 = vector.broadcast %cst_50 : f32 to vector<8x128xf32>
    %160 = arith.subf %159, %153 : vector<8x128xf32>
    %161 = arith.mulf %160, %158 : vector<8x128xf32>
    %162 = arith.mulf %153, %82 : vector<8x128xf32>
    %163 = arith.addf %161, %162 : vector<8x128xf32>
    %c4_i32_51 = arith.constant 4 : i32
    %164 = arith.muli %arg1, %c4_i32_51 : i32
    %165 = arith.addi %164, %c1_i32 : i32
    %c6_i32_52 = arith.constant 6 : i32
    %166 = arith.cmpi slt, %165, %c6_i32_52 : i32
    %167 = arith.select %166, %163, %82 : vector<8x128xf32>
    %168 = arith.index_cast %c1_i32 : i32 to index
    %c0_53 = arith.constant 0 : index
    %c0_54 = arith.constant 0 : index
    %169 = vector.load %arg13[%168, %c0_53, %c0_54] : memref<4x8x128xf32, #tpu.memory_space<vmem>>, vector<1x8x128xf32>
    %170 = vector.shape_cast %169 : vector<1x8x128xf32> to vector<8x128xf32>
    %171 = vector.shape_cast %167 : vector<8x128xf32> to vector<1x8x128xf32>
    tpu.vector_store %arg13[%168, %c0_53, %c0_54], %171 {strides = array<i32>} : memref<4x8x128xf32, #tpu.memory_space<vmem>>, vector<1x8x128xf32>,
    %172 = arith.index_cast %c1_i32 : i32 to index
    %c0_55 = arith.constant 0 : index
    %c0_56 = arith.constant 0 : index
    %173 = vector.load %arg3[%172, %c0_55, %c0_56] : memref<4x8x128xbf16, #tpu.memory_space<vmem>>, vector<1x8x128xbf16>
    %174 = vector.shape_cast %173 : vector<1x8x128xbf16> to vector<8x128xbf16>
    %175 = arith.extf %174 : vector<8x128xbf16> to vector<8x128xf32>
    %176 = arith.truncf %167 : vector<8x128xf32> to vector<8x128xbf16>
    %cst_57 = arith.constant dense<0.000000e+00> : vector<8x128xf32>
    %177 = tpu.matmul %176, %12, %cst_57 {dimension_numbers = #tpu.dot_dimension_numbers<[1], [0], [0], [1], [0, 0, 1, 1], [], []>} : vector<8x128xbf16>, vector<128x128xbf16>, vector<8x128xf32> -> vector<8x128xf32>
    %178 = arith.addf %175, %177 : vector<8x128xf32>
    %179 = vector.extract_strided_slice %131 {offsets = [0, 384], sizes = [8, 128], strides = [1, 1]} : vector<8x512xf32> to vector<8x128xf32>
    %180 = arith.addf %178, %179 : vector<8x128xf32>
    %181 = arith.index_cast %c1_i32 : i32 to index
    %c0_58 = arith.constant 0 : index
    %c0_59 = arith.constant 0 : index
    %182 = vector.load %arg14[%181, %c0_58, %c0_59] : memref<4x8x128xf32, #tpu.memory_space<vmem>>, vector<1x8x128xf32>
    %183 = vector.shape_cast %182 : vector<1x8x128xf32> to vector<8x128xf32>
    %184 = vector.shape_cast %180 : vector<8x128xf32> to vector<1x8x128xf32>
    tpu.vector_store %arg14[%181, %c0_58, %c0_59], %184 {strides = array<i32>} : memref<4x8x128xf32, #tpu.memory_space<vmem>>, vector<1x8x128xf32>,
    %c2_i32 = arith.constant 2 : i32
    %cst_60 = arith.constant dense<0.000000e+00> : vector<8x512xf32>
    %185 = tpu.matmul %167, %10, %cst_60 {dimension_numbers = #tpu.dot_dimension_numbers<[1], [0], [0], [1], [0, 0, 1, 1], [], []>} : vector<8x128xf32>, vector<128x512xf32>, vector<8x512xf32> -> vector<8x512xf32>
    %186 = vector.extract_strided_slice %185 {offsets = [0, 0], sizes = [8, 128], strides = [1, 1]} : vector<8x512xf32> to vector<8x128xf32>
    %187 = vector.extract_strided_slice %185 {offsets = [0, 128], sizes = [8, 384], strides = [1, 1]} : vector<8x512xf32> to vector<8x384xf32>
    %188 = vector.broadcast %13 : vector<1x384xf32> to vector<8x384xf32>
    %189 = arith.addf %187, %188 : vector<8x384xf32>
    %190 = vector.shape_cast %186 : vector<8x128xf32> to vector<8x1x128xf32>
    %191 = arith.extf %3 : vector<8x16x128xbf16> to vector<8x16x128xf32>
    %192 = vector.broadcast %190 : vector<8x1x128xf32> to vector<8x16x128xf32>
    %193 = arith.addf %192, %191 : vector<8x16x128xf32>
    %194 = math.tanh %193 : vector<8x16x128xf32>
    %195 = vector.broadcast %9 : vector<1x1x128xf32> to vector<8x16x128xf32>
    %196 = arith.mulf %194, %195 : vector<8x16x128xf32>
    %cst_61 = arith.constant dense<0.000000e+00> : vector<8x16xf32>
    %197 = vector.multi_reduction <add>, %196, %cst_61 [2] : vector<8x16x128xf32> to vector<8x16xf32>
    %198 = vector.broadcast %cst_20 : f32 to vector<8x16xf32>
    %199 = arith.select %7, %197, %198 : vector<8x16xi1>, vector<8x16xf32>
    %cst_62 = arith.constant dense<0xFF800000> : vector<8xf32>
    %200 = vector.multi_reduction <maximumf>, %199, %cst_62 [1] : vector<8x16xf32> to vector<8xf32>
    %201 = vector.shape_cast %200 : vector<8xf32> to vector<8x1xf32>
    %202 = vector.broadcast %201 : vector<8x1xf32> to vector<8x16xf32>
    %203 = arith.subf %199, %202 : vector<8x16xf32>
    %204 = math.exp %203 : vector<8x16xf32>
    %cst_63 = arith.constant dense<0.000000e+00> : vector<8xf32>
    %205 = vector.multi_reduction <add>, %204, %cst_63 [1] : vector<8x16xf32> to vector<8xf32>
    %206 = vector.shape_cast %205 : vector<8xf32> to vector<8x1xf32>
    %207 = tpu.reciprocal %206 {approx = true} : vector<8x1xf32> -> vector<8x1xf32>
    %208 = vector.broadcast %207 : vector<8x1xf32> to vector<8x16xf32>
    %209 = arith.mulf %204, %208 : vector<8x16xf32>
    %210 = vector.shape_cast %209 : vector<8x16xf32> to vector<8x16x1xf32>
    %211 = arith.extf %4 : vector<8x16x128xbf16> to vector<8x16x128xf32>
    %212 = vector.broadcast %210 : vector<8x16x1xf32> to vector<8x16x128xf32>
    %213 = arith.mulf %212, %211 : vector<8x16x128xf32>
    %cst_64 = arith.constant dense<0.000000e+00> : vector<8x128xf32>
    %214 = vector.multi_reduction <add>, %213, %cst_64 [1] : vector<8x16x128xf32> to vector<8x128xf32>
    %215 = arith.truncf %214 : vector<8x128xf32> to vector<8x128xbf16>
    %cst_65 = arith.constant dense<0.000000e+00> : vector<8x512xf32>
    %216 = tpu.matmul %215, %11, %cst_65 {dimension_numbers = #tpu.dot_dimension_numbers<[1], [0], [0], [1], [0, 0, 1, 1], [], []>} : vector<8x128xbf16>, vector<128x512xbf16>, vector<8x512xf32> -> vector<8x512xf32>
    %217 = arith.index_cast %c2_i32 : i32 to index
    %c0_66 = arith.constant 0 : index
    %c0_67 = arith.constant 0 : index
    %218 = vector.load %arg2[%217, %c0_66, %c0_67] : memref<4x8x384xbf16, #tpu.memory_space<vmem>>, vector<1x8x384xbf16>
    %219 = vector.shape_cast %218 : vector<1x8x384xbf16> to vector<8x384xbf16>
    %220 = arith.extf %219 : vector<8x384xbf16> to vector<8x384xf32>
    %221 = vector.extract_strided_slice %216 {offsets = [0, 0], sizes = [8, 384], strides = [1, 1]} : vector<8x512xf32> to vector<8x384xf32>
    %222 = arith.addf %220, %221 : vector<8x384xf32>
    %223 = vector.extract_strided_slice %222 {offsets = [0, 0], sizes = [8, 128], strides = [1, 1]} : vector<8x384xf32> to vector<8x128xf32>
    %224 = vector.extract_strided_slice %189 {offsets = [0, 0], sizes = [8, 128], strides = [1, 1]} : vector<8x384xf32> to vector<8x128xf32>
    %225 = arith.addf %223, %224 : vector<8x128xf32>
    %226 = arith.negf %225 : vector<8x128xf32>
    %227 = math.exp %226 : vector<8x128xf32>
    %cst_68 = arith.constant 1.000000e+00 : f32
    %228 = vector.broadcast %cst_68 : f32 to vector<8x128xf32>
    %229 = arith.addf %228, %227 : vector<8x128xf32>
    %230 = arith.divf %228, %229 : vector<8x128xf32>
    %231 = vector.extract_strided_slice %222 {offsets = [0, 128], sizes = [8, 128], strides = [1, 1]} : vector<8x384xf32> to vector<8x128xf32>
    %232 = vector.extract_strided_slice %189 {offsets = [0, 128], sizes = [8, 128], strides = [1, 1]} : vector<8x384xf32> to vector<8x128xf32>
    %233 = arith.addf %231, %232 : vector<8x128xf32>
    %234 = arith.negf %233 : vector<8x128xf32>
    %235 = math.exp %234 : vector<8x128xf32>
    %cst_69 = arith.constant 1.000000e+00 : f32
    %236 = vector.broadcast %cst_69 : f32 to vector<8x128xf32>
    %237 = arith.addf %236, %235 : vector<8x128xf32>
    %238 = arith.divf %236, %237 : vector<8x128xf32>
    %239 = vector.extract_strided_slice %222 {offsets = [0, 256], sizes = [8, 128], strides = [1, 1]} : vector<8x384xf32> to vector<8x128xf32>
    %240 = vector.extract_strided_slice %189 {offsets = [0, 256], sizes = [8, 128], strides = [1, 1]} : vector<8x384xf32> to vector<8x128xf32>
    %241 = arith.mulf %230, %240 : vector<8x128xf32>
    %242 = arith.addf %239, %241 : vector<8x128xf32>
    %243 = math.tanh %242 : vector<8x128xf32>
    %cst_70 = arith.constant 1.000000e+00 : f32
    %244 = vector.broadcast %cst_70 : f32 to vector<8x128xf32>
    %245 = arith.subf %244, %238 : vector<8x128xf32>
    %246 = arith.mulf %245, %243 : vector<8x128xf32>
    %247 = arith.mulf %238, %167 : vector<8x128xf32>
    %248 = arith.addf %246, %247 : vector<8x128xf32>
    %c4_i32_71 = arith.constant 4 : i32
    %249 = arith.muli %arg1, %c4_i32_71 : i32
    %250 = arith.addi %249, %c2_i32 : i32
    %c6_i32_72 = arith.constant 6 : i32
    %251 = arith.cmpi slt, %250, %c6_i32_72 : i32
    %252 = arith.select %251, %248, %167 : vector<8x128xf32>
    %253 = arith.index_cast %c2_i32 : i32 to index
    %c0_73 = arith.constant 0 : index
    %c0_74 = arith.constant 0 : index
    %254 = vector.load %arg13[%253, %c0_73, %c0_74] : memref<4x8x128xf32, #tpu.memory_space<vmem>>, vector<1x8x128xf32>
    %255 = vector.shape_cast %254 : vector<1x8x128xf32> to vector<8x128xf32>
    %256 = vector.shape_cast %252 : vector<8x128xf32> to vector<1x8x128xf32>
    tpu.vector_store %arg13[%253, %c0_73, %c0_74], %256 {strides = array<i32>} : memref<4x8x128xf32, #tpu.memory_space<vmem>>, vector<1x8x128xf32>,
    %257 = arith.index_cast %c2_i32 : i32 to index
    %c0_75 = arith.constant 0 : index
    %c0_76 = arith.constant 0 : index
    %258 = vector.load %arg3[%257, %c0_75, %c0_76] : memref<4x8x128xbf16, #tpu.memory_space<vmem>>, vector<1x8x128xbf16>
    %259 = vector.shape_cast %258 : vector<1x8x128xbf16> to vector<8x128xbf16>
    %260 = arith.extf %259 : vector<8x128xbf16> to vector<8x128xf32>
    %261 = arith.truncf %252 : vector<8x128xf32> to vector<8x128xbf16>
    %cst_77 = arith.constant dense<0.000000e+00> : vector<8x128xf32>
    %262 = tpu.matmul %261, %12, %cst_77 {dimension_numbers = #tpu.dot_dimension_numbers<[1], [0], [0], [1], [0, 0, 1, 1], [], []>} : vector<8x128xbf16>, vector<128x128xbf16>, vector<8x128xf32> -> vector<8x128xf32>
    %263 = arith.addf %260, %262 : vector<8x128xf32>
    %264 = vector.extract_strided_slice %216 {offsets = [0, 384], sizes = [8, 128], strides = [1, 1]} : vector<8x512xf32> to vector<8x128xf32>
    %265 = arith.addf %263, %264 : vector<8x128xf32>
    %266 = arith.index_cast %c2_i32 : i32 to index
    %c0_78 = arith.constant 0 : index
    %c0_79 = arith.constant 0 : index
    %267 = vector.load %arg14[%266, %c0_78, %c0_79] : memref<4x8x128xf32, #tpu.memory_space<vmem>>, vector<1x8x128xf32>
    %268 = vector.shape_cast %267 : vector<1x8x128xf32> to vector<8x128xf32>
    %269 = vector.shape_cast %265 : vector<8x128xf32> to vector<1x8x128xf32>
    tpu.vector_store %arg14[%266, %c0_78, %c0_79], %269 {strides = array<i32>} : memref<4x8x128xf32, #tpu.memory_space<vmem>>, vector<1x8x128xf32>,
    %c3_i32 = arith.constant 3 : i32
    %cst_80 = arith.constant dense<0.000000e+00> : vector<8x512xf32>
    %270 = tpu.matmul %252, %10, %cst_80 {dimension_numbers = #tpu.dot_dimension_numbers<[1], [0], [0], [1], [0, 0, 1, 1], [], []>} : vector<8x128xf32>, vector<128x512xf32>, vector<8x512xf32> -> vector<8x512xf32>
    %271 = vector.extract_strided_slice %270 {offsets = [0, 0], sizes = [8, 128], strides = [1, 1]} : vector<8x512xf32> to vector<8x128xf32>
    %272 = vector.extract_strided_slice %270 {offsets = [0, 128], sizes = [8, 384], strides = [1, 1]} : vector<8x512xf32> to vector<8x384xf32>
    %273 = vector.broadcast %13 : vector<1x384xf32> to vector<8x384xf32>
    %274 = arith.addf %272, %273 : vector<8x384xf32>
    %275 = vector.shape_cast %271 : vector<8x128xf32> to vector<8x1x128xf32>
    %276 = arith.extf %3 : vector<8x16x128xbf16> to vector<8x16x128xf32>
    %277 = vector.broadcast %275 : vector<8x1x128xf32> to vector<8x16x128xf32>
    %278 = arith.addf %277, %276 : vector<8x16x128xf32>
    %279 = math.tanh %278 : vector<8x16x128xf32>
    %280 = vector.broadcast %9 : vector<1x1x128xf32> to vector<8x16x128xf32>
    %281 = arith.mulf %279, %280 : vector<8x16x128xf32>
    %cst_81 = arith.constant dense<0.000000e+00> : vector<8x16xf32>
    %282 = vector.multi_reduction <add>, %281, %cst_81 [2] : vector<8x16x128xf32> to vector<8x16xf32>
    %283 = vector.broadcast %cst_20 : f32 to vector<8x16xf32>
    %284 = arith.select %7, %282, %283 : vector<8x16xi1>, vector<8x16xf32>
    %cst_82 = arith.constant dense<0xFF800000> : vector<8xf32>
    %285 = vector.multi_reduction <maximumf>, %284, %cst_82 [1] : vector<8x16xf32> to vector<8xf32>
    %286 = vector.shape_cast %285 : vector<8xf32> to vector<8x1xf32>
    %287 = vector.broadcast %286 : vector<8x1xf32> to vector<8x16xf32>
    %288 = arith.subf %284, %287 : vector<8x16xf32>
    %289 = math.exp %288 : vector<8x16xf32>
    %cst_83 = arith.constant dense<0.000000e+00> : vector<8xf32>
    %290 = vector.multi_reduction <add>, %289, %cst_83 [1] : vector<8x16xf32> to vector<8xf32>
    %291 = vector.shape_cast %290 : vector<8xf32> to vector<8x1xf32>
    %292 = tpu.reciprocal %291 {approx = true} : vector<8x1xf32> -> vector<8x1xf32>
    %293 = vector.broadcast %292 : vector<8x1xf32> to vector<8x16xf32>
    %294 = arith.mulf %289, %293 : vector<8x16xf32>
    %295 = vector.shape_cast %294 : vector<8x16xf32> to vector<8x16x1xf32>
    %296 = arith.extf %4 : vector<8x16x128xbf16> to vector<8x16x128xf32>
    %297 = vector.broadcast %295 : vector<8x16x1xf32> to vector<8x16x128xf32>
    %298 = arith.mulf %297, %296 : vector<8x16x128xf32>
    %cst_84 = arith.constant dense<0.000000e+00> : vector<8x128xf32>
    %299 = vector.multi_reduction <add>, %298, %cst_84 [1] : vector<8x16x128xf32> to vector<8x128xf32>
    %300 = arith.truncf %299 : vector<8x128xf32> to vector<8x128xbf16>
    %cst_85 = arith.constant dense<0.000000e+00> : vector<8x512xf32>
    %301 = tpu.matmul %300, %11, %cst_85 {dimension_numbers = #tpu.dot_dimension_numbers<[1], [0], [0], [1], [0, 0, 1, 1], [], []>} : vector<8x128xbf16>, vector<128x512xbf16>, vector<8x512xf32> -> vector<8x512xf32>
    %302 = arith.index_cast %c3_i32 : i32 to index
    %c0_86 = arith.constant 0 : index
    %c0_87 = arith.constant 0 : index
    %303 = vector.load %arg2[%302, %c0_86, %c0_87] : memref<4x8x384xbf16, #tpu.memory_space<vmem>>, vector<1x8x384xbf16>
    %304 = vector.shape_cast %303 : vector<1x8x384xbf16> to vector<8x384xbf16>
    %305 = arith.extf %304 : vector<8x384xbf16> to vector<8x384xf32>
    %306 = vector.extract_strided_slice %301 {offsets = [0, 0], sizes = [8, 384], strides = [1, 1]} : vector<8x512xf32> to vector<8x384xf32>
    %307 = arith.addf %305, %306 : vector<8x384xf32>
    %308 = vector.extract_strided_slice %307 {offsets = [0, 0], sizes = [8, 128], strides = [1, 1]} : vector<8x384xf32> to vector<8x128xf32>
    %309 = vector.extract_strided_slice %274 {offsets = [0, 0], sizes = [8, 128], strides = [1, 1]} : vector<8x384xf32> to vector<8x128xf32>
    %310 = arith.addf %308, %309 : vector<8x128xf32>
    %311 = arith.negf %310 : vector<8x128xf32>
    %312 = math.exp %311 : vector<8x128xf32>
    %cst_88 = arith.constant 1.000000e+00 : f32
    %313 = vector.broadcast %cst_88 : f32 to vector<8x128xf32>
    %314 = arith.addf %313, %312 : vector<8x128xf32>
    %315 = arith.divf %313, %314 : vector<8x128xf32>
    %316 = vector.extract_strided_slice %307 {offsets = [0, 128], sizes = [8, 128], strides = [1, 1]} : vector<8x384xf32> to vector<8x128xf32>
    %317 = vector.extract_strided_slice %274 {offsets = [0, 128], sizes = [8, 128], strides = [1, 1]} : vector<8x384xf32> to vector<8x128xf32>
    %318 = arith.addf %316, %317 : vector<8x128xf32>
    %319 = arith.negf %318 : vector<8x128xf32>
    %320 = math.exp %319 : vector<8x128xf32>
    %cst_89 = arith.constant 1.000000e+00 : f32
    %321 = vector.broadcast %cst_89 : f32 to vector<8x128xf32>
    %322 = arith.addf %321, %320 : vector<8x128xf32>
    %323 = arith.divf %321, %322 : vector<8x128xf32>
    %324 = vector.extract_strided_slice %307 {offsets = [0, 256], sizes = [8, 128], strides = [1, 1]} : vector<8x384xf32> to vector<8x128xf32>
    %325 = vector.extract_strided_slice %274 {offsets = [0, 256], sizes = [8, 128], strides = [1, 1]} : vector<8x384xf32> to vector<8x128xf32>
    %326 = arith.mulf %315, %325 : vector<8x128xf32>
    %327 = arith.addf %324, %326 : vector<8x128xf32>
    %328 = math.tanh %327 : vector<8x128xf32>
    %cst_90 = arith.constant 1.000000e+00 : f32
    %329 = vector.broadcast %cst_90 : f32 to vector<8x128xf32>
    %330 = arith.subf %329, %323 : vector<8x128xf32>
    %331 = arith.mulf %330, %328 : vector<8x128xf32>
    %332 = arith.mulf %323, %252 : vector<8x128xf32>
    %333 = arith.addf %331, %332 : vector<8x128xf32>
    %c4_i32_91 = arith.constant 4 : i32
    %334 = arith.muli %arg1, %c4_i32_91 : i32
    %335 = arith.addi %334, %c3_i32 : i32
    %c6_i32_92 = arith.constant 6 : i32
    %336 = arith.cmpi slt, %335, %c6_i32_92 : i32
    %337 = arith.select %336, %333, %252 : vector<8x128xf32>
    %338 = arith.index_cast %c3_i32 : i32 to index
    %c0_93 = arith.constant 0 : index
    %c0_94 = arith.constant 0 : index
    %339 = vector.load %arg13[%338, %c0_93, %c0_94] : memref<4x8x128xf32, #tpu.memory_space<vmem>>, vector<1x8x128xf32>
    %340 = vector.shape_cast %339 : vector<1x8x128xf32> to vector<8x128xf32>
    %341 = vector.shape_cast %337 : vector<8x128xf32> to vector<1x8x128xf32>
    tpu.vector_store %arg13[%338, %c0_93, %c0_94], %341 {strides = array<i32>} : memref<4x8x128xf32, #tpu.memory_space<vmem>>, vector<1x8x128xf32>,
    %342 = arith.index_cast %c3_i32 : i32 to index
    %c0_95 = arith.constant 0 : index
    %c0_96 = arith.constant 0 : index
    %343 = vector.load %arg3[%342, %c0_95, %c0_96] : memref<4x8x128xbf16, #tpu.memory_space<vmem>>, vector<1x8x128xbf16>
    %344 = vector.shape_cast %343 : vector<1x8x128xbf16> to vector<8x128xbf16>
    %345 = arith.extf %344 : vector<8x128xbf16> to vector<8x128xf32>
    %346 = arith.truncf %337 : vector<8x128xf32> to vector<8x128xbf16>
    %cst_97 = arith.constant dense<0.000000e+00> : vector<8x128xf32>
    %347 = tpu.matmul %346, %12, %cst_97 {dimension_numbers = #tpu.dot_dimension_numbers<[1], [0], [0], [1], [0, 0, 1, 1], [], []>} : vector<8x128xbf16>, vector<128x128xbf16>, vector<8x128xf32> -> vector<8x128xf32>
    %348 = arith.addf %345, %347 : vector<8x128xf32>
    %349 = vector.extract_strided_slice %301 {offsets = [0, 384], sizes = [8, 128], strides = [1, 1]} : vector<8x512xf32> to vector<8x128xf32>
    %350 = arith.addf %348, %349 : vector<8x128xf32>
    %351 = arith.index_cast %c3_i32 : i32 to index
    %c0_98 = arith.constant 0 : index
    %c0_99 = arith.constant 0 : index
    %352 = vector.load %arg14[%351, %c0_98, %c0_99] : memref<4x8x128xf32, #tpu.memory_space<vmem>>, vector<1x8x128xf32>
    %353 = vector.shape_cast %352 : vector<1x8x128xf32> to vector<8x128xf32>
    %354 = vector.shape_cast %350 : vector<8x128xf32> to vector<1x8x128xf32>
    tpu.vector_store %arg14[%351, %c0_98, %c0_99], %354 {strides = array<i32>} : memref<4x8x128xf32, #tpu.memory_space<vmem>>, vector<1x8x128xf32>,
    %c4_i32_100 = arith.constant 4 : i32
    %c0_101 = arith.constant 0 : index
    %c0_102 = arith.constant 0 : index
    %355 = vector.load %arg16[%c0_101, %c0_102] : memref<8x128xf32, #tpu.memory_space<vmem>>, vector<8x128xf32>
    tpu.vector_store %arg16[%c0_101, %c0_102], %337 {strides = array<i32>} : memref<8x128xf32, #tpu.memory_space<vmem>>, vector<8x128xf32>,
    %c0_103 = arith.constant 0 : index
    %c0_104 = arith.constant 0 : index
    %356 = vector.load %arg15[%c0_103, %c0_104] : memref<8x128xf32, #tpu.memory_space<vmem>>, vector<8x128xf32>
    tpu.vector_store %arg15[%c0_103, %c0_104], %337 {strides = array<i32>} : memref<8x128xf32, #tpu.memory_space<vmem>>, vector<8x128xf32>,
    return
  }
  func.func @transform_0(%arg0: i32, %arg1: i32) -> (i32, i32, i32) {
    %c0_i32 = arith.constant 0 : i32
    %c0_i32_0 = arith.constant 0 : i32
    return %arg1, %arg0, %c0_i32 : i32, i32, i32
  }
  func.func @transform_1(%arg0: i32, %arg1: i32) -> (i32, i32, i32) {
    %c0_i32 = arith.constant 0 : i32
    %c0_i32_0 = arith.constant 0 : i32
    return %arg1, %arg0, %c0_i32 : i32, i32, i32
  }
  func.func @transform_2(%arg0: i32, %arg1: i32) -> (i32, i32, i32) {
    %c0_i32 = arith.constant 0 : i32
    %c0_i32_0 = arith.constant 0 : i32
    %c0_i32_1 = arith.constant 0 : i32
    return %arg0, %c0_i32, %c0_i32_0 : i32, i32, i32
  }
  func.func @transform_3(%arg0: i32, %arg1: i32) -> (i32, i32, i32) {
    %c0_i32 = arith.constant 0 : i32
    %c0_i32_0 = arith.constant 0 : i32
    %c0_i32_1 = arith.constant 0 : i32
    return %arg0, %c0_i32, %c0_i32_0 : i32, i32, i32
  }
  func.func @transform_4(%arg0: i32, %arg1: i32) -> (i32, i32) {
    %c0_i32 = arith.constant 0 : i32
    %c0_i32_0 = arith.constant 0 : i32
    return %arg0, %c0_i32 : i32, i32
  }
  func.func @transform_5(%arg0: i32, %arg1: i32) -> (i32, i32) {
    %c0_i32 = arith.constant 0 : i32
    %c0_i32_0 = arith.constant 0 : i32
    return %arg0, %c0_i32 : i32, i32
  }
  func.func @transform_6(%arg0: i32, %arg1: i32) -> (i32, i32) {
    %c0_i32 = arith.constant 0 : i32
    %c0_i32_0 = arith.constant 0 : i32
    %c0_i32_1 = arith.constant 0 : i32
    return %c0_i32, %c0_i32_0 : i32, i32
  }
  func.func @transform_7(%arg0: i32, %arg1: i32) -> (i32, i32) {
    %c0_i32 = arith.constant 0 : i32
    %c0_i32_0 = arith.constant 0 : i32
    %c0_i32_1 = arith.constant 0 : i32
    return %c0_i32, %c0_i32_0 : i32, i32
  }
  func.func @transform_8(%arg0: i32, %arg1: i32) -> (i32, i32) {
    %c0_i32 = arith.constant 0 : i32
    %c0_i32_0 = arith.constant 0 : i32
    %c0_i32_1 = arith.constant 0 : i32
    return %c0_i32, %c0_i32_0 : i32, i32
  }
  func.func @transform_9(%arg0: i32, %arg1: i32) -> (i32, i32) {
    %c0_i32 = arith.constant 0 : i32
    %c0_i32_0 = arith.constant 0 : i32
    %c0_i32_1 = arith.constant 0 : i32
    return %c0_i32, %c0_i32_0 : i32, i32
  }
  func.func @transform_10(%arg0: i32, %arg1: i32) -> (i32, i32) {
    %c0_i32 = arith.constant 0 : i32
    %c0_i32_0 = arith.constant 0 : i32
    %c0_i32_1 = arith.constant 0 : i32
    return %c0_i32, %c0_i32_0 : i32, i32
  }
  func.func @transform_11(%arg0: i32, %arg1: i32) -> (i32, i32, i32) {
    %c0_i32 = arith.constant 0 : i32
    %c0_i32_0 = arith.constant 0 : i32
    return %arg1, %arg0, %c0_i32 : i32, i32, i32
  }
  func.func @transform_12(%arg0: i32, %arg1: i32) -> (i32, i32, i32) {
    %c0_i32 = arith.constant 0 : i32
    %c0_i32_0 = arith.constant 0 : i32
    return %arg1, %arg0, %c0_i32 : i32, i32, i32
  }
  func.func @transform_13(%arg0: i32, %arg1: i32) -> (i32, i32) {
    %c0_i32 = arith.constant 0 : i32
    %c0_i32_0 = arith.constant 0 : i32
    return %arg0, %c0_i32 : i32, i32
  }
}

</mosaic_0001>

<llo_original>
// kernel: _lambda_.1
$region0: #{_lambda_.1}
  #allocation0 [shape = 'u32[]', space=smem, size = 0x4, offset = 0x4, fixed_abs, tag = 'smem constant byte address 0x4 - core index']
  #allocation1 [shape = 'u32[144,128]{1,0:T(1,128)}', space=vmem, size = 0x12000, scoped, tag = 'internal scratch']
  #allocation2 [shape = 'f32[8,128]{1,0:T(8,128)}', space=vmem, size = 0x1000, scoped, tag = 'scratch operand']
  %s0 = inlined_call_operand.vmem [shape: bf16[8,8,384], index: 0, kind: input, shape index: {}]
  %s1 = inlined_call_operand.vmem [shape: bf16[8,8,128], index: 1, kind: input, shape index: {}]
  %s2 = inlined_call_operand.vmem [shape: bf16[8,16,128], index: 2, kind: input, shape index: {}]
  %s3 = inlined_call_operand.vmem [shape: bf16[8,16,128], index: 3, kind: input, shape index: {}]
  %s4 = inlined_call_operand.vmem [shape: f32[8,16], index: 4, kind: input, shape index: {}]
  %s5 = inlined_call_operand.vmem [shape: f32[8,128], index: 5, kind: input, shape index: {}]
  %s6 = inlined_call_operand.vmem [shape: f32[128,512], index: 6, kind: input, shape index: {}]
  %s7 = inlined_call_operand.vmem [shape: bf16[128,512], index: 7, kind: input, shape index: {}]
  %s8 = inlined_call_operand.vmem [shape: bf16[128,128], index: 8, kind: input, shape index: {}]
  %s9 = inlined_call_operand.vmem [shape: f32[1,384], index: 9, kind: input, shape index: {}]
  %s10 = inlined_call_operand.vmem [shape: f32[1,128], index: 10, kind: input, shape index: {}]
  %s11 = inlined_call_operand.vmem [shape: f32[8,8,128], index: 11, kind: output, shape index: {0}]
  %s12 = inlined_call_operand.vmem [shape: f32[8,8,128], index: 12, kind: output, shape index: {1}]
  %s13 = inlined_call_operand.vmem [shape: f32[8,128], index: 13, kind: output, shape index: {2}]
  %14 = xla_tuple %s11, %s12, %s13
  %s15 = sld [smem:[#allocation0]]
  $region97: #{_lambda_.1} parent=0
    _
  %s17 = ssub.s32 1, %s15
  %s18 = scalar_select 0, %s17, %s15
  loop: start=0, step=1, limit=4
  $region2: #{_lambda_.1} parent=0 // loop_pre_header
    _
  $region3: #{_lambda_.1} parent=0 // loop_header
    %s20 = sphi 0, %s24
    %p21 = scmp.ge.s32.totalorder %s20, 4
    %s27 = sphi 0, %s39
    %s28 = sphi 0, %s35
    %s29 = sphi 0, %s27
    %s30 = sphi 0, %s28
    %s31 = sphi 0, %s29
    %s32 = sphi 0, %s30
    %s44 = sphi 0, %s46
    %s47 = sphi 0, %s44
    %s48 = sphi 0, %s47
    %s64 = sphi 0, %s48
    %s72 = sphi 0, %s74
    %s75 = sphi 0, %s72
    %s76 = sphi 0, %s75
    %s92 = sphi 0, %s76
    %s98 = sphi 0, %s100
    %s101 = sphi 0, %s98
    %s102 = sphi 0, %s101
    %s118 = sphi 0, %s102
    %s124 = sphi 0, %s126
    %s127 = sphi 0, %s124
    %s128 = sphi 0, %s127
    %s144 = sphi 0, %s128
    %s150 = sphi 0, %s152
    %s153 = sphi 0, %s150
    %s154 = sphi 0, %s153
    %s170 = sphi 0, %s154
    %s176 = sphi 0, %s178
    %s179 = sphi 0, %s176
    %s180 = sphi 0, %s179
    %s196 = sphi 0, %s180
    %s200 = sphi 0, %s200
    %s202 = sphi 0, %s200
    %s203 = sphi 0, %s202
    %s217 = sphi 0, %s203
    %s221 = sphi 0, %s221
    %s223 = sphi 0, %s221
    %s224 = sphi 0, %s223
    %s238 = sphi 0, %s224
    %s242 = sphi 0, %s242
    %s244 = sphi 0, %s242
    %s245 = sphi 0, %s244
    %s259 = sphi 0, %s245
    %s263 = sphi 0, %s263
    %s265 = sphi 0, %s263
    %s266 = sphi 0, %s265
    %s280 = sphi 0, %s266
    %s284 = sphi 0, %s284
    %s286 = sphi 0, %s284
    %s287 = sphi 0, %s286
    %s301 = sphi 0, %s287
    %s309 = sphi 0, %s311
    %s312 = sphi 0, %s309
    %s313 = sphi 0, %s312
    %s329 = sphi 0, %s313
    %s337 = sphi 0, %s339
    %s340 = sphi 0, %s337
    %s341 = sphi 0, %s340
    %s357 = sphi 0, %s341
    %s363 = sphi 0, %s365
    %s366 = sphi 0, %s363
    %s367 = sphi 0, %s366
    %s383 = sphi 0, %s367
  $region4: #{_lambda_.1} parent=0 // loop_header_branch
    %23 = sbr.rel (%p21) target = $region8
  $region5: #{_lambda_.1} parent=0 // loop_body
    %s25 = ssub.s32 %s20, 1
    %s26 = ssub.s32 %s20, 2
    %s33 = sadd.s32 1, %s28
    %p34 = scmp.ge.s32.totalorder %s33, 2
    %s35 = scalar_select %p34, 0, %s33
    %s36 = sadd.s32 1, %s27
    %s37 = scalar_select %p34, %s36, %s27
    %p38 = scmp.ge.s32.totalorder %s37, 1
    %s39 = scalar_select %p38, 0, %s37
    %s40 = ssub.s32 %s28, %s35
    %s41 = ssub.s32 %s27, %s39
    %s42 = sor.u32 %s40, %s41
    %p43 = scmp.eq.s32.totalorder %s42, 0
    %s45 = sadd.s32 %s44, 1
    %s46 = scalar_select %p43, %s44, %s45
    %p49 = pneg %p43
    %p50 = scmp.eq.s32.totalorder %s20, 1
    %p51 = por %p49, %p50
    %p52 = scmp.ne.s32.totalorder %s44, %s47
    %p53 = scmp.eq.s32.totalorder %s20, 0
    %p54 = por %p52, %p53
    %p55 = scmp.ne.s32.totalorder %s44, %s47
    %p56 = scmp.eq.s32.totalorder %s25, 1
    %p57 = por %p55, %p56
    %p58 = scmp.ne.s32.totalorder %s47, %s48
    %p59 = scmp.eq.s32.totalorder %s25, 0
    %p60 = por %p58, %p59
    %p61 = scmp.ne.s32.totalorder %s47, %s48
    %p62 = scmp.eq.s32.totalorder %s26, 1
    %p63 = por %p61, %p62
    %p65 = scmp.ne.s32.totalorder %s48, %s64
    %p66 = scmp.eq.s32.totalorder %s26, 0
    %p67 = por %p65, %p66
    %s68 = ssub.s32 %s28, %s35
    %s69 = ssub.s32 %s27, %s39
    %s70 = sor.u32 %s68, %s69
    %p71 = scmp.eq.s32.totalorder %s70, 0
    %s73 = sadd.s32 %s72, 1
    %s74 = scalar_select %p71, %s72, %s73
    %p77 = pneg %p71
    %p78 = scmp.eq.s32.totalorder %s20, 1
    %p79 = por %p77, %p78
    %p80 = scmp.ne.s32.totalorder %s72, %s75
    %p81 = scmp.eq.s32.totalorder %s20, 0
    %p82 = por %p80, %p81
    %p83 = scmp.ne.s32.totalorder %s72, %s75
    %p84 = scmp.eq.s32.totalorder %s25, 1
    %p85 = por %p83, %p84
    %p86 = scmp.ne.s32.totalorder %s75, %s76
    %p87 = scmp.eq.s32.totalorder %s25, 0
    %p88 = por %p86, %p87
    %p89 = scmp.ne.s32.totalorder %s75, %s76
    %p90 = scmp.eq.s32.totalorder %s26, 1
    %p91 = por %p89, %p90
    %p93 = scmp.ne.s32.totalorder %s76, %s92
    %p94 = scmp.eq.s32.totalorder %s26, 0
    %p95 = por %p93, %p94
    %s96 = ssub.s32 %s27, %s39
    %p97 = scmp.eq.s32.totalorder %s96, 0
    %s99 = sadd.s32 %s98, 1
    %s100 = scalar_select %p97, %s98, %s99
    %p103 = pneg %p97
    %p104 = scmp.eq.s32.totalorder %s20, 1
    %p105 = por %p103, %p104
    %p106 = scmp.ne.s32.totalorder %s98, %s101
    %p107 = scmp.eq.s32.totalorder %s20, 0
    %p108 = por %p106, %p107
    %p109 = scmp.ne.s32.totalorder %s98, %s101
    %p110 = scmp.eq.s32.totalorder %s25, 1
    %p111 = por %p109, %p110
    %p112 = scmp.ne.s32.totalorder %s101, %s102
    %p113 = scmp.eq.s32.totalorder %s25, 0
    %p114 = por %p112, %p113
    %p115 = scmp.ne.s32.totalorder %s101, %s102
    %p116 = scmp.eq.s32.totalorder %s26, 1
    %p117 = por %p115, %p116
    %p119 = scmp.ne.s32.totalorder %s102, %s118
    %p120 = scmp.eq.s32.totalorder %s26, 0
    %p121 = por %p119, %p120
    %s122 = ssub.s32 %s27, %s39
    %p123 = scmp.eq.s32.totalorder %s122, 0
    %s125 = sadd.s32 %s124, 1
    %s126 = scalar_select %p123, %s124, %s125
    %p129 = pneg %p123
    %p130 = scmp.eq.s32.totalorder %s20, 1
    %p131 = por %p129, %p130
    %p132 = scmp.ne.s32.totalorder %s124, %s127
    %p133 = scmp.eq.s32.totalorder %s20, 0
    %p134 = por %p132, %p133
    %p135 = scmp.ne.s32.totalorder %s124, %s127
    %p136 = scmp.eq.s32.totalorder %s25, 1
    %p137 = por %p135, %p136
    %p138 = scmp.ne.s32.totalorder %s127, %s128
    %p139 = scmp.eq.s32.totalorder %s25, 0
    %p140 = por %p138, %p139
    %p141 = scmp.ne.s32.totalorder %s127, %s128
    %p142 = scmp.eq.s32.totalorder %s26, 1
    %p143 = por %p141, %p142
    %p145 = scmp.ne.s32.totalorder %s128, %s144
    %p146 = scmp.eq.s32.totalorder %s26, 0
    %p147 = por %p145, %p146
    %s148 = ssub.s32 %s27, %s39
    %p149 = scmp.eq.s32.totalorder %s148, 0
    %s151 = sadd.s32 %s150, 1
    %s152 = scalar_select %p149, %s150, %s151
    %p155 = pneg %p149
    %p156 = scmp.eq.s32.totalorder %s20, 1
    %p157 = por %p155, %p156
    %p158 = scmp.ne.s32.totalorder %s150, %s153
    %p159 = scmp.eq.s32.totalorder %s20, 0
    %p160 = por %p158, %p159
    %p161 = scmp.ne.s32.totalorder %s150, %s153
    %p162 = scmp.eq.s32.totalorder %s25, 1
    %p163 = por %p161, %p162
    %p164 = scmp.ne.s32.totalorder %s153, %s154
    %p165 = scmp.eq.s32.totalorder %s25, 0
    %p166 = por %p164, %p165
    %p167 = scmp.ne.s32.totalorder %s153, %s154
    %p168 = scmp.eq.s32.totalorder %s26, 1
    %p169 = por %p167, %p168
    %p171 = scmp.ne.s32.totalorder %s154, %s170
    %p172 = scmp.eq.s32.totalorder %s26, 0
    %p173 = por %p171, %p172
    %s174 = ssub.s32 %s27, %s39
    %p175 = scmp.eq.s32.totalorder %s174, 0
    %s177 = sadd.s32 %s176, 1
    %s178 = scalar_select %p175, %s176, %s177
    %p181 = pneg %p175
    %p182 = scmp.eq.s32.totalorder %s20, 1
    %p183 = por %p181, %p182
    %p184 = scmp.ne.s32.totalorder %s176, %s179
    %p185 = scmp.eq.s32.totalorder %s20, 0
    %p186 = por %p184, %p185
    %p187 = scmp.ne.s32.totalorder %s176, %s179
    %p188 = scmp.eq.s32.totalorder %s25, 1
    %p189 = por %p187, %p188
    %p190 = scmp.ne.s32.totalorder %s179, %s180
    %p191 = scmp.eq.s32.totalorder %s25, 0
    %p192 = por %p190, %p191
    %p193 = scmp.ne.s32.totalorder %s179, %s180
    %p194 = scmp.eq.s32.totalorder %s26, 1
    %p195 = por %p193, %p194
    %p197 = scmp.ne.s32.totalorder %s180, %s196
    %p198 = scmp.eq.s32.totalorder %s26, 0
    %p199 = por %p197, %p198
    %s201 = sadd.s32 %s200, 1
    %p204 = scmp.eq.s32.totalorder %s20, 1
    %p205 = scmp.ne.s32.totalorder %s200, %s202
    %p206 = scmp.eq.s32.totalorder %s20, 0
    %p207 = por %p205, %p206
    %p208 = scmp.ne.s32.totalorder %s200, %s202
    %p209 = scmp.eq.s32.totalorder %s25, 1
    %p210 = por %p208, %p209
    %p211 = scmp.ne.s32.totalorder %s202, %s203
    %p212 = scmp.eq.s32.totalorder %s25, 0
    %p213 = por %p211, %p212
    %p214 = scmp.ne.s32.totalorder %s202, %s203
    %p215 = scmp.eq.s32.totalorder %s26, 1
    %p216 = por %p214, %p215
    %p218 = scmp.ne.s32.totalorder %s203, %s217
    %p219 = scmp.eq.s32.totalorder %s26, 0
    %p220 = por %p218, %p219
    %s222 = sadd.s32 %s221, 1
    %p225 = scmp.eq.s32.totalorder %s20, 1
    %p226 = scmp.ne.s32.totalorder %s221, %s223
    %p227 = scmp.eq.s32.totalorder %s20, 0
    %p228 = por %p226, %p227
    %p229 = scmp.ne.s32.totalorder %s221, %s223
    %p230 = scmp.eq.s32.totalorder %s25, 1
    %p231 = por %p229, %p230
    %p232 = scmp.ne.s32.totalorder %s223, %s224
    %p233 = scmp.eq.s32.totalorder %s25, 0
    %p234 = por %p232, %p233
    %p235 = scmp.ne.s32.totalorder %s223, %s224
    %p236 = scmp.eq.s32.totalorder %s26, 1
    %p237 = por %p235, %p236
    %p239 = scmp.ne.s32.totalorder %s224, %s238
    %p240 = scmp.eq.s32.totalorder %s26, 0
    %p241 = por %p239, %p240
    %s243 = sadd.s32 %s242, 1
    %p246 = scmp.eq.s32.totalorder %s20, 1
    %p247 = scmp.ne.s32.totalorder %s242, %s244
    %p248 = scmp.eq.s32.totalorder %s20, 0
    %p249 = por %p247, %p248
    %p250 = scmp.ne.s32.totalorder %s242, %s244
    %p251 = scmp.eq.s32.totalorder %s25, 1
    %p252 = por %p250, %p251
    %p253 = scmp.ne.s32.totalorder %s244, %s245
    %p254 = scmp.eq.s32.totalorder %s25, 0
    %p255 = por %p253, %p254
    %p256 = scmp.ne.s32.totalorder %s244, %s245
    %p257 = scmp.eq.s32.totalorder %s26, 1
    %p258 = por %p256, %p257
    %p260 = scmp.ne.s32.totalorder %s245, %s259
    %p261 = scmp.eq.s32.totalorder %s26, 0
    %p262 = por %p260, %p261
    %s264 = sadd.s32 %s263, 1
    %p267 = scmp.eq.s32.totalorder %s20, 1
    %p268 = scmp.ne.s32.totalorder %s263, %s265
    %p269 = scmp.eq.s32.totalorder %s20, 0
    %p270 = por %p268, %p269
    %p271 = scmp.ne.s32.totalorder %s263, %s265
    %p272 = scmp.eq.s32.totalorder %s25, 1
    %p273 = por %p271, %p272
    %p274 = scmp.ne.s32.totalorder %s265, %s266
    %p275 = scmp.eq.s32.totalorder %s25, 0
    %p276 = por %p274, %p275
    %p277 = scmp.ne.s32.totalorder %s265, %s266
    %p278 = scmp.eq.s32.totalorder %s26, 1
    %p279 = por %p277, %p278
    %p281 = scmp.ne.s32.totalorder %s266, %s280
    %p282 = scmp.eq.s32.totalorder %s26, 0
    %p283 = por %p281, %p282
    %s285 = sadd.s32 %s284, 1
    %p288 = scmp.eq.s32.totalorder %s20, 1
    %p289 = scmp.ne.s32.totalorder %s284, %s286
    %p290 = scmp.eq.s32.totalorder %s20, 0
    %p291 = por %p289, %p290
    %p292 = scmp.ne.s32.totalorder %s284, %s286
    %p293 = scmp.eq.s32.totalorder %s25, 1
    %p294 = por %p292, %p293
    %p295 = scmp.ne.s32.totalorder %s286, %s287
    %p296 = scmp.eq.s32.totalorder %s25, 0
    %p297 = por %p295, %p296
    %p298 = scmp.ne.s32.totalorder %s286, %s287
    %p299 = scmp.eq.s32.totalorder %s26, 1
    %p300 = por %p298, %p299
    %p302 = scmp.ne.s32.totalorder %s287, %s301
    %p303 = scmp.eq.s32.totalorder %s26, 0
    %p304 = por %p302, %p303
    %s305 = ssub.s32 %s28, %s35
    %s306 = ssub.s32 %s27, %s39
    %s307 = sor.u32 %s305, %s306
    %p308 = scmp.eq.s32.totalorder %s307, 0
    %s310 = sadd.s32 %s309, 1
    %s311 = scalar_select %p308, %s309, %s310
    %p314 = pneg %p308
    %p315 = scmp.eq.s32.totalorder %s20, 1
    %p316 = por %p314, %p315
    %p317 = scmp.ne.s32.totalorder %s309, %s312
    %p318 = scmp.eq.s32.totalorder %s20, 0
    %p319 = por %p317, %p318
    %p320 = scmp.ne.s32.totalorder %s309, %s312
    %p321 = scmp.eq.s32.totalorder %s25, 1
    %p322 = por %p320, %p321
    %p323 = scmp.ne.s32.totalorder %s312, %s313
    %p324 = scmp.eq.s32.totalorder %s25, 0
    %p325 = por %p323, %p324
    %p326 = scmp.ne.s32.totalorder %s312, %s313
    %p327 = scmp.eq.s32.totalorder %s26, 1
    %p328 = por %p326, %p327
    %p330 = scmp.ne.s32.totalorder %s313, %s329
    %p331 = scmp.eq.s32.totalorder %s26, 0
    %p332 = por %p330, %p331
    %s333 = ssub.s32 %s28, %s35
    %s334 = ssub.s32 %s27, %s39
    %s335 = sor.u32 %s333, %s334
    %p336 = scmp.eq.s32.totalorder %s335, 0
    %s338 = sadd.s32 %s337, 1
    %s339 = scalar_select %p336, %s337, %s338
    %p342 = pneg %p336
    %p343 = scmp.eq.s32.totalorder %s20, 1
    %p344 = por %p342, %p343
    %p345 = scmp.ne.s32.totalorder %s337, %s340
    %p346 = scmp.eq.s32.totalorder %s20, 0
    %p347 = por %p345, %p346
    %p348 = scmp.ne.s32.totalorder %s337, %s340
    %p349 = scmp.eq.s32.totalorder %s25, 1
    %p350 = por %p348, %p349
    %p351 = scmp.ne.s32.totalorder %s340, %s341
    %p352 = scmp.eq.s32.totalorder %s25, 0
    %p353 = por %p351, %p352
    %p354 = scmp.ne.s32.totalorder %s340, %s341
    %p355 = scmp.eq.s32.totalorder %s26, 1
    %p356 = por %p354, %p355
    %p358 = scmp.ne.s32.totalorder %s341, %s357
    %p359 = scmp.eq.s32.totalorder %s26, 0
    %p360 = por %p358, %p359
    %s361 = ssub.s32 %s27, %s39
    %p362 = scmp.eq.s32.totalorder %s361, 0
    %s364 = sadd.s32 %s363, 1
    %s365 = scalar_select %p362, %s363, %s364
    %p368 = pneg %p362
    %p369 = scmp.eq.s32.totalorder %s20, 1
    %p370 = por %p368, %p369
    %p371 = scmp.ne.s32.totalorder %s363, %s366
    %p372 = scmp.eq.s32.totalorder %s20, 0
    %p373 = por %p371, %p372
    %p374 = scmp.ne.s32.totalorder %s363, %s366
    %p375 = scmp.eq.s32.totalorder %s25, 1
    %p376 = por %p374, %p375
    %p377 = scmp.ne.s32.totalorder %s366, %s367
    %p378 = scmp.eq.s32.totalorder %s25, 0
    %p379 = por %p377, %p378
    %p380 = scmp.ne.s32.totalorder %s366, %s367
    %p381 = scmp.eq.s32.totalorder %s26, 1
    %p382 = por %p380, %p381
    %p384 = scmp.ne.s32.totalorder %s367, %s383
    %p385 = scmp.eq.s32.totalorder %s26, 0
    %p386 = por %p384, %p385
    %p387 = scmp.le.s32.totalorder 1, %s20
    %p388 = scmp.lt.s32.totalorder %s20, 3
    %p389 = pnand %p387, %p388
    %p390 = pneg %p389
    // Predicated region
    $region9: #{_lambda_.1} parent=5 // pred_check
      _
    $region10: #{_lambda_.1} parent=5 // pred_check_branch
      %392 = sbr.rel (%p389) target = $region12
    $region11: #{_lambda_.1} parent=5 // pred_region
      %s393 = ssub.s32 %s20, 1
      // Predicated region
      $region13: #{_lambda_.1} parent=11 // pred_check
        %p394 = pneg %p114
      $region14: #{_lambda_.1} parent=11 // pred_check_branch
        %396 = sbr.rel (%p394) target = $region16
      $region15: #{_lambda_.1} parent=11 // pred_region
        %s397 = smul.u32 8, %s29
        %p398 = scmp.lt.s32.totalorder %s397, 7
        %s399 = scalar_select %p398, %s397, 7
        %s400 = smul.addr %s399, 2
        %s401 = smul.addr %s400, 4
        %s402 = scalar_lea.vmem %s2, %s401
        %s403 = smul.u32 8, %s29
      $region16: #{_lambda_.1} parent=11 // pred_fallthru
        _
      // Predicated region
      $region17: #{_lambda_.1} parent=11 // pred_check
        %p404 = pneg %p140
      $region18: #{_lambda_.1} parent=11 // pred_check_branch
        %406 = sbr.rel (%p404) target = $region20
      $region19: #{_lambda_.1} parent=11 // pred_region
        %s407 = smul.u32 8, %s29
        %p408 = scmp.lt.s32.totalorder %s407, 7
        %s409 = scalar_select %p408, %s407, 7
        %s410 = smul.addr %s409, 2
        %s411 = smul.addr %s410, 4
        %s412 = scalar_lea.vmem %s3, %s411
        %s413 = smul.u32 8, %s29
      $region20: #{_lambda_.1} parent=11 // pred_fallthru
        _
      // Predicated region
      $region21: #{_lambda_.1} parent=11 // pred_check
        %p414 = pneg %p166
      $region22: #{_lambda_.1} parent=11 // pred_check_branch
        %416 = sbr.rel (%p414) target = $region24
      $region23: #{_lambda_.1} parent=11 // pred_region
        %p417 = scmp.lt.s32.totalorder %s29, 0
        %s418 = scalar_select %p417, %s29, 0
        %s419 = smul.addr %s418, 8
        %s420 = scalar_lea.vmem %s4, %s419
      $region24: #{_lambda_.1} parent=11 // pred_fallthru
        _
      // Predicated region
      $region25: #{_lambda_.1} parent=11 // pred_check
        %p421 = pneg %p192
      $region26: #{_lambda_.1} parent=11 // pred_check_branch
        %423 = sbr.rel (%p421) target = $region28
      $region27: #{_lambda_.1} parent=11 // pred_region
        %p424 = scmp.lt.s32.totalorder %s29, 0
        %s425 = scalar_select %p424, %s29, 0
        %s426 = smul.addr %s425, 8
        %s427 = scalar_lea.vmem %s5, %s426
      $region28: #{_lambda_.1} parent=11 // pred_fallthru
        _
      // Predicated region
      $region29: #{_lambda_.1} parent=11 // pred_check
        %p428 = pneg %p213
      $region30: #{_lambda_.1} parent=11 // pred_check_branch
        %430 = sbr.rel (%p428) target = $region32
      $region31: #{_lambda_.1} parent=11 // pred_region
        _
      $region32: #{_lambda_.1} parent=11 // pred_fallthru
        _
      // Predicated region
      $region33: #{_lambda_.1} parent=11 // pred_check
        %p431 = pneg %p234
      $region34: #{_lambda_.1} parent=11 // pred_check_branch
        %433 = sbr.rel (%p431) target = $region36
      $region35: #{_lambda_.1} parent=11 // pred_region
        _
      $region36: #{_lambda_.1} parent=11 // pred_fallthru
        _
      // Predicated region
      $region37: #{_lambda_.1} parent=11 // pred_check
        %p434 = pneg %p255
      $region38: #{_lambda_.1} parent=11 // pred_check_branch
        %436 = sbr.rel (%p434) target = $region40
      $region39: #{_lambda_.1} parent=11 // pred_region
        _
      $region40: #{_lambda_.1} parent=11 // pred_fallthru
        _
      // Predicated region
      $region41: #{_lambda_.1} parent=11 // pred_check
        %p437 = pneg %p276
      $region42: #{_lambda_.1} parent=11 // pred_check_branch
        %439 = sbr.rel (%p437) target = $region44
      $region43: #{_lambda_.1} parent=11 // pred_region
        _
      $region44: #{_lambda_.1} parent=11 // pred_fallthru
        _
      // Predicated region
      $region45: #{_lambda_.1} parent=11 // pred_check
        %p440 = pneg %p297
      $region46: #{_lambda_.1} parent=11 // pred_check_branch
        %442 = sbr.rel (%p440) target = $region48
      $region47: #{_lambda_.1} parent=11 // pred_region
        _
      $region48: #{_lambda_.1} parent=11 // pred_fallthru
        _
    $region12: #{_lambda_.1} parent=5 // pred_fallthru
      _
    %p443 = scmp.lt.s32.totalorder %s20, 2
    // Predicated region
    $region49: #{_lambda_.1} parent=5 // pred_check
      %p444 = pneg %p443
    $region50: #{_lambda_.1} parent=5 // pred_check_branch
      %446 = sbr.rel (%p444) target = $region52
    $region51: #{_lambda_.1} parent=5 // pred_region
      // Predicated region
      $region53: #{_lambda_.1} parent=51 // pred_check
        %p447 = pneg %p54
      $region54: #{_lambda_.1} parent=51 // pred_check_branch
        %449 = sbr.rel (%p447) target = $region56
      $region55: #{_lambda_.1} parent=51 // pred_region
        %s450 = smul.u32 4, %s28
        %p451 = scmp.lt.s32.totalorder %s450, 7
        %s452 = scalar_select %p451, %s450, 7
        %p453 = scmp.lt.s32.totalorder %s27, 0
        %s454 = scalar_select %p453, %s27, 0
        %s455 = smul.addr %s454, 3
        %s456 = smul.addr %s452, 3
        %s457 = sadd.s32 %s455, %s456
        %s458 = smul.addr %s457, 4
        %s459 = scalar_lea.vmem %s0, %s458
        %s460 = smul.u32 4, %s28
      $region56: #{_lambda_.1} parent=51 // pred_fallthru
        _
      // Predicated region
      $region57: #{_lambda_.1} parent=51 // pred_check
        %p461 = pneg %p82
      $region58: #{_lambda_.1} parent=51 // pred_check_branch
        %463 = sbr.rel (%p461) target = $region60
      $region59: #{_lambda_.1} parent=51 // pred_region
        %s464 = smul.u32 4, %s28
        %p465 = scmp.lt.s32.totalorder %s464, 7
        %s466 = scalar_select %p465, %s464, 7
        %p467 = scmp.lt.s32.totalorder %s27, 0
        %s468 = scalar_select %p467, %s27, 0
        %s469 = sadd.s32 %s468, %s466
        %s470 = smul.addr %s469, 4
        %s471 = scalar_lea.vmem %s1, %s470
        %s472 = smul.u32 4, %s28
      $region60: #{_lambda_.1} parent=51 // pred_fallthru
        _
    $region52: #{_lambda_.1} parent=5 // pred_fallthru
      _
    %p473 = scmp.le.s32.totalorder 1, %s20
    %p474 = scmp.lt.s32.totalorder %s20, 3
    %p475 = pnand %p473, %p474
    %p476 = pneg %p475
    // Predicated region
    $region61: #{_lambda_.1} parent=5 // pred_check
      _
    $region62: #{_lambda_.1} parent=5 // pred_check_branch
      %478 = sbr.rel (%p475) target = $region64
    $region63: #{_lambda_.1} parent=5 // pred_region
      %s479 = ssub.s32 %s20, 1
      %s480 = smul.u32 4, %s30
      %p481 = scmp.lt.s32.totalorder %s480, 7
      %s482 = scalar_select %p481, %s480, 7
      %p483 = scmp.lt.s32.totalorder %s29, 0
      %s484 = scalar_select %p483, %s29, 0
      %s485 = smul.addr %s484, 3
      %s486 = smul.addr %s482, 3
      %s487 = sadd.s32 %s485, %s486
      %s488 = smul.addr %s487, 4
      %s489 = scalar_lea.vmem %s0, %s488
      %p490 = pneg %p60
      %p491 = pneg %p57
      %s492 = smul.u32 4, %s30
      %p493 = scmp.lt.s32.totalorder %s492, 7
      %s494 = scalar_select %p493, %s492, 7
      %p495 = scmp.lt.s32.totalorder %s29, 0
      %s496 = scalar_select %p495, %s29, 0
      %s497 = sadd.s32 %s496, %s494
      %s498 = smul.addr %s497, 4
      %s499 = scalar_lea.vmem %s1, %s498
      %p500 = pneg %p88
      %p501 = pneg %p85
      %s502 = smul.u32 8, %s29
      %p503 = scmp.lt.s32.totalorder %s502, 7
      %s504 = scalar_select %p503, %s502, 7
      %s505 = smul.addr %s504, 2
      %s506 = smul.addr %s505, 4
      %s507 = scalar_lea.vmem %s2, %s506
      %p508 = pneg %p114
      %p509 = pneg %p111
      %s510 = smul.u32 8, %s29
      %p511 = scmp.lt.s32.totalorder %s510, 7
      %s512 = scalar_select %p511, %s510, 7
      %s513 = smul.addr %s512, 2
      %s514 = smul.addr %s513, 4
      %s515 = scalar_lea.vmem %s3, %s514
      %p516 = pneg %p140
      %p517 = pneg %p137
      %p518 = scmp.lt.s32.totalorder %s29, 0
      %s519 = scalar_select %p518, %s29, 0
      %s520 = smul.addr %s519, 8
      %s521 = scalar_lea.vmem %s4, %s520
      %p522 = pneg %p166
      %p523 = pneg %p163
      %p524 = scmp.lt.s32.totalorder %s29, 0
      %s525 = scalar_select %p524, %s29, 0
      %s526 = smul.addr %s525, 8
      %s527 = scalar_lea.vmem %s5, %s526
      %p528 = pneg %p192
      %p529 = pneg %p189
      %p530 = pneg %p213
      %p531 = pneg %p210
      %p532 = pneg %p234
      %p533 = pneg %p231
      %p534 = pneg %p255
      %p535 = pneg %p252
      %p536 = pneg %p276
      %p537 = pneg %p273
      %p538 = pneg %p297
      %p539 = pneg %p294
      %p540 = pneg %p325
      %p541 = pneg %p322
      %s542 = smul.u32 4, %s30
      %p543 = scmp.lt.s32.totalorder %s542, 7
      %s544 = scalar_select %p543, %s542, 7
      %p545 = scmp.lt.s32.totalorder %s29, 0
      %s546 = scalar_select %p545, %s29, 0
      %s547 = sadd.s32 %s546, %s544
      %s548 = smul.addr %s547, 8
      %s549 = scalar_lea.vmem %s11, %s548
      %p550 = pneg %p353
      %p551 = pneg %p350
      %s552 = smul.u32 4, %s30
      %p553 = scmp.lt.s32.totalorder %s552, 7
      %s554 = scalar_select %p553, %s552, 7
      %p555 = scmp.lt.s32.totalorder %s29, 0
      %s556 = scalar_select %p555, %s29, 0
      %s557 = sadd.s32 %s556, %s554
      %s558 = smul.addr %s557, 8
      %s559 = scalar_lea.vmem %s12, %s558
      %p560 = pneg %p379
      %p561 = pneg %p376
      %p562 = scmp.lt.s32.totalorder %s29, 0
      %s563 = scalar_select %p562, %s29, 0
      %s564 = smul.addr %s563, 8
      %s565 = scalar_lea.vmem %s13, %s564
      %s566 = smul.u32 4, %s30
      %p567 = scmp.lt.s32.totalorder %s566, 7
      %s568 = scalar_select %p567, %s566, 7
      %p569 = scmp.lt.s32.totalorder %s29, 0
      %s570 = scalar_select %p569, %s29, 0
      %s571 = smul.addr %s570, 3
      %s572 = smul.addr %s568, 3
      %s573 = sadd.s32 %s571, %s572
      %s574 = smul.addr %s573, 4
      %s575 = scalar_lea.vmem %s0, %s574
      %s576 = smul.u32 4, %s30
      %s577 = smul.u32 4, %s30
      %p578 = scmp.lt.s32.totalorder %s577, 7
      %s579 = scalar_select %p578, %s577, 7
      %p580 = scmp.lt.s32.totalorder %s29, 0
      %s581 = scalar_select %p580, %s29, 0
      %s582 = sadd.s32 %s581, %s579
      %s583 = smul.addr %s582, 4
      %s584 = scalar_lea.vmem %s1, %s583
      %s585 = smul.u32 4, %s30
      %s586 = smul.u32 8, %s29
      %p587 = scmp.lt.s32.totalorder %s586, 7
      %s588 = scalar_select %p587, %s586, 7
      %s589 = smul.addr %s588, 2
      %s590 = smul.addr %s589, 4
      %s591 = scalar_lea.vmem %s2, %s590
      %s592 = smul.u32 8, %s29
      %s593 = smul.u32 8, %s29
      %p594 = scmp.lt.s32.totalorder %s593, 7
      %s595 = scalar_select %p594, %s593, 7
      %s596 = smul.addr %s595, 2
      %s597 = smul.addr %s596, 4
      %s598 = scalar_lea.vmem %s3, %s597
      %s599 = smul.u32 8, %s29
      %p600 = scmp.lt.s32.totalorder %s29, 0
      %s601 = scalar_select %p600, %s29, 0
      %s602 = smul.addr %s601, 8
      %s603 = scalar_lea.vmem %s4, %s602
      %p604 = scmp.lt.s32.totalorder %s29, 0
      %s605 = scalar_select %p604, %s29, 0
      %s606 = smul.addr %s605, 8
      %s607 = scalar_lea.vmem %s5, %s606
      %s608 = smul.u32 4, %s30
      %p609 = scmp.lt.s32.totalorder %s608, 7
      %s610 = scalar_select %p609, %s608, 7
      %p611 = scmp.lt.s32.totalorder %s29, 0
      %s612 = scalar_select %p611, %s29, 0
      %s613 = sadd.s32 %s612, %s610
      %s614 = smul.addr %s613, 8
      %s615 = scalar_lea.vmem %s11, %s614
      %s616 = smul.u32 4, %s30
      %s617 = smul.u32 4, %s30
      %p618 = scmp.lt.s32.totalorder %s617, 7
      %s619 = scalar_select %p618, %s617, 7
      %p620 = scmp.lt.s32.totalorder %s29, 0
      %s621 = scalar_select %p620, %s29, 0
      %s622 = sadd.s32 %s621, %s619
      %s623 = smul.addr %s622, 8
      %s624 = scalar_lea.vmem %s12, %s623
      %s625 = smul.u32 4, %s30
      %p626 = scmp.lt.s32.totalorder %s29, 0
      %s627 = scalar_select %p626, %s29, 0
      %s628 = smul.addr %s627, 8
      %s629 = scalar_lea.vmem %s13, %s628
      %p631 = scmp.eq.s32.totalorder %s30, 0
      // Predicated region
      $region65: #{_lambda_.1} parent=63 // pred_check
        %p632 = pneg %p631
      $region66: #{_lambda_.1} parent=63 // pred_check_branch
        %634 = sbr.rel (%p632) target = $region68
      $region67: #{_lambda_.1} parent=63 // pred_region
        %v635 = vld [vmem:[%s607] sm:$0xff]
        %636 = vst [vmem:[#allocation2] sm:$0xff] %v635
      $region68: #{_lambda_.1} parent=63 // pred_fallthru
        _
      %v637 = vld [vmem:[%s598] sm:$0xf]
      %v638 = vld [vmem:[%s598 + $0x4] sm:$0xf]
      %v639 = vld [vmem:[%s598 + $0x8] sm:$0xf]
      %v640 = vld [vmem:[%s598 + $0xc] sm:$0xf]
      %v641 = vld [vmem:[%s598 + $0x10] sm:$0xf]
      %v642 = vld [vmem:[%s598 + $0x14] sm:$0xf]
      %v643 = vld [vmem:[%s598 + $0x18] sm:$0xf]
      %v644 = vld [vmem:[%s598 + $0x1c] sm:$0xf]
      %v645 = vld [vmem:[%s598 + $0x20] sm:$0xf]
      %v646 = vld [vmem:[%s598 + $0x24] sm:$0xf]
      %v647 = vld [vmem:[%s598 + $0x28] sm:$0xf]
      %v648 = vld [vmem:[%s598 + $0x2c] sm:$0xf]
      %v649 = vld [vmem:[%s598 + $0x30] sm:$0xf]
      %v650 = vld [vmem:[%s598 + $0x34] sm:$0xf]
      %v651 = vld [vmem:[%s598 + $0x38] sm:$0xf]
      %v652 = vld [vmem:[%s598 + $0x3c] sm:$0xf]
      %v653 = vld [vmem:[%s591] sm:$0xf]
      %v654 = vld [vmem:[%s591 + $0x4] sm:$0xf]
      %v655 = vld [vmem:[%s591 + $0x8] sm:$0xf]
      %v656 = vld [vmem:[%s591 + $0xc] sm:$0xf]
      %v657 = vld [vmem:[%s591 + $0x10] sm:$0xf]
      %v658 = vld [vmem:[%s591 + $0x14] sm:$0xf]
      %v659 = vld [vmem:[%s591 + $0x18] sm:$0xf]
      %v660 = vld [vmem:[%s591 + $0x1c] sm:$0xf]
      %v661 = vld [vmem:[%s591 + $0x20] sm:$0xf]
      %v662 = vld [vmem:[%s591 + $0x24] sm:$0xf]
      %v663 = vld [vmem:[%s591 + $0x28] sm:$0xf]
      %v664 = vld [vmem:[%s591 + $0x2c] sm:$0xf]
      %v665 = vld [vmem:[%s591 + $0x30] sm:$0xf]
      %v666 = vld [vmem:[%s591 + $0x34] sm:$0xf]
      %v667 = vld [vmem:[%s591 + $0x38] sm:$0xf]
      %v668 = vld [vmem:[%s591 + $0x3c] sm:$0xf]
      %v669 = vld [vmem:[%s603] sm:$0xff]
      %vm670 = vcmp.gt.f32.partialorder %v669, 0.0
      %v671 = vld [vmem:[%s10] sm:$0x1]
      %v672 = vld [vmem:[%s6] sm:$0xff]
      %v673 = vld [vmem:[%s6 + $0x8] sm:$0xff]
      %v674 = vld [vmem:[%s6 + $0x10] sm:$0xff]
      %v675 = vld [vmem:[%s6 + $0x18] sm:$0xff]
      %v676 = vld [vmem:[%s6 + $0x20] sm:$0xff]
      %v677 = vld [vmem:[%s6 + $0x28] sm:$0xff]
      %v678 = vld [vmem:[%s6 + $0x30] sm:$0xff]
      %v679 = vld [vmem:[%s6 + $0x38] sm:$0xff]
      %v680 = vld [vmem:[%s6 + $0x40] sm:$0xff]
      %v681 = vld [vmem:[%s6 + $0x48] sm:$0xff]
      %v682 = vld [vmem:[%s6 + $0x50] sm:$0xff]
      %v683 = vld [vmem:[%s6 + $0x58] sm:$0xff]
      %v684 = vld [vmem:[%s6 + $0x60] sm:$0xff]
      %v685 = vld [vmem:[%s6 + $0x68] sm:$0xff]
      %v686 = vld [vmem:[%s6 + $0x70] sm:$0xff]
      %v687 = vld [vmem:[%s6 + $0x78] sm:$0xff]
      %v688 = vld [vmem:[%s6 + $0x80] sm:$0xff]
      %v689 = vld [vmem:[%s6 + $0x88] sm:$0xff]
      %v690 = vld [vmem:[%s6 + $0x90] sm:$0xff]
      %v691 = vld [vmem:[%s6 + $0x98] sm:$0xff]
      %v692 = vld [vmem:[%s6 + $0xa0] sm:$0xff]
      %v693 = vld [vmem:[%s6 + $0xa8] sm:$0xff]
      %v694 = vld [vmem:[%s6 + $0xb0] sm:$0xff]
      %v695 = vld [vmem:[%s6 + $0xb8] sm:$0xff]
      %v696 = vld [vmem:[%s6 + $0xc0] sm:$0xff]
      %v697 = vld [vmem:[%s6 + $0xc8] sm:$0xff]
      %v698 = vld [vmem:[%s6 + $0xd0] sm:$0xff]
      %v699 = vld [vmem:[%s6 + $0xd8] sm:$0xff]
      %v700 = vld [vmem:[%s6 + $0xe0] sm:$0xff]
      %v701 = vld [vmem:[%s6 + $0xe8] sm:$0xff]
      %v702 = vld [vmem:[%s6 + $0xf0] sm:$0xff]
      %v703 = vld [vmem:[%s6 + $0xf8] sm:$0xff]
      %v704 = vld [vmem:[%s6 + $0x100] sm:$0xff]
      %v705 = vld [vmem:[%s6 + $0x108] sm:$0xff]
      %v706 = vld [vmem:[%s6 + $0x110] sm:$0xff]
      %v707 = vld [vmem:[%s6 + $0x118] sm:$0xff]
      %v708 = vld [vmem:[%s6 + $0x120] sm:$0xff]
      %v709 = vld [vmem:[%s6 + $0x128] sm:$0xff]
      %v710 = vld [vmem:[%s6 + $0x130] sm:$0xff]
      %v711 = vld [vmem:[%s6 + $0x138] sm:$0xff]
      %v712 = vld [vmem:[%s6 + $0x140] sm:$0xff]
      %v713 = vld [vmem:[%s6 + $0x148] sm:$0xff]
      %v714 = vld [vmem:[%s6 + $0x150] sm:$0xff]
      %v715 = vld [vmem:[%s6 + $0x158] sm:$0xff]
      %v716 = vld [vmem:[%s6 + $0x160] sm:$0xff]
      %v717 = vld [vmem:[%s6 + $0x168] sm:$0xff]
      %v718 = vld [vmem:[%s6 + $0x170] sm:$0xff]
      %v719 = vld [vmem:[%s6 + $0x178] sm:$0xff]
      %v720 = vld [vmem:[%s6 + $0x180] sm:$0xff]
      %v721 = vld [vmem:[%s6 + $0x188] sm:$0xff]
      %v722 = vld [vmem:[%s6 + $0x190] sm:$0xff]
      %v723 = vld [vmem:[%s6 + $0x198] sm:$0xff]
      %v724 = vld [vmem:[%s6 + $0x1a0] sm:$0xff]
      %v725 = vld [vmem:[%s6 + $0x1a8] sm:$0xff]
      %v726 = vld [vmem:[%s6 + $0x1b0] sm:$0xff]
      %v727 = vld [vmem:[%s6 + $0x1b8] sm:$0xff]
      %v728 = vld [vmem:[%s6 + $0x1c0] sm:$0xff]
      %v729 = vld [vmem:[%s6 + $0x1c8] sm:$0xff]
      %v730 = vld [vmem:[%s6 + $0x1d0] sm:$0xff]
      %v731 = vld [vmem:[%s6 + $0x1d8] sm:$0xff]
      %v732 = vld [vmem:[%s6 + $0x1e0] sm:$0xff]
      %v733 = vld [vmem:[%s6 + $0x1e8] sm:$0xff]
      %v734 = vld [vmem:[%s6 + $0x1f0] sm:$0xff]
      %v735 = vld [vmem:[%s6 + $0x1f8] sm:$0xff]
      %v736 = vld [vmem:[%s7] sm:$0xff]
      %v737 = vld [vmem:[%s7 + $0x8] sm:$0xff]
      %v738 = vld [vmem:[%s7 + $0x10] sm:$0xff]
      %v739 = vld [vmem:[%s7 + $0x18] sm:$0xff]
      %v740 = vld [vmem:[%s7 + $0x20] sm:$0xff]
      %v741 = vld [vmem:[%s7 + $0x28] sm:$0xff]
      %v742 = vld [vmem:[%s7 + $0x30] sm:$0xff]
      %v743 = vld [vmem:[%s7 + $0x38] sm:$0xff]
      %v744 = vld [vmem:[%s7 + $0x40] sm:$0xff]
      %v745 = vld [vmem:[%s7 + $0x48] sm:$0xff]
      %v746 = vld [vmem:[%s7 + $0x50] sm:$0xff]
      %v747 = vld [vmem:[%s7 + $0x58] sm:$0xff]
      %v748 = vld [vmem:[%s7 + $0x60] sm:$0xff]
      %v749 = vld [vmem:[%s7 + $0x68] sm:$0xff]
      %v750 = vld [vmem:[%s7 + $0x70] sm:$0xff]
      %v751 = vld [vmem:[%s7 + $0x78] sm:$0xff]
      %v752 = vld [vmem:[%s7 + $0x80] sm:$0xff]
      %v753 = vld [vmem:[%s7 + $0x88] sm:$0xff]
      %v754 = vld [vmem:[%s7 + $0x90] sm:$0xff]
      %v755 = vld [vmem:[%s7 + $0x98] sm:$0xff]
      %v756 = vld [vmem:[%s7 + $0xa0] sm:$0xff]
      %v757 = vld [vmem:[%s7 + $0xa8] sm:$0xff]
      %v758 = vld [vmem:[%s7 + $0xb0] sm:$0xff]
      %v759 = vld [vmem:[%s7 + $0xb8] sm:$0xff]
      %v760 = vld [vmem:[%s7 + $0xc0] sm:$0xff]
      %v761 = vld [vmem:[%s7 + $0xc8] sm:$0xff]
      %v762 = vld [vmem:[%s7 + $0xd0] sm:$0xff]
      %v763 = vld [vmem:[%s7 + $0xd8] sm:$0xff]
      %v764 = vld [vmem:[%s7 + $0xe0] sm:$0xff]
      %v765 = vld [vmem:[%s7 + $0xe8] sm:$0xff]
      %v766 = vld [vmem:[%s7 + $0xf0] sm:$0xff]
      %v767 = vld [vmem:[%s7 + $0xf8] sm:$0xff]
      %v768 = vld [vmem:[%s8] sm:$0xf]
      %v769 = vld [vmem:[%s8 + $0x4] sm:$0xf]
      %v770 = vld [vmem:[%s8 + $0x8] sm:$0xf]
      %v771 = vld [vmem:[%s8 + $0xc] sm:$0xf]
      %v772 = vld [vmem:[%s8 + $0x10] sm:$0xf]
      %v773 = vld [vmem:[%s8 + $0x14] sm:$0xf]
      %v774 = vld [vmem:[%s8 + $0x18] sm:$0xf]
      %v775 = vld [vmem:[%s8 + $0x1c] sm:$0xf]
      %v776 = vld [vmem:[%s8 + $0x20] sm:$0xf]
      %v777 = vld [vmem:[%s8 + $0x24] sm:$0xf]
      %v778 = vld [vmem:[%s8 + $0x28] sm:$0xf]
      %v779 = vld [vmem:[%s8 + $0x2c] sm:$0xf]
      %v780 = vld [vmem:[%s8 + $0x30] sm:$0xf]
      %v781 = vld [vmem:[%s8 + $0x34] sm:$0xf]
      %v782 = vld [vmem:[%s8 + $0x38] sm:$0xf]
      %v783 = vld [vmem:[%s8 + $0x3c] sm:$0xf]
      %v784 = vld [vmem:[%s9] sm:$0x7]
      %v785 = vld [vmem:[#allocation2] sm:$0xff]
      %786 = vmatprep.subr.mxu0 %v673
      %787 = vmatpush1.msra.mxu0 %v672
      %788 = vmatprep.subr.mxu0 %v677
      %789 = vmatpush1.msra.mxu0 %v676
      %790 = vmatprep.subr.mxu0 %v681
      %791 = vmatpush1.msra.mxu0 %v680
      %792 = vmatprep.subr.mxu0 %v685
      %793 = vmatpush1.msra.mxu0 %v684
      %794 = vmatprep.subr.mxu0 %v689
      %795 = vmatpush1.msra.mxu0 %v688
      %796 = vmatprep.subr.mxu0 %v693
      %797 = vmatpush1.msra.mxu0 %v692
      %798 = vmatprep.subr.mxu0 %v697
      %799 = vmatpush1.msra.mxu0 %v696
      %800 = vmatprep.subr.mxu0 %v701
      %801 = vmatpush1.msra.mxu0 %v700
      %802 = vmatprep.subr.mxu0 %v705
      %803 = vmatpush1.msra.mxu0 %v704
      %804 = vmatprep.subr.mxu0 %v709
      %805 = vmatpush1.msra.mxu0 %v708
      %806 = vmatprep.subr.mxu0 %v713
      %807 = vmatpush1.msra.mxu0 %v712
      %808 = vmatprep.subr.mxu0 %v717
      %809 = vmatpush1.msra.mxu0 %v716
      %810 = vmatprep.subr.mxu0 %v721
      %811 = vmatpush1.msra.mxu0 %v720
      %812 = vmatprep.subr.mxu0 %v725
      %813 = vmatpush1.msra.mxu0 %v724
      %814 = vmatprep.subr.mxu0 %v729
      %815 = vmatpush1.msra.mxu0 %v728
      %816 = vmatprep.subr.mxu0 %v733
      %817 = vmatpush1.msra.mxu0 %v732
      %818 = vmatprep.subr.mxu0 0.0
      %819 = vmatpush1.msra.mxu0 0.0
      %820 = vmatprep.subr.mxu0 0.0
      %821 = vmatpush1.msra.mxu0 0.0
      %822 = vmatprep.subr.mxu0 0.0
      %823 = vmatpush1.msra.mxu0 0.0
      %824 = vmatprep.subr.mxu0 0.0
      %825 = vmatpush1.msra.mxu0 0.0
      %826 = vmatprep.subr.mxu0 0.0
      %827 = vmatpush1.msra.mxu0 0.0
      %828 = vmatprep.subr.mxu0 0.0
      %829 = vmatpush1.msra.mxu0 0.0
      %830 = vmatprep.subr.mxu0 0.0
      %831 = vmatpush1.msra.mxu0 0.0
      %832 = vmatprep.subr.mxu0 0.0
      %833 = vmatpush1.msra.mxu0 0.0
      %834 = vmatprep.subr.mxu0 0.0
      %835 = vmatpush1.msra.mxu0 0.0
      %836 = vmatprep.subr.mxu0 0.0
      %837 = vmatpush1.msra.mxu0 0.0
      %838 = vmatprep.subr.mxu0 0.0
      %839 = vmatpush1.msra.mxu0 0.0
      %840 = vmatprep.subr.mxu0 0.0
      %841 = vmatpush1.msra.mxu0 0.0
      %842 = vmatprep.subr.mxu0 0.0
      %843 = vmatpush1.msra.mxu0 0.0
      %844 = vmatprep.subr.mxu0 0.0
      %845 = vmatpush1.msra.mxu0 0.0
      %846 = vmatprep.subr.mxu0 0.0
      %847 = vmatpush1.msra.mxu0 0.0
      %848 = vmatprep.subr.mxu0 0.0
      %849 = vmatpush1.msra.mxu0 0.0
      %850 = vmatprep.mubr.f32.mxu0 0.0
      %851 = vmatmul.mubr.f32.gmra.mrb[0].mxu0 %v785
      %v852 = vpop.f32.mrb[0].mxu0
      %v853 = vadd.f32 0.0, %v852
      %v854 = vpop.f32.mrb[0].mxu0
      %v855 = vadd.f32 0.0, %v854
      %856 = vdwg.mxu0
      %857 = vmatprep.subr.mxu0 %v675
      %858 = vmatpush1.msra.mxu0 %v674
      %859 = vmatprep.subr.mxu0 %v679
      %860 = vmatpush1.msra.mxu0 %v678
      %861 = vmatprep.subr.mxu0 %v683
      %862 = vmatpush1.msra.mxu0 %v682
      %863 = vmatprep.subr.mxu0 %v687
      %864 = vmatpush1.msra.mxu0 %v686
      %865 = vmatprep.subr.mxu0 %v691
      %866 = vmatpush1.msra.mxu0 %v690
      %867 = vmatprep.subr.mxu0 %v695
      %868 = vmatpush1.msra.mxu0 %v694
      %869 = vmatprep.subr.mxu0 %v699
      %870 = vmatpush1.msra.mxu0 %v698
      %871 = vmatprep.subr.mxu0 %v703
      %872 = vmatpush1.msra.mxu0 %v702
      %873 = vmatprep.subr.mxu0 %v707
      %874 = vmatpush1.msra.mxu0 %v706
      %875 = vmatprep.subr.mxu0 %v711
      %876 = vmatpush1.msra.mxu0 %v710
      %877 = vmatprep.subr.mxu0 %v715
      %878 = vmatpush1.msra.mxu0 %v714
      %879 = vmatprep.subr.mxu0 %v719
      %880 = vmatpush1.msra.mxu0 %v718
      %881 = vmatprep.subr.mxu0 %v723
      %882 = vmatpush1.msra.mxu0 %v722
      %883 = vmatprep.subr.mxu0 %v727
      %884 = vmatpush1.msra.mxu0 %v726
      %885 = vmatprep.subr.mxu0 %v731
      %886 = vmatpush1.msra.mxu0 %v730
      %887 = vmatprep.subr.mxu0 %v735
      %888 = vmatpush1.msra.mxu0 %v734
      %889 = vmatprep.subr.mxu0 0.0
      %890 = vmatpush1.msra.mxu0 0.0
      %891 = vmatprep.subr.mxu0 0.0
      %892 = vmatpush1.msra.mxu0 0.0
      %893 = vmatprep.subr.mxu0 0.0
      %894 = vmatpush1.msra.mxu0 0.0
      %895 = vmatprep.subr.mxu0 0.0
      %896 = vmatpush1.msra.mxu0 0.0
      %897 = vmatprep.subr.mxu0 0.0
      %898 = vmatpush1.msra.mxu0 0.0
      %899 = vmatprep.subr.mxu0 0.0
      %900 = vmatpush1.msra.mxu0 0.0
      %901 = vmatprep.subr.mxu0 0.0
      %902 = vmatpush1.msra.mxu0 0.0
      %903 = vmatprep.subr.mxu0 0.0
      %904 = vmatpush1.msra.mxu0 0.0
      %905 = vmatprep.subr.mxu0 0.0
      %906 = vmatpush1.msra.mxu0 0.0
      %907 = vmatprep.subr.mxu0 0.0
      %908 = vmatpush1.msra.mxu0 0.0
      %909 = vmatprep.subr.mxu0 0.0
      %910 = vmatpush1.msra.mxu0 0.0
      %911 = vmatprep.subr.mxu0 0.0
      %912 = vmatpush1.msra.mxu0 0.0
      %913 = vmatprep.subr.mxu0 0.0
      %914 = vmatpush1.msra.mxu0 0.0
      %915 = vmatprep.subr.mxu0 0.0
      %916 = vmatpush1.msra.mxu0 0.0
      %917 = vmatprep.subr.mxu0 0.0
      %918 = vmatpush1.msra.mxu0 0.0
      %919 = vmatprep.subr.mxu0 0.0
      %920 = vmatpush1.msra.mxu0 0.0
      %921 = vmatprep.mubr.f32.mxu0 0.0
      %922 = vmatmul.mubr.f32.gmra.mrb[0].mxu0 %v785
      %v923 = vpop.f32.mrb[0].mxu0
      %v924 = vadd.f32 0.0, %v923
      %v925 = vpop.f32.mrb[0].mxu0
      %v926 = vadd.f32 0.0, %v925
      %927 = vdwg.mxu0
      %v929 = vlaneseq
      %v930 = vshrl.u32 %v929, 7
      %v931 = vsub.s32 0, %v930
      %v932 = vrot.slane %v784, %v931
      %v933 = vlaneseq
      %v934 = vshrl.u32 %v933, 7
      %v935 = vsub.s32 1, %v934
      %v936 = vrot.slane %v784, %v935
      %v937 = vlaneseq
      %v938 = vshrl.u32 %v937, 7
      %v939 = vsub.s32 2, %v938
      %v940 = vrot.slane %v784, %v939
      %v944 = vadd.f32 %v855, %v932
      %v945 = vadd.f32 %v924, %v936
      %v946 = vadd.f32 %v926, %v940
      %v948 = vcombine.high %v853, %v853
      %v950 = vunpack.c.l.s4 1966171168
      %v951 = vunpack.c.0.s8 %v950
      %v952 = vlaneseq
      %v953 = vshrl.u32 %v952, 7
      %v954 = vsub.s32 %v951, %v953
      %v955 = vrot.slane %v853, %v954
      %v957 = vunpack.c.l.s4 1966171168
      %v958 = vunpack.c.0.s8 %v957
      %v959 = vlaneseq
      %v960 = vshrl.u32 %v959, 7
      %v961 = vsub.s32 %v958, %v960
      %v962 = vrot.slane %v948, %v961
      %v963 = vcombine.high %v955, %v955
      %v964 = vcombine.high %v962, %v962
      %v966 = vunpack.c.l.s4 1966171168
      %v967 = vunpack.c.0.s8 %v966
      %v968 = vlaneseq
      %v969 = vshrl.u32 %v968, 7
      %v970 = vsub.s32 %v967, %v969
      %v971 = vrot.slane %v955, %v970
      %v973 = vunpack.c.l.s4 1966171168
      %v974 = vunpack.c.0.s8 %v973
      %v975 = vlaneseq
      %v976 = vshrl.u32 %v975, 7
      %v977 = vsub.s32 %v974, %v976
      %v978 = vrot.slane %v962, %v977
      %v980 = vunpack.c.l.s4 1966171168
      %v981 = vunpack.c.0.s8 %v980
      %v982 = vlaneseq
      %v983 = vshrl.u32 %v982, 7
      %v984 = vsub.s32 %v981, %v983
      %v985 = vrot.slane %v963, %v984
      %v987 = vunpack.c.l.s4 1966171168
      %v988 = vunpack.c.0.s8 %v987
      %v989 = vlaneseq
      %v990 = vshrl.u32 %v989, 7
      %v991 = vsub.s32 %v988, %v990
      %v992 = vrot.slane %v964, %v991
      %v993 = vcombine.high %v971, %v971
      %v994 = vcombine.high %v978, %v978
      %v995 = vcombine.high %v985, %v985
      %v996 = vcombine.high %v992, %v992
      %v997 = vunpack.c.l.bf16 %v637
      %v998 = vunpack.c.l.bf16 %v638
      %v999 = vunpack.c.l.bf16 %v639
      %v1000 = vunpack.c.l.bf16 %v640
      %v1001 = vunpack.c.l.bf16 %v641
      %v1002 = vunpack.c.l.bf16 %v642
      %v1003 = vunpack.c.l.bf16 %v643
      %v1004 = vunpack.c.l.bf16 %v644
      %v1005 = vunpack.c.l.bf16 %v645
      %v1006 = vunpack.c.l.bf16 %v646
      %v1007 = vunpack.c.l.bf16 %v647
      %v1008 = vunpack.c.l.bf16 %v648
      %v1009 = vunpack.c.l.bf16 %v649
      %v1010 = vunpack.c.l.bf16 %v650
      %v1011 = vunpack.c.l.bf16 %v651
      %v1012 = vunpack.c.l.bf16 %v652
      %v1013 = vlaneseq
      %v1014 = vshrl.u32 %v1013, 7
      %v1015 = vsub.s32 0, %v1014
      %v1016 = vrot.slane %v971, %v1015
      %v1017 = vlaneseq
      %v1018 = vshrl.u32 %v1017, 7
      %v1019 = vsub.s32 0, %v1018
      %v1020 = vrot.slane %v985, %v1019
      %v1021 = vlaneseq
      %v1022 = vshrl.u32 %v1021, 7
      %v1023 = vsub.s32 0, %v1022
      %v1024 = vrot.slane %v993, %v1023
      %v1025 = vlaneseq
      %v1026 = vshrl.u32 %v1025, 7
      %v1027 = vsub.s32 0, %v1026
      %v1028 = vrot.slane %v995, %v1027
      %v1029 = vlaneseq
      %v1030 = vshrl.u32 %v1029, 7
      %v1031 = vsub.s32 0, %v1030
      %v1032 = vrot.slane %v978, %v1031
      %v1033 = vlaneseq
      %v1034 = vshrl.u32 %v1033, 7
      %v1035 = vsub.s32 0, %v1034
      %v1036 = vrot.slane %v992, %v1035
      %v1037 = vlaneseq
      %v1038 = vshrl.u32 %v1037, 7
      %v1039 = vsub.s32 0, %v1038
      %v1040 = vrot.slane %v994, %v1039
      %v1041 = vlaneseq
      %v1042 = vshrl.u32 %v1041, 7
      %v1043 = vsub.s32 0, %v1042
      %v1044 = vrot.slane %v996, %v1043
      %v1053 = vadd.f32 %v1016, %v997
      %v1054 = vadd.f32 %v1016, %v998
      %v1055 = vadd.f32 %v1020, %v999
      %v1056 = vadd.f32 %v1020, %v1000
      %v1057 = vadd.f32 %v1024, %v1001
      %v1058 = vadd.f32 %v1024, %v1002
      %v1059 = vadd.f32 %v1028, %v1003
      %v1060 = vadd.f32 %v1028, %v1004
      %v1061 = vadd.f32 %v1032, %v1005
      %v1062 = vadd.f32 %v1032, %v1006
      %v1063 = vadd.f32 %v1036, %v1007
      %v1064 = vadd.f32 %v1036, %v1008
      %v1065 = vadd.f32 %v1040, %v1009
      %v1066 = vadd.f32 %v1040, %v1010
      %v1067 = vadd.f32 %v1044, %v1011
      %v1068 = vadd.f32 %v1044, %v1012
      %v1069 = vtanh.pop %v1053
      %v1070 = vtanh.pop %v1054
      %v1071 = vtanh.pop %v1055
      %v1072 = vtanh.pop %v1056
      %v1073 = vtanh.pop %v1057
      %v1074 = vtanh.pop %v1058
      %v1075 = vtanh.pop %v1059
      %v1076 = vtanh.pop %v1060
      %v1077 = vtanh.pop %v1061
      %v1078 = vtanh.pop %v1062
      %v1079 = vtanh.pop %v1063
      %v1080 = vtanh.pop %v1064
      %v1081 = vtanh.pop %v1065
      %v1082 = vtanh.pop %v1066
      %v1083 = vtanh.pop %v1067
      %v1084 = vtanh.pop %v1068
      %v1086 = vlaneseq
      %v1087 = vshrl.u32 %v1086, 7
      %v1088 = vsub.s32 0, %v1087
      %v1089 = vrot.slane %v671, %v1088
      %v1091 = vmul.f32 %v1069, %v1089
      %v1092 = vmul.f32 %v1070, %v1089
      %v1093 = vmul.f32 %v1071, %v1089
      %v1094 = vmul.f32 %v1072, %v1089
      %v1095 = vmul.f32 %v1073, %v1089
      %v1096 = vmul.f32 %v1074, %v1089
      %v1097 = vmul.f32 %v1075, %v1089
      %v1098 = vmul.f32 %v1076, %v1089
      %v1099 = vmul.f32 %v1077, %v1089
      %v1100 = vmul.f32 %v1078, %v1089
      %v1101 = vmul.f32 %v1079, %v1089
      %v1102 = vmul.f32 %v1080, %v1089
      %v1103 = vmul.f32 %v1081, %v1089
      %v1104 = vmul.f32 %v1082, %v1089
      %v1105 = vmul.f32 %v1083, %v1089
      %v1106 = vmul.f32 %v1084, %v1089
      %1107 = vadd.xlane.f32.xlu0 %v1091
      %v1108 = vpop.xlane.xlu0 %1107
      %1109 = vadd.xlane.f32.xlu0 %v1092
      %v1110 = vpop.xlane.xlu0 %1109
      %1111 = vadd.xlane.f32.xlu0 %v1093
      %v1112 = vpop.xlane.xlu0 %1111
      %1113 = vadd.xlane.f32.xlu0 %v1094
      %v1114 = vpop.xlane.xlu0 %1113
      %1115 = vadd.xlane.f32.xlu0 %v1095
      %v1116 = vpop.xlane.xlu0 %1115
      %1117 = vadd.xlane.f32.xlu0 %v1096
      %v1118 = vpop.xlane.xlu0 %1117
      %1119 = vadd.xlane.f32.xlu0 %v1097
      %v1120 = vpop.xlane.xlu0 %1119
      %1121 = vadd.xlane.f32.xlu0 %v1098
      %v1122 = vpop.xlane.xlu0 %1121
      %1123 = vadd.xlane.f32.xlu0 %v1099
      %v1124 = vpop.xlane.xlu0 %1123
      %1125 = vadd.xlane.f32.xlu0 %v1100
      %v1126 = vpop.xlane.xlu0 %1125
      %1127 = vadd.xlane.f32.xlu0 %v1101
      %v1128 = vpop.xlane.xlu0 %1127
      %1129 = vadd.xlane.f32.xlu0 %v1102
      %v1130 = vpop.xlane.xlu0 %1129
      %1131 = vadd.xlane.f32.xlu0 %v1103
      %v1132 = vpop.xlane.xlu0 %1131
      %1133 = vadd.xlane.f32.xlu0 %v1104
      %v1134 = vpop.xlane.xlu0 %1133
      %1135 = vadd.xlane.f32.xlu0 %v1105
      %v1136 = vpop.xlane.xlu0 %1135
      %1137 = vadd.xlane.f32.xlu0 %v1106
      %v1138 = vpop.xlane.xlu0 %1137
      %v1155 = vlaneseq
      %v1156 = vand.u32 %v1155, 127
      %v1157 = vlaneseq
      %v1158 = vshrl.u32 %v1157, 7
      %v1159 = vsub.s32 %v1156, %v1158
      %v1160 = vrot.slane %v1108, %v1159
      %v1161 = vadd.s32 %v1156, 4294967288
      %v1162 = vlaneseq
      %v1163 = vshrl.u32 %v1162, 7
      %v1164 = vsub.s32 %v1161, %v1163
      %v1165 = vrot.slane %v1110, %v1164
      %vm1166 = vcmask 130112
      %v1167 = vsel %vm1166, %v1165, %v1160
      %v1168 = vlaneseq
      %v1169 = vshrl.u32 %v1168, 7
      %v1170 = vsub.s32 %v1156, %v1169
      %v1171 = vrot.slane %v1112, %v1170
      %v1172 = vlaneseq
      %v1173 = vshrl.u32 %v1172, 7
      %v1174 = vsub.s32 %v1161, %v1173
      %v1175 = vrot.slane %v1114, %v1174
      %v1176 = vsel %vm1166, %v1175, %v1171
      %v1177 = vlaneseq
      %v1178 = vshrl.u32 %v1177, 7
      %v1179 = vsub.s32 %v1156, %v1178
      %v1180 = vrot.slane %v1116, %v1179
      %v1181 = vlaneseq
      %v1182 = vshrl.u32 %v1181, 7
      %v1183 = vsub.s32 %v1161, %v1182
      %v1184 = vrot.slane %v1118, %v1183
      %v1185 = vsel %vm1166, %v1184, %v1180
      %v1186 = vlaneseq
      %v1187 = vshrl.u32 %v1186, 7
      %v1188 = vsub.s32 %v1156, %v1187
      %v1189 = vrot.slane %v1120, %v1188
      %v1190 = vlaneseq
      %v1191 = vshrl.u32 %v1190, 7
      %v1192 = vsub.s32 %v1161, %v1191
      %v1193 = vrot.slane %v1122, %v1192
      %v1194 = vsel %vm1166, %v1193, %v1189
      %v1195 = vlaneseq
      %v1196 = vshrl.u32 %v1195, 7
      %v1197 = vsub.s32 %v1156, %v1196
      %v1198 = vrot.slane %v1124, %v1197
      %v1199 = vlaneseq
      %v1200 = vshrl.u32 %v1199, 7
      %v1201 = vsub.s32 %v1161, %v1200
      %v1202 = vrot.slane %v1126, %v1201
      %v1203 = vsel %vm1166, %v1202, %v1198
      %v1204 = vlaneseq
      %v1205 = vshrl.u32 %v1204, 7
      %v1206 = vsub.s32 %v1156, %v1205
      %v1207 = vrot.slane %v1128, %v1206
      %v1208 = vlaneseq
      %v1209 = vshrl.u32 %v1208, 7
      %v1210 = vsub.s32 %v1161, %v1209
      %v1211 = vrot.slane %v1130, %v1210
      %v1212 = vsel %vm1166, %v1211, %v1207
      %v1213 = vlaneseq
      %v1214 = vshrl.u32 %v1213, 7
      %v1215 = vsub.s32 %v1156, %v1214
      %v1216 = vrot.slane %v1132, %v1215
      %v1217 = vlaneseq
      %v1218 = vshrl.u32 %v1217, 7
      %v1219 = vsub.s32 %v1161, %v1218
      %v1220 = vrot.slane %v1134, %v1219
      %v1221 = vsel %vm1166, %v1220, %v1216
      %v1222 = vlaneseq
      %v1223 = vshrl.u32 %v1222, 7
      %v1224 = vsub.s32 %v1156, %v1223
      %v1225 = vrot.slane %v1136, %v1224
      %v1226 = vlaneseq
      %v1227 = vshrl.u32 %v1226, 7
      %v1228 = vsub.s32 %v1161, %v1227
      %v1229 = vrot.slane %v1138, %v1228
      %v1230 = vsel %vm1166, %v1229, %v1225
      %vm1231 = vcmask 1041409
      %v1232 = vsel %vm1231, %v1176, %v1167
      %vm1233 = vcmask 1042434
      %v1234 = vsel %vm1233, %v1185, %v1232
      %vm1235 = vcmask 1043459
      %v1236 = vsel %vm1235, %v1194, %v1234
      %vm1237 = vcmask 1044484
      %v1238 = vsel %vm1237, %v1203, %v1236
      %vm1239 = vcmask 1045509
      %v1240 = vsel %vm1239, %v1212, %v1238
      %vm1241 = vcmask 1046534
      %v1242 = vsel %vm1241, %v1221, %v1240
      %vm1243 = vcmask 1047559
      %v1244 = vsel %vm1243, %v1230, %v1242
      %v1246 = vsel %vm670, %v1244, -1e+30
      %vm1247 = vcmask 130048
      %v1248 = vsel %vm1247, %v1246, -inf
      %1249 = vmax.xlane.f32.xlu0 %v1248
      %v1250 = vpop.xlane.xlu0 %1249
      %v1251 = vsub.f32 %v1246, %v1250
      %v1252 = vmul.f32 %v1251, 1.442695
      %v1253 = vpow.pop %v1252
      %v1254 = vsel %vm1247, %v1253, 0.0
      %1255 = vadd.xlane.f32.xlu0 %v1254
      %v1256 = vpop.xlane.xlu0 %1255
      %v1257 = vrcp.pop %v1256
      %v1258 = vmul.f32 %v1253, %v1257
      %v1259 = vlaneseq
      %v1260 = vshrl.u32 %v1259, 7
      %v1261 = vsub.s32 0, %v1260
      %v1262 = vrot.slane %v1258, %v1261
      %1264 = vbcast.lane.b32.xlu0 %v1262, 256
      %v1265 = vpop.permute.xlu0 %1264
      %s1267 = sor.u32 256, 8
      %1268 = vbcast.lane.b32.xlu0 %v1262, %s1267
      %v1269 = vpop.permute.xlu0 %1268
      %v1270 = vlaneseq
      %v1271 = vshrl.u32 %v1270, 7
      %v1272 = vsub.s32 1, %v1271
      %v1273 = vrot.slane %v1258, %v1272
      %1275 = vbcast.lane.b32.xlu0 %v1273, 256
      %v1276 = vpop.permute.xlu0 %1275
      %s1278 = sor.u32 256, 8
      %1279 = vbcast.lane.b32.xlu0 %v1273, %s1278
      %v1280 = vpop.permute.xlu0 %1279
      %v1281 = vlaneseq
      %v1282 = vshrl.u32 %v1281, 7
      %v1283 = vsub.s32 2, %v1282
      %v1284 = vrot.slane %v1258, %v1283
      %1286 = vbcast.lane.b32.xlu0 %v1284, 256
      %v1287 = vpop.permute.xlu0 %1286
      %s1289 = sor.u32 256, 8
      %1290 = vbcast.lane.b32.xlu0 %v1284, %s1289
      %v1291 = vpop.permute.xlu0 %1290
      %v1292 = vlaneseq
      %v1293 = vshrl.u32 %v1292, 7
      %v1294 = vsub.s32 3, %v1293
      %v1295 = vrot.slane %v1258, %v1294
      %1297 = vbcast.lane.b32.xlu0 %v1295, 256
      %v1298 = vpop.permute.xlu0 %1297
      %s1300 = sor.u32 256, 8
      %1301 = vbcast.lane.b32.xlu0 %v1295, %s1300
      %v1302 = vpop.permute.xlu0 %1301
      %v1303 = vlaneseq
      %v1304 = vshrl.u32 %v1303, 7
      %v1305 = vsub.s32 4, %v1304
      %v1306 = vrot.slane %v1258, %v1305
      %1308 = vbcast.lane.b32.xlu0 %v1306, 256
      %v1309 = vpop.permute.xlu0 %1308
      %s1311 = sor.u32 256, 8
      %1312 = vbcast.lane.b32.xlu0 %v1306, %s1311
      %v1313 = vpop.permute.xlu0 %1312
      %v1314 = vlaneseq
      %v1315 = vshrl.u32 %v1314, 7
      %v1316 = vsub.s32 5, %v1315
      %v1317 = vrot.slane %v1258, %v1316
      %1319 = vbcast.lane.b32.xlu0 %v1317, 256
      %v1320 = vpop.permute.xlu0 %1319
      %s1322 = sor.u32 256, 8
      %1323 = vbcast.lane.b32.xlu0 %v1317, %s1322
      %v1324 = vpop.permute.xlu0 %1323
      %v1325 = vlaneseq
      %v1326 = vshrl.u32 %v1325, 7
      %v1327 = vsub.s32 6, %v1326
      %v1328 = vrot.slane %v1258, %v1327
      %1330 = vbcast.lane.b32.xlu0 %v1328, 256
      %v1331 = vpop.permute.xlu0 %1330
      %s1333 = sor.u32 256, 8
      %1334 = vbcast.lane.b32.xlu0 %v1328, %s1333
      %v1335 = vpop.permute.xlu0 %1334
      %v1336 = vlaneseq
      %v1337 = vshrl.u32 %v1336, 7
      %v1338 = vsub.s32 7, %v1337
      %v1339 = vrot.slane %v1258, %v1338
      %1341 = vbcast.lane.b32.xlu0 %v1339, 256
      %v1342 = vpop.permute.xlu0 %1341
      %s1344 = sor.u32 256, 8
      %1345 = vbcast.lane.b32.xlu0 %v1339, %s1344
      %v1346 = vpop.permute.xlu0 %1345
      %v1347 = vunpack.c.l.bf16 %v653
      %v1348 = vunpack.c.l.bf16 %v654
      %v1349 = vunpack.c.l.bf16 %v655
      %v1350 = vunpack.c.l.bf16 %v656
      %v1351 = vunpack.c.l.bf16 %v657
      %v1352 = vunpack.c.l.bf16 %v658
      %v1353 = vunpack.c.l.bf16 %v659
      %v1354 = vunpack.c.l.bf16 %v660
      %v1355 = vunpack.c.l.bf16 %v661
      %v1356 = vunpack.c.l.bf16 %v662
      %v1357 = vunpack.c.l.bf16 %v663
      %v1358 = vunpack.c.l.bf16 %v664
      %v1359 = vunpack.c.l.bf16 %v665
      %v1360 = vunpack.c.l.bf16 %v666
      %v1361 = vunpack.c.l.bf16 %v667
      %v1362 = vunpack.c.l.bf16 %v668
      %v1363 = vmul.f32 %v1265, %v1347
      %v1364 = vmul.f32 %v1269, %v1348
      %v1365 = vmul.f32 %v1276, %v1349
      %v1366 = vmul.f32 %v1280, %v1350
      %v1367 = vmul.f32 %v1287, %v1351
      %v1368 = vmul.f32 %v1291, %v1352
      %v1369 = vmul.f32 %v1298, %v1353
      %v1370 = vmul.f32 %v1302, %v1354
      %v1371 = vmul.f32 %v1309, %v1355
      %v1372 = vmul.f32 %v1313, %v1356
      %v1373 = vmul.f32 %v1320, %v1357
      %v1374 = vmul.f32 %v1324, %v1358
      %v1375 = vmul.f32 %v1331, %v1359
      %v1376 = vmul.f32 %v1335, %v1360
      %v1377 = vmul.f32 %v1342, %v1361
      %v1378 = vmul.f32 %v1346, %v1362
      %v1379 = vadd.f32 %v1363, %v1364
      %v1380 = vrot.slane %v1379, 4
      %v1381 = vadd.f32 %v1379, %v1380
      %v1382 = vrot.slane %v1381, 2
      %v1383 = vadd.f32 %v1381, %v1382
      %v1384 = vrot.slane %v1383, 1
      %v1385 = vadd.f32 %v1383, %v1384
      %v1386 = vadd.f32 %v1365, %v1366
      %v1387 = vrot.slane %v1386, 4
      %v1388 = vadd.f32 %v1386, %v1387
      %v1389 = vrot.slane %v1388, 2
      %v1390 = vadd.f32 %v1388, %v1389
      %v1391 = vrot.slane %v1390, 1
      %v1392 = vadd.f32 %v1390, %v1391
      %v1393 = vadd.f32 %v1367, %v1368
      %v1394 = vrot.slane %v1393, 4
      %v1395 = vadd.f32 %v1393, %v1394
      %v1396 = vrot.slane %v1395, 2
      %v1397 = vadd.f32 %v1395, %v1396
      %v1398 = vrot.slane %v1397, 1
      %v1399 = vadd.f32 %v1397, %v1398
      %v1400 = vadd.f32 %v1369, %v1370
      %v1401 = vrot.slane %v1400, 4
      %v1402 = vadd.f32 %v1400, %v1401
      %v1403 = vrot.slane %v1402, 2
      %v1404 = vadd.f32 %v1402, %v1403
      %v1405 = vrot.slane %v1404, 1
      %v1406 = vadd.f32 %v1404, %v1405
      %v1407 = vadd.f32 %v1371, %v1372
      %v1408 = vrot.slane %v1407, 4
      %v1409 = vadd.f32 %v1407, %v1408
      %v1410 = vrot.slane %v1409, 2
      %v1411 = vadd.f32 %v1409, %v1410
      %v1412 = vrot.slane %v1411, 1
      %v1413 = vadd.f32 %v1411, %v1412
      %v1414 = vadd.f32 %v1373, %v1374
      %v1415 = vrot.slane %v1414, 4
      %v1416 = vadd.f32 %v1414, %v1415
      %v1417 = vrot.slane %v1416, 2
      %v1418 = vadd.f32 %v1416, %v1417
      %v1419 = vrot.slane %v1418, 1
      %v1420 = vadd.f32 %v1418, %v1419
      %v1421 = vadd.f32 %v1375, %v1376
      %v1422 = vrot.slane %v1421, 4
      %v1423 = vadd.f32 %v1421, %v1422
      %v1424 = vrot.slane %v1423, 2
      %v1425 = vadd.f32 %v1423, %v1424
      %v1426 = vrot.slane %v1425, 1
      %v1427 = vadd.f32 %v1425, %v1426
      %v1428 = vadd.f32 %v1377, %v1378
      %v1429 = vrot.slane %v1428, 4
      %v1430 = vadd.f32 %v1428, %v1429
      %v1431 = vrot.slane %v1430, 2
      %v1432 = vadd.f32 %v1430, %v1431
      %v1433 = vrot.slane %v1432, 1
      %v1434 = vadd.f32 %v1432, %v1433
      %v1435 = vpack.c.bf16 %v1385, %v1385
      %v1436 = vpack.c.bf16 %v1392, %v1392
      %v1437 = vpack.c.bf16 %v1399, %v1399
      %v1438 = vpack.c.bf16 %v1406, %v1406
      %v1439 = vpack.c.bf16 %v1413, %v1413
      %v1440 = vpack.c.bf16 %v1420, %v1420
      %v1441 = vpack.c.bf16 %v1427, %v1427
      %v1442 = vpack.c.bf16 %v1434, %v1434
      %v1451 = vunpack.c.l.b16 %v1435
      %v1452 = vunpack.c.l.b16 %v1436
      %v1453 = vunpack.c.l.b16 %v1437
      %v1454 = vunpack.c.l.b16 %v1438
      %v1455 = vunpack.c.l.b16 %v1439
      %v1456 = vunpack.c.l.b16 %v1440
      %v1457 = vunpack.c.l.b16 %v1441
      %v1458 = vunpack.c.l.b16 %v1442
      %v1459 = vsel %vm1231, %v1452, %v1451
      %v1460 = vsel %vm1233, %v1453, %v1459
      %v1461 = vsel %vm1235, %v1454, %v1460
      %v1462 = vsel %vm1237, %v1455, %v1461
      %v1463 = vsel %vm1239, %v1456, %v1462
      %v1464 = vsel %vm1241, %v1457, %v1463
      %v1465 = vsel %vm1243, %v1458, %v1464
      %v1466 = vpack.c.b16 %v1465, %v1465
      %v1500 = vunpack.c.l.b16 %v736
      %v1501 = vunpack.c.h.b16 %v736
      %v1502 = vunpack.c.l.b16 %v737
      %v1503 = vunpack.c.h.b16 %v737
      %v1504 = vunpack.c.l.b16 %v738
      %v1505 = vunpack.c.h.b16 %v738
      %v1506 = vunpack.c.l.b16 %v739
      %v1507 = vunpack.c.h.b16 %v739
      %v1508 = vunpack.c.l.b16 %v740
      %v1509 = vunpack.c.h.b16 %v740
      %v1510 = vunpack.c.l.b16 %v741
      %v1511 = vunpack.c.h.b16 %v741
      %v1512 = vunpack.c.l.b16 %v742
      %v1513 = vunpack.c.h.b16 %v742
      %v1514 = vunpack.c.l.b16 %v743
      %v1515 = vunpack.c.h.b16 %v743
      %v1516 = vunpack.c.l.b16 %v744
      %v1517 = vunpack.c.h.b16 %v744
      %v1518 = vunpack.c.l.b16 %v745
      %v1519 = vunpack.c.h.b16 %v745
      %v1520 = vunpack.c.l.b16 %v746
      %v1521 = vunpack.c.h.b16 %v746
      %v1522 = vunpack.c.l.b16 %v747
      %v1523 = vunpack.c.h.b16 %v747
      %v1524 = vunpack.c.l.b16 %v748
      %v1525 = vunpack.c.h.b16 %v748
      %v1526 = vunpack.c.l.b16 %v749
      %v1527 = vunpack.c.h.b16 %v749
      %v1528 = vunpack.c.l.b16 %v750
      %v1529 = vunpack.c.h.b16 %v750
      %v1530 = vunpack.c.l.b16 %v751
      %v1531 = vunpack.c.h.b16 %v751
      %v1532 = vunpack.c.l.b16 %v752
      %v1533 = vunpack.c.h.b16 %v752
      %v1534 = vunpack.c.l.b16 %v753
      %v1535 = vunpack.c.h.b16 %v753
      %v1536 = vunpack.c.l.b16 %v754
      %v1537 = vunpack.c.h.b16 %v754
      %v1538 = vunpack.c.l.b16 %v755
      %v1539 = vunpack.c.h.b16 %v755
      %v1540 = vunpack.c.l.b16 %v756
      %v1541 = vunpack.c.h.b16 %v756
      %v1542 = vunpack.c.l.b16 %v757
      %v1543 = vunpack.c.h.b16 %v757
      %v1544 = vunpack.c.l.b16 %v758
      %v1545 = vunpack.c.h.b16 %v758
      %v1546 = vunpack.c.l.b16 %v759
      %v1547 = vunpack.c.h.b16 %v759
      %v1548 = vunpack.c.l.b16 %v760
      %v1549 = vunpack.c.h.b16 %v760
      %v1550 = vunpack.c.l.b16 %v761
      %v1551 = vunpack.c.h.b16 %v761
      %v1552 = vunpack.c.l.b16 %v762
      %v1553 = vunpack.c.h.b16 %v762
      %v1554 = vunpack.c.l.b16 %v763
      %v1555 = vunpack.c.h.b16 %v763
      %v1556 = vunpack.c.l.b16 %v764
      %v1557 = vunpack.c.h.b16 %v764
      %v1558 = vunpack.c.l.b16 %v765
      %v1559 = vunpack.c.h.b16 %v765
      %v1560 = vunpack.c.l.b16 %v766
      %v1561 = vunpack.c.h.b16 %v766
      %v1562 = vunpack.c.l.b16 %v767
      %v1563 = vunpack.c.h.b16 %v767
      %v1564 = vpack.c.b16 %v1504, %v1500
      %v1565 = vpack.c.b16 %v1505, %v1501
      %v1566 = vpack.c.b16 %v1506, %v1502
      %v1567 = vpack.c.b16 %v1507, %v1503
      %v1568 = vpack.c.b16 %v1512, %v1508
      %v1569 = vpack.c.b16 %v1513, %v1509
      %v1570 = vpack.c.b16 %v1514, %v1510
      %v1571 = vpack.c.b16 %v1515, %v1511
      %v1572 = vpack.c.b16 %v1520, %v1516
      %v1573 = vpack.c.b16 %v1521, %v1517
      %v1574 = vpack.c.b16 %v1522, %v1518
      %v1575 = vpack.c.b16 %v1523, %v1519
      %v1576 = vpack.c.b16 %v1528, %v1524
      %v1577 = vpack.c.b16 %v1529, %v1525
      %v1578 = vpack.c.b16 %v1530, %v1526
      %v1579 = vpack.c.b16 %v1531, %v1527
      %v1580 = vpack.c.b16 %v1536, %v1532
      %v1581 = vpack.c.b16 %v1537, %v1533
      %v1582 = vpack.c.b16 %v1538, %v1534
      %v1583 = vpack.c.b16 %v1539, %v1535
      %v1584 = vpack.c.b16 %v1544, %v1540
      %v1585 = vpack.c.b16 %v1545, %v1541
      %v1586 = vpack.c.b16 %v1546, %v1542
      %v1587 = vpack.c.b16 %v1547, %v1543
      %v1588 = vpack.c.b16 %v1552, %v1548
      %v1589 = vpack.c.b16 %v1553, %v1549
      %v1590 = vpack.c.b16 %v1554, %v1550
      %v1591 = vpack.c.b16 %v1555, %v1551
      %v1592 = vpack.c.b16 %v1560, %v1556
      %v1593 = vpack.c.b16 %v1561, %v1557
      %v1594 = vpack.c.b16 %v1562, %v1558
      %v1595 = vpack.c.b16 %v1563, %v1559
      %1628 = vmatprep.subr.bf16.mxu0 %v1565
      %1629 = vmatpush1.bf16.msra.mxu0 %v1564
      %1630 = vmatprep.subr.bf16.mxu0 %v1569
      %1631 = vmatpush1.bf16.msra.mxu0 %v1568
      %1632 = vmatprep.subr.bf16.mxu0 %v1573
      %1633 = vmatpush1.bf16.msra.mxu0 %v1572
      %1634 = vmatprep.subr.bf16.mxu0 %v1577
      %1635 = vmatpush1.bf16.msra.mxu0 %v1576
      %1636 = vmatprep.subr.bf16.mxu0 %v1581
      %1637 = vmatpush1.bf16.msra.mxu0 %v1580
      %1638 = vmatprep.subr.bf16.mxu0 %v1585
      %1639 = vmatpush1.bf16.msra.mxu0 %v1584
      %1640 = vmatprep.subr.bf16.mxu0 %v1589
      %1641 = vmatpush1.bf16.msra.mxu0 %v1588
      %1642 = vmatprep.subr.bf16.mxu0 %v1593
      %1643 = vmatpush1.bf16.msra.mxu0 %v1592
      %1644 = vmatprep.subr.bf16.mxu0 0
      %1645 = vmatpush1.bf16.msra.mxu0 0
      %1646 = vmatprep.subr.bf16.mxu0 0
      %1647 = vmatpush1.bf16.msra.mxu0 0
      %1648 = vmatprep.subr.bf16.mxu0 0
      %1649 = vmatpush1.bf16.msra.mxu0 0
      %1650 = vmatprep.subr.bf16.mxu0 0
      %1651 = vmatpush1.bf16.msra.mxu0 0
      %1652 = vmatprep.subr.bf16.mxu0 0
      %1653 = vmatpush1.bf16.msra.mxu0 0
      %1654 = vmatprep.subr.bf16.mxu0 0
      %1655 = vmatpush1.bf16.msra.mxu0 0
      %1656 = vmatprep.subr.bf16.mxu0 0
      %1657 = vmatpush1.bf16.msra.mxu0 0
      %1658 = vmatprep.subr.bf16.mxu0 0
      %1659 = vmatpush1.bf16.msra.mxu0 0
      %1660 = vmatprep.mubr.bf16.mxu0 0
      %1661 = vmatmul.mubr.bf16.gmra.mrb[0].mxu0 %v1466
      %v1662 = vpop.f32.mrb[0].mxu0
      %v1663 = vadd.f32 0.0, %v1662
      %v1664 = vpop.f32.mrb[0].mxu0
      %v1665 = vadd.f32 0.0, %v1664
      %v1666 = vpop.f32.mrb[0].mxu0
      %v1667 = vpop.f32.mrb[0].mxu0
      %1668 = vdwg.mxu0
      %1669 = vmatprep.subr.bf16.mxu0 %v1567
      %1670 = vmatpush1.bf16.msra.mxu0 %v1566
      %1671 = vmatprep.subr.bf16.mxu0 %v1571
      %1672 = vmatpush1.bf16.msra.mxu0 %v1570
      %1673 = vmatprep.subr.bf16.mxu0 %v1575
      %1674 = vmatpush1.bf16.msra.mxu0 %v1574
      %1675 = vmatprep.subr.bf16.mxu0 %v1579
      %1676 = vmatpush1.bf16.msra.mxu0 %v1578
      %1677 = vmatprep.subr.bf16.mxu0 %v1583
      %1678 = vmatpush1.bf16.msra.mxu0 %v1582
      %1679 = vmatprep.subr.bf16.mxu0 %v1587
      %1680 = vmatpush1.bf16.msra.mxu0 %v1586
      %1681 = vmatprep.subr.bf16.mxu0 %v1591
      %1682 = vmatpush1.bf16.msra.mxu0 %v1590
      %1683 = vmatprep.subr.bf16.mxu0 %v1595
      %1684 = vmatpush1.bf16.msra.mxu0 %v1594
      %1685 = vmatprep.subr.bf16.mxu0 0
      %1686 = vmatpush1.bf16.msra.mxu0 0
      %1687 = vmatprep.subr.bf16.mxu0 0
      %1688 = vmatpush1.bf16.msra.mxu0 0
      %1689 = vmatprep.subr.bf16.mxu0 0
      %1690 = vmatpush1.bf16.msra.mxu0 0
      %1691 = vmatprep.subr.bf16.mxu0 0
      %1692 = vmatpush1.bf16.msra.mxu0 0
      %1693 = vmatprep.subr.bf16.mxu0 0
      %1694 = vmatpush1.bf16.msra.mxu0 0
      %1695 = vmatprep.subr.bf16.mxu0 0
      %1696 = vmatpush1.bf16.msra.mxu0 0
      %1697 = vmatprep.subr.bf16.mxu0 0
      %1698 = vmatpush1.bf16.msra.mxu0 0
      %1699 = vmatprep.subr.bf16.mxu0 0
      %1700 = vmatpush1.bf16.msra.mxu0 0
      %1701 = vmatprep.mubr.bf16.mxu0 0
      %1702 = vmatmul.mubr.bf16.gmra.mrb[0].mxu0 %v1466
      %v1703 = vpop.f32.mrb[0].mxu0
      %v1704 = vadd.f32 0.0, %v1703
      %v1705 = vpop.f32.mrb[0].mxu0
      %v1706 = vadd.f32 0.0, %v1705
      %v1707 = vpop.f32.mrb[0].mxu0
      %v1708 = vpop.f32.mrb[0].mxu0
      %1709 = vdwg.mxu0
      %v1710 = vld [vmem:[%s575] sm:$0xff]
      %v1711 = vld [vmem:[%s575 + $0x8] sm:$0xf]
      %v1712 = vunpack.c.l.bf16 %v1710
      %v1713 = vunpack.c.h.bf16 %v1710
      %v1714 = vunpack.c.l.bf16 %v1711
      %v1715 = vadd.f32 %v1712, %v1663
      %v1716 = vadd.f32 %v1713, %v1665
      %v1717 = vadd.f32 %v1714, %v1704
      %v1718 = vadd.f32 %v1715, %v944
      %v1719 = vxor.u32 %v1718, 2147483648
      %v1720 = vmul.f32 %v1719, 1.442695
      %v1721 = vpow.pop %v1720
      %v1722 = vadd.f32 %v1721, 1.0
      %v1723 = vrcp.pop %v1722
      %v1724 = vmul.f32 1.0, %v1723
      %v1725 = vadd.f32 %v1716, %v945
      %v1726 = vxor.u32 %v1725, 2147483648
      %v1727 = vmul.f32 %v1726, 1.442695
      %v1728 = vpow.pop %v1727
      %v1729 = vadd.f32 %v1728, 1.0
      %v1730 = vrcp.pop %v1729
      %v1731 = vmul.f32 1.0, %v1730
      %v1732 = vmul.f32 %v1724, %v946
      %v1733 = vadd.f32 %v1717, %v1732
      %v1734 = vtanh.pop %v1733
      %v1735 = vsub.f32 1.0, %v1731
      %v1736 = vmul.f32 %v1735, %v1734
      %v1737 = vmul.f32 %v1731, %v785
      %v1738 = vadd.f32 %v1736, %v1737
      %s1739 = smul.u32 %s30, 4
      %p1740 = scmp.lt.s32.totalorder %s1739, 6
      %s1741 = scalar_select %p1740, 1, 0
      %v1742 = vstv %s1741
      %vm1743 = vcmp.eq.s32.totalorder %v1742, 1
      %v1744 = vsel %vm1743, %v1738, %v785
      %1745 = vst [vmem:[%s615] sm:$0xff] %v1744
      %v1746 = vld [vmem:[%s584] sm:$0xf]
      %v1747 = vunpack.c.l.bf16 %v1746
      %v1748 = vpack.c.bf16 %v1744, %v1744
      %v1765 = vunpack.c.l.b16 %v768
      %v1766 = vunpack.c.l.b16 %v769
      %v1767 = vunpack.c.l.b16 %v770
      %v1768 = vunpack.c.l.b16 %v771
      %v1769 = vunpack.c.l.b16 %v772
      %v1770 = vunpack.c.l.b16 %v773
      %v1771 = vunpack.c.l.b16 %v774
      %v1772 = vunpack.c.l.b16 %v775
      %v1773 = vunpack.c.l.b16 %v776
      %v1774 = vunpack.c.l.b16 %v777
      %v1775 = vunpack.c.l.b16 %v778
      %v1776 = vunpack.c.l.b16 %v779
      %v1777 = vunpack.c.l.b16 %v780
      %v1778 = vunpack.c.l.b16 %v781
      %v1779 = vunpack.c.l.b16 %v782
      %v1780 = vunpack.c.l.b16 %v783
      %v1781 = vpack.c.b16 %v1766, %v1765
      %v1782 = vpack.c.b16 %v1768, %v1767
      %v1783 = vpack.c.b16 %v1770, %v1769
      %v1784 = vpack.c.b16 %v1772, %v1771
      %v1785 = vpack.c.b16 %v1774, %v1773
      %v1786 = vpack.c.b16 %v1776, %v1775
      %v1787 = vpack.c.b16 %v1778, %v1777
      %v1788 = vpack.c.b16 %v1780, %v1779
      %1797 = vmatprep.subr.bf16.mxu0 0
      %1798 = vmatpush1.bf16.msra.mxu0 %v1781
      %1799 = vmatprep.subr.bf16.mxu0 0
      %1800 = vmatpush1.bf16.msra.mxu0 %v1782
      %1801 = vmatprep.subr.bf16.mxu0 0
      %1802 = vmatpush1.bf16.msra.mxu0 %v1783
      %1803 = vmatprep.subr.bf16.mxu0 0
      %1804 = vmatpush1.bf16.msra.mxu0 %v1784
      %1805 = vmatprep.subr.bf16.mxu0 0
      %1806 = vmatpush1.bf16.msra.mxu0 %v1785
      %1807 = vmatprep.subr.bf16.mxu0 0
      %1808 = vmatpush1.bf16.msra.mxu0 %v1786
      %1809 = vmatprep.subr.bf16.mxu0 0
      %1810 = vmatpush1.bf16.msra.mxu0 %v1787
      %1811 = vmatprep.subr.bf16.mxu0 0
      %1812 = vmatpush1.bf16.msra.mxu0 %v1788
      %1813 = vmatprep.subr.bf16.mxu0 0
      %1814 = vmatpush1.bf16.msra.mxu0 0
      %1815 = vmatprep.subr.bf16.mxu0 0
      %1816 = vmatpush1.bf16.msra.mxu0 0
      %1817 = vmatprep.subr.bf16.mxu0 0
      %1818 = vmatpush1.bf16.msra.mxu0 0
      %1819 = vmatprep.subr.bf16.mxu0 0
      %1820 = vmatpush1.bf16.msra.mxu0 0
      %1821 = vmatprep.subr.bf16.mxu0 0
      %1822 = vmatpush1.bf16.msra.mxu0 0
      %1823 = vmatprep.subr.bf16.mxu0 0
      %1824 = vmatpush1.bf16.msra.mxu0 0
      %1825 = vmatprep.subr.bf16.mxu0 0
      %1826 = vmatpush1.bf16.msra.mxu0 0
      %1827 = vmatprep.subr.bf16.mxu0 0
      %1828 = vmatpush1.bf16.msra.mxu0 0
      %1829 = vmatprep.mubr.bf16.mxu0 0
      %1830 = vmatmul.mubr.bf16.gmra.mrb[0].mxu0 %v1748
      %v1831 = vpop.f32.mrb[0].mxu0
      %v1832 = vadd.f32 0.0, %v1831
      %v1833 = vpop.f32.mrb[0].mxu0
      %v1834 = vpop.f32.mrb[0].mxu0
      %v1835 = vpop.f32.mrb[0].mxu0
      %1836 = vdwg.mxu0
      %v1837 = vadd.f32 %v1747, %v1832
      %v1838 = vadd.f32 %v1837, %v1706
      %1839 = vst [vmem:[%s624] sm:$0xff] %v1838
      %1840 = vmatprep.subr.mxu0 %v673
      %1841 = vmatpush1.msra.mxu0 %v672
      %1842 = vmatprep.subr.mxu0 %v677
      %1843 = vmatpush1.msra.mxu0 %v676
      %1844 = vmatprep.subr.mxu0 %v681
      %1845 = vmatpush1.msra.mxu0 %v680
      %1846 = vmatprep.subr.mxu0 %v685
      %1847 = vmatpush1.msra.mxu0 %v684
      %1848 = vmatprep.subr.mxu0 %v689
      %1849 = vmatpush1.msra.mxu0 %v688
      %1850 = vmatprep.subr.mxu0 %v693
      %1851 = vmatpush1.msra.mxu0 %v692
      %1852 = vmatprep.subr.mxu0 %v697
      %1853 = vmatpush1.msra.mxu0 %v696
      %1854 = vmatprep.subr.mxu0 %v701
      %1855 = vmatpush1.msra.mxu0 %v700
      %1856 = vmatprep.subr.mxu0 %v705
      %1857 = vmatpush1.msra.mxu0 %v704
      %1858 = vmatprep.subr.mxu0 %v709
      %1859 = vmatpush1.msra.mxu0 %v708
      %1860 = vmatprep.subr.mxu0 %v713
      %1861 = vmatpush1.msra.mxu0 %v712
      %1862 = vmatprep.subr.mxu0 %v717
      %1863 = vmatpush1.msra.mxu0 %v716
      %1864 = vmatprep.subr.mxu0 %v721
      %1865 = vmatpush1.msra.mxu0 %v720
      %1866 = vmatprep.subr.mxu0 %v725
      %1867 = vmatpush1.msra.mxu0 %v724
      %1868 = vmatprep.subr.mxu0 %v729
      %1869 = vmatpush1.msra.mxu0 %v728
      %1870 = vmatprep.subr.mxu0 %v733
      %1871 = vmatpush1.msra.mxu0 %v732
      %1872 = vmatprep.subr.mxu0 0.0
      %1873 = vmatpush1.msra.mxu0 0.0
      %1874 = vmatprep.subr.mxu0 0.0
      %1875 = vmatpush1.msra.mxu0 0.0
      %1876 = vmatprep.subr.mxu0 0.0
      %1877 = vmatpush1.msra.mxu0 0.0
      %1878 = vmatprep.subr.mxu0 0.0
      %1879 = vmatpush1.msra.mxu0 0.0
      %1880 = vmatprep.subr.mxu0 0.0
      %1881 = vmatpush1.msra.mxu0 0.0
      %1882 = vmatprep.subr.mxu0 0.0
      %1883 = vmatpush1.msra.mxu0 0.0
      %1884 = vmatprep.subr.mxu0 0.0
      %1885 = vmatpush1.msra.mxu0 0.0
      %1886 = vmatprep.subr.mxu0 0.0
      %1887 = vmatpush1.msra.mxu0 0.0
      %1888 = vmatprep.subr.mxu0 0.0
      %1889 = vmatpush1.msra.mxu0 0.0
      %1890 = vmatprep.subr.mxu0 0.0
      %1891 = vmatpush1.msra.mxu0 0.0
      %1892 = vmatprep.subr.mxu0 0.0
      %1893 = vmatpush1.msra.mxu0 0.0
      %1894 = vmatprep.subr.mxu0 0.0
      %1895 = vmatpush1.msra.mxu0 0.0
      %1896 = vmatprep.subr.mxu0 0.0
      %1897 = vmatpush1.msra.mxu0 0.0
      %1898 = vmatprep.subr.mxu0 0.0
      %1899 = vmatpush1.msra.mxu0 0.0
      %1900 = vmatprep.subr.mxu0 0.0
      %1901 = vmatpush1.msra.mxu0 0.0
      %1902 = vmatprep.subr.mxu0 0.0
      %1903 = vmatpush1.msra.mxu0 0.0
      %1904 = vmatprep.mubr.f32.mxu0 0.0
      %1905 = vmatmul.mubr.f32.gmra.mrb[0].mxu0 %v1744
      %v1906 = vpop.f32.mrb[0].mxu0
      %v1907 = vadd.f32 0.0, %v1906
      %v1908 = vpop.f32.mrb[0].mxu0
      %v1909 = vadd.f32 0.0, %v1908
      %1910 = vdwg.mxu0
      %1911 = vmatprep.subr.mxu0 %v675
      %1912 = vmatpush1.msra.mxu0 %v674
      %1913 = vmatprep.subr.mxu0 %v679
      %1914 = vmatpush1.msra.mxu0 %v678
      %1915 = vmatprep.subr.mxu0 %v683
      %1916 = vmatpush1.msra.mxu0 %v682
      %1917 = vmatprep.subr.mxu0 %v687
      %1918 = vmatpush1.msra.mxu0 %v686
      %1919 = vmatprep.subr.mxu0 %v691
      %1920 = vmatpush1.msra.mxu0 %v690
      %1921 = vmatprep.subr.mxu0 %v695
      %1922 = vmatpush1.msra.mxu0 %v694
      %1923 = vmatprep.subr.mxu0 %v699
      %1924 = vmatpush1.msra.mxu0 %v698
      %1925 = vmatprep.subr.mxu0 %v703
      %1926 = vmatpush1.msra.mxu0 %v702
      %1927 = vmatprep.subr.mxu0 %v707
      %1928 = vmatpush1.msra.mxu0 %v706
      %1929 = vmatprep.subr.mxu0 %v711
      %1930 = vmatpush1.msra.mxu0 %v710
      %1931 = vmatprep.subr.mxu0 %v715
      %1932 = vmatpush1.msra.mxu0 %v714
      %1933 = vmatprep.subr.mxu0 %v719
      %1934 = vmatpush1.msra.mxu0 %v718
      %1935 = vmatprep.subr.mxu0 %v723
      %1936 = vmatpush1.msra.mxu0 %v722
      %1937 = vmatprep.subr.mxu0 %v727
      %1938 = vmatpush1.msra.mxu0 %v726
      %1939 = vmatprep.subr.mxu0 %v731
      %1940 = vmatpush1.msra.mxu0 %v730
      %1941 = vmatprep.subr.mxu0 %v735
      %1942 = vmatpush1.msra.mxu0 %v734
      %1943 = vmatprep.subr.mxu0 0.0
      %1944 = vmatpush1.msra.mxu0 0.0
      %1945 = vmatprep.subr.mxu0 0.0
      %1946 = vmatpush1.msra.mxu0 0.0
      %1947 = vmatprep.subr.mxu0 0.0
      %1948 = vmatpush1.msra.mxu0 0.0
      %1949 = vmatprep.subr.mxu0 0.0
      %1950 = vmatpush1.msra.mxu0 0.0
      %1951 = vmatprep.subr.mxu0 0.0
      %1952 = vmatpush1.msra.mxu0 0.0
      %1953 = vmatprep.subr.mxu0 0.0
      %1954 = vmatpush1.msra.mxu0 0.0
      %1955 = vmatprep.subr.mxu0 0.0
      %1956 = vmatpush1.msra.mxu0 0.0
      %1957 = vmatprep.subr.mxu0 0.0
      %1958 = vmatpush1.msra.mxu0 0.0
      %1959 = vmatprep.subr.mxu0 0.0
      %1960 = vmatpush1.msra.mxu0 0.0
      %1961 = vmatprep.subr.mxu0 0.0
      %1962 = vmatpush1.msra.mxu0 0.0
      %1963 = vmatprep.subr.mxu0 0.0
      %1964 = vmatpush1.msra.mxu0 0.0
      %1965 = vmatprep.subr.mxu0 0.0
      %1966 = vmatpush1.msra.mxu0 0.0
      %1967 = vmatprep.subr.mxu0 0.0
      %1968 = vmatpush1.msra.mxu0 0.0
      %1969 = vmatprep.subr.mxu0 0.0
      %1970 = vmatpush1.msra.mxu0 0.0
      %1971 = vmatprep.subr.mxu0 0.0
      %1972 = vmatpush1.msra.mxu0 0.0
      %1973 = vmatprep.subr.mxu0 0.0
      %1974 = vmatpush1.msra.mxu0 0.0
      %1975 = vmatprep.mubr.f32.mxu0 0.0
      %1976 = vmatmul.mubr.f32.gmra.mrb[0].mxu0 %v1744
      %v1977 = vpop.f32.mrb[0].mxu0
      %v1978 = vadd.f32 0.0, %v1977
      %v1979 = vpop.f32.mrb[0].mxu0
      %v1980 = vadd.f32 0.0, %v1979
      %1981 = vdwg.mxu0
      %v1982 = vadd.f32 %v1909, %v932
      %v1983 = vadd.f32 %v1978, %v936
      %v1984 = vadd.f32 %v1980, %v940
      %v1986 = vcombine.high %v1907, %v1907
      %v1988 = vunpack.c.l.s4 1966171168
      %v1989 = vunpack.c.0.s8 %v1988
      %v1990 = vlaneseq
      %v1991 = vshrl.u32 %v1990, 7
      %v1992 = vsub.s32 %v1989, %v1991
      %v1993 = vrot.slane %v1907, %v1992
      %v1995 = vunpack.c.l.s4 1966171168
      %v1996 = vunpack.c.0.s8 %v1995
      %v1997 = vlaneseq
      %v1998 = vshrl.u32 %v1997, 7
      %v1999 = vsub.s32 %v1996, %v1998
      %v2000 = vrot.slane %v1986, %v1999
      %v2001 = vcombine.high %v1993, %v1993
      %v2002 = vcombine.high %v2000, %v2000
      %v2004 = vunpack.c.l.s4 1966171168
      %v2005 = vunpack.c.0.s8 %v2004
      %v2006 = vlaneseq
      %v2007 = vshrl.u32 %v2006, 7
      %v2008 = vsub.s32 %v2005, %v2007
      %v2009 = vrot.slane %v1993, %v2008
      %v2011 = vunpack.c.l.s4 1966171168
      %v2012 = vunpack.c.0.s8 %v2011
      %v2013 = vlaneseq
      %v2014 = vshrl.u32 %v2013, 7
      %v2015 = vsub.s32 %v2012, %v2014
      %v2016 = vrot.slane %v2000, %v2015
      %v2018 = vunpack.c.l.s4 1966171168
      %v2019 = vunpack.c.0.s8 %v2018
      %v2020 = vlaneseq
      %v2021 = vshrl.u32 %v2020, 7
      %v2022 = vsub.s32 %v2019, %v2021
      %v2023 = vrot.slane %v2001, %v2022
      %v2025 = vunpack.c.l.s4 1966171168
      %v2026 = vunpack.c.0.s8 %v2025
      %v2027 = vlaneseq
      %v2028 = vshrl.u32 %v2027, 7
      %v2029 = vsub.s32 %v2026, %v2028
      %v2030 = vrot.slane %v2002, %v2029
      %v2031 = vcombine.high %v2009, %v2009
      %v2032 = vcombine.high %v2016, %v2016
      %v2033 = vcombine.high %v2023, %v2023
      %v2034 = vcombine.high %v2030, %v2030
      %v2035 = vlaneseq
      %v2036 = vshrl.u32 %v2035, 7
      %v2037 = vsub.s32 0, %v2036
      %v2038 = vrot.slane %v2009, %v2037
      %v2039 = vlaneseq
      %v2040 = vshrl.u32 %v2039, 7
      %v2041 = vsub.s32 0, %v2040
      %v2042 = vrot.slane %v2023, %v2041
      %v2043 = vlaneseq
      %v2044 = vshrl.u32 %v2043, 7
      %v2045 = vsub.s32 0, %v2044
      %v2046 = vrot.slane %v2031, %v2045
      %v2047 = vlaneseq
      %v2048 = vshrl.u32 %v2047, 7
      %v2049 = vsub.s32 0, %v2048
      %v2050 = vrot.slane %v2033, %v2049
      %v2051 = vlaneseq
      %v2052 = vshrl.u32 %v2051, 7
      %v2053 = vsub.s32 0, %v2052
      %v2054 = vrot.slane %v2016, %v2053
      %v2055 = vlaneseq
      %v2056 = vshrl.u32 %v2055, 7
      %v2057 = vsub.s32 0, %v2056
      %v2058 = vrot.slane %v2030, %v2057
      %v2059 = vlaneseq
      %v2060 = vshrl.u32 %v2059, 7
      %v2061 = vsub.s32 0, %v2060
      %v2062 = vrot.slane %v2032, %v2061
      %v2063 = vlaneseq
      %v2064 = vshrl.u32 %v2063, 7
      %v2065 = vsub.s32 0, %v2064
      %v2066 = vrot.slane %v2034, %v2065
      %v2075 = vadd.f32 %v2038, %v997
      %v2076 = vadd.f32 %v2038, %v998
      %v2077 = vadd.f32 %v2042, %v999
      %v2078 = vadd.f32 %v2042, %v1000
      %v2079 = vadd.f32 %v2046, %v1001
      %v2080 = vadd.f32 %v2046, %v1002
      %v2081 = vadd.f32 %v2050, %v1003
      %v2082 = vadd.f32 %v2050, %v1004
      %v2083 = vadd.f32 %v2054, %v1005
      %v2084 = vadd.f32 %v2054, %v1006
      %v2085 = vadd.f32 %v2058, %v1007
      %v2086 = vadd.f32 %v2058, %v1008
      %v2087 = vadd.f32 %v2062, %v1009
      %v2088 = vadd.f32 %v2062, %v1010
      %v2089 = vadd.f32 %v2066, %v1011
      %v2090 = vadd.f32 %v2066, %v1012
      %v2091 = vtanh.pop %v2075
      %v2092 = vtanh.pop %v2076
      %v2093 = vtanh.pop %v2077
      %v2094 = vtanh.pop %v2078
      %v2095 = vtanh.pop %v2079
      %v2096 = vtanh.pop %v2080
      %v2097 = vtanh.pop %v2081
      %v2098 = vtanh.pop %v2082
      %v2099 = vtanh.pop %v2083
      %v2100 = vtanh.pop %v2084
      %v2101 = vtanh.pop %v2085
      %v2102 = vtanh.pop %v2086
      %v2103 = vtanh.pop %v2087
      %v2104 = vtanh.pop %v2088
      %v2105 = vtanh.pop %v2089
      %v2106 = vtanh.pop %v2090
      %v2107 = vmul.f32 %v2091, %v1089
      %v2108 = vmul.f32 %v2092, %v1089
      %v2109 = vmul.f32 %v2093, %v1089
      %v2110 = vmul.f32 %v2094, %v1089
      %v2111 = vmul.f32 %v2095, %v1089
      %v2112 = vmul.f32 %v2096, %v1089
      %v2113 = vmul.f32 %v2097, %v1089
      %v2114 = vmul.f32 %v2098, %v1089
      %v2115 = vmul.f32 %v2099, %v1089
      %v2116 = vmul.f32 %v2100, %v1089
      %v2117 = vmul.f32 %v2101, %v1089
      %v2118 = vmul.f32 %v2102, %v1089
      %v2119 = vmul.f32 %v2103, %v1089
      %v2120 = vmul.f32 %v2104, %v1089
      %v2121 = vmul.f32 %v2105, %v1089
      %v2122 = vmul.f32 %v2106, %v1089
      %2123 = vadd.xlane.f32.xlu0 %v2107
      %v2124 = vpop.xlane.xlu0 %2123
      %2125 = vadd.xlane.f32.xlu0 %v2108
      %v2126 = vpop.xlane.xlu0 %2125
      %2127 = vadd.xlane.f32.xlu0 %v2109
      %v2128 = vpop.xlane.xlu0 %2127
      %2129 = vadd.xlane.f32.xlu0 %v2110
      %v2130 = vpop.xlane.xlu0 %2129
      %2131 = vadd.xlane.f32.xlu0 %v2111
      %v2132 = vpop.xlane.xlu0 %2131
      %2133 = vadd.xlane.f32.xlu0 %v2112
      %v2134 = vpop.xlane.xlu0 %2133
      %2135 = vadd.xlane.f32.xlu0 %v2113
      %v2136 = vpop.xlane.xlu0 %2135
      %2137 = vadd.xlane.f32.xlu0 %v2114
      %v2138 = vpop.xlane.xlu0 %2137
      %2139 = vadd.xlane.f32.xlu0 %v2115
      %v2140 = vpop.xlane.xlu0 %2139
      %2141 = vadd.xlane.f32.xlu0 %v2116
      %v2142 = vpop.xlane.xlu0 %2141
      %2143 = vadd.xlane.f32.xlu0 %v2117
      %v2144 = vpop.xlane.xlu0 %2143
      %2145 = vadd.xlane.f32.xlu0 %v2118
      %v2146 = vpop.xlane.xlu0 %2145
      %2147 = vadd.xlane.f32.xlu0 %v2119
      %v2148 = vpop.xlane.xlu0 %2147
      %2149 = vadd.xlane.f32.xlu0 %v2120
      %v2150 = vpop.xlane.xlu0 %2149
      %2151 = vadd.xlane.f32.xlu0 %v2121
      %v2152 = vpop.xlane.xlu0 %2151
      %2153 = vadd.xlane.f32.xlu0 %v2122
      %v2154 = vpop.xlane.xlu0 %2153
      %v2171 = vlaneseq
      %v2172 = vshrl.u32 %v2171, 7
      %v2173 = vsub.s32 %v1156, %v2172
      %v2174 = vrot.slane %v2124, %v2173
      %v2175 = vlaneseq
      %v2176 = vshrl.u32 %v2175, 7
      %v2177 = vsub.s32 %v1161, %v2176
      %v2178 = vrot.slane %v2126, %v2177
      %v2179 = vsel %vm1166, %v2178, %v2174
      %v2180 = vlaneseq
      %v2181 = vshrl.u32 %v2180, 7
      %v2182 = vsub.s32 %v1156, %v2181
      %v2183 = vrot.slane %v2128, %v2182
      %v2184 = vlaneseq
      %v2185 = vshrl.u32 %v2184, 7
      %v2186 = vsub.s32 %v1161, %v2185
      %v2187 = vrot.slane %v2130, %v2186
      %v2188 = vsel %vm1166, %v2187, %v2183
      %v2189 = vlaneseq
      %v2190 = vshrl.u32 %v2189, 7
      %v2191 = vsub.s32 %v1156, %v2190
      %v2192 = vrot.slane %v2132, %v2191
      %v2193 = vlaneseq
      %v2194 = vshrl.u32 %v2193, 7
      %v2195 = vsub.s32 %v1161, %v2194
      %v2196 = vrot.slane %v2134, %v2195
      %v2197 = vsel %vm1166, %v2196, %v2192
      %v2198 = vlaneseq
      %v2199 = vshrl.u32 %v2198, 7
      %v2200 = vsub.s32 %v1156, %v2199
      %v2201 = vrot.slane %v2136, %v2200
      %v2202 = vlaneseq
      %v2203 = vshrl.u32 %v2202, 7
      %v2204 = vsub.s32 %v1161, %v2203
      %v2205 = vrot.slane %v2138, %v2204
      %v2206 = vsel %vm1166, %v2205, %v2201
      %v2207 = vlaneseq
      %v2208 = vshrl.u32 %v2207, 7
      %v2209 = vsub.s32 %v1156, %v2208
      %v2210 = vrot.slane %v2140, %v2209
      %v2211 = vlaneseq
      %v2212 = vshrl.u32 %v2211, 7
      %v2213 = vsub.s32 %v1161, %v2212
      %v2214 = vrot.slane %v2142, %v2213
      %v2215 = vsel %vm1166, %v2214, %v2210
      %v2216 = vlaneseq
      %v2217 = vshrl.u32 %v2216, 7
      %v2218 = vsub.s32 %v1156, %v2217
      %v2219 = vrot.slane %v2144, %v2218
      %v2220 = vlaneseq
      %v2221 = vshrl.u32 %v2220, 7
      %v2222 = vsub.s32 %v1161, %v2221
      %v2223 = vrot.slane %v2146, %v2222
      %v2224 = vsel %vm1166, %v2223, %v2219
      %v2225 = vlaneseq
      %v2226 = vshrl.u32 %v2225, 7
      %v2227 = vsub.s32 %v1156, %v2226
      %v2228 = vrot.slane %v2148, %v2227
      %v2229 = vlaneseq
      %v2230 = vshrl.u32 %v2229, 7
      %v2231 = vsub.s32 %v1161, %v2230
      %v2232 = vrot.slane %v2150, %v2231
      %v2233 = vsel %vm1166, %v2232, %v2228
      %v2234 = vlaneseq
      %v2235 = vshrl.u32 %v2234, 7
      %v2236 = vsub.s32 %v1156, %v2235
      %v2237 = vrot.slane %v2152, %v2236
      %v2238 = vlaneseq
      %v2239 = vshrl.u32 %v2238, 7
      %v2240 = vsub.s32 %v1161, %v2239
      %v2241 = vrot.slane %v2154, %v2240
      %v2242 = vsel %vm1166, %v2241, %v2237
      %v2243 = vsel %vm1231, %v2188, %v2179
      %v2244 = vsel %vm1233, %v2197, %v2243
      %v2245 = vsel %vm1235, %v2206, %v2244
      %v2246 = vsel %vm1237, %v2215, %v2245
      %v2247 = vsel %vm1239, %v2224, %v2246
      %v2248 = vsel %vm1241, %v2233, %v2247
      %v2249 = vsel %vm1243, %v2242, %v2248
      %v2251 = vsel %vm670, %v2249, -1e+30
      %v2252 = vsel %vm1247, %v2251, -inf
      %2253 = vmax.xlane.f32.xlu0 %v2252
      %v2254 = vpop.xlane.xlu0 %2253
      %v2255 = vsub.f32 %v2251, %v2254
      %v2256 = vmul.f32 %v2255, 1.442695
      %v2257 = vpow.pop %v2256
      %v2258 = vsel %vm1247, %v2257, 0.0
      %2259 = vadd.xlane.f32.xlu0 %v2258
      %v2260 = vpop.xlane.xlu0 %2259
      %v2261 = vrcp.pop %v2260
      %v2262 = vmul.f32 %v2257, %v2261
      %v2263 = vlaneseq
      %v2264 = vshrl.u32 %v2263, 7
      %v2265 = vsub.s32 0, %v2264
      %v2266 = vrot.slane %v2262, %v2265
      %2268 = vbcast.lane.b32.xlu0 %v2266, 256
      %v2269 = vpop.permute.xlu0 %2268
      %s2271 = sor.u32 256, 8
      %2272 = vbcast.lane.b32.xlu0 %v2266, %s2271
      %v2273 = vpop.permute.xlu0 %2272
      %v2274 = vlaneseq
      %v2275 = vshrl.u32 %v2274, 7
      %v2276 = vsub.s32 1, %v2275
      %v2277 = vrot.slane %v2262, %v2276
      %2279 = vbcast.lane.b32.xlu0 %v2277, 256
      %v2280 = vpop.permute.xlu0 %2279
      %s2282 = sor.u32 256, 8
      %2283 = vbcast.lane.b32.xlu0 %v2277, %s2282
      %v2284 = vpop.permute.xlu0 %2283
      %v2285 = vlaneseq
      %v2286 = vshrl.u32 %v2285, 7
      %v2287 = vsub.s32 2, %v2286
      %v2288 = vrot.slane %v2262, %v2287
      %2290 = vbcast.lane.b32.xlu0 %v2288, 256
      %v2291 = vpop.permute.xlu0 %2290
      %s2293 = sor.u32 256, 8
      %2294 = vbcast.lane.b32.xlu0 %v2288, %s2293
      %v2295 = vpop.permute.xlu0 %2294
      %v2296 = vlaneseq
      %v2297 = vshrl.u32 %v2296, 7
      %v2298 = vsub.s32 3, %v2297
      %v2299 = vrot.slane %v2262, %v2298
      %2301 = vbcast.lane.b32.xlu0 %v2299, 256
      %v2302 = vpop.permute.xlu0 %2301
      %s2304 = sor.u32 256, 8
      %2305 = vbcast.lane.b32.xlu0 %v2299, %s2304
      %v2306 = vpop.permute.xlu0 %2305
      %v2307 = vlaneseq
      %v2308 = vshrl.u32 %v2307, 7
      %v2309 = vsub.s32 4, %v2308
      %v2310 = vrot.slane %v2262, %v2309
      %2312 = vbcast.lane.b32.xlu0 %v2310, 256
      %v2313 = vpop.permute.xlu0 %2312
      %s2315 = sor.u32 256, 8
      %2316 = vbcast.lane.b32.xlu0 %v2310, %s2315
      %v2317 = vpop.permute.xlu0 %2316
      %v2318 = vlaneseq
      %v2319 = vshrl.u32 %v2318, 7
      %v2320 = vsub.s32 5, %v2319
      %v2321 = vrot.slane %v2262, %v2320
      %2323 = vbcast.lane.b32.xlu0 %v2321, 256
      %v2324 = vpop.permute.xlu0 %2323
      %s2326 = sor.u32 256, 8
      %2327 = vbcast.lane.b32.xlu0 %v2321, %s2326
      %v2328 = vpop.permute.xlu0 %2327
      %v2329 = vlaneseq
      %v2330 = vshrl.u32 %v2329, 7
      %v2331 = vsub.s32 6, %v2330
      %v2332 = vrot.slane %v2262, %v2331
      %2334 = vbcast.lane.b32.xlu0 %v2332, 256
      %v2335 = vpop.permute.xlu0 %2334
      %s2337 = sor.u32 256, 8
      %2338 = vbcast.lane.b32.xlu0 %v2332, %s2337
      %v2339 = vpop.permute.xlu0 %2338
      %v2340 = vlaneseq
      %v2341 = vshrl.u32 %v2340, 7
      %v2342 = vsub.s32 7, %v2341
      %v2343 = vrot.slane %v2262, %v2342
      %2345 = vbcast.lane.b32.xlu0 %v2343, 256
      %v2346 = vpop.permute.xlu0 %2345
      %s2348 = sor.u32 256, 8
      %2349 = vbcast.lane.b32.xlu0 %v2343, %s2348
      %v2350 = vpop.permute.xlu0 %2349
      %v2351 = vmul.f32 %v2269, %v1347
      %v2352 = vmul.f32 %v2273, %v1348
      %v2353 = vmul.f32 %v2280, %v1349
      %v2354 = vmul.f32 %v2284, %v1350
      %v2355 = vmul.f32 %v2291, %v1351
      %v2356 = vmul.f32 %v2295, %v1352
      %v2357 = vmul.f32 %v2302, %v1353
      %v2358 = vmul.f32 %v2306, %v1354
      %v2359 = vmul.f32 %v2313, %v1355
      %v2360 = vmul.f32 %v2317, %v1356
      %v2361 = vmul.f32 %v2324, %v1357
      %v2362 = vmul.f32 %v2328, %v1358
      %v2363 = vmul.f32 %v2335, %v1359
      %v2364 = vmul.f32 %v2339, %v1360
      %v2365 = vmul.f32 %v2346, %v1361
      %v2366 = vmul.f32 %v2350, %v1362
      %v2367 = vadd.f32 %v2351, %v2352
      %v2368 = vrot.slane %v2367, 4
      %v2369 = vadd.f32 %v2367, %v2368
      %v2370 = vrot.slane %v2369, 2
      %v2371 = vadd.f32 %v2369, %v2370
      %v2372 = vrot.slane %v2371, 1
      %v2373 = vadd.f32 %v2371, %v2372
      %v2374 = vadd.f32 %v2353, %v2354
      %v2375 = vrot.slane %v2374, 4
      %v2376 = vadd.f32 %v2374, %v2375
      %v2377 = vrot.slane %v2376, 2
      %v2378 = vadd.f32 %v2376, %v2377
      %v2379 = vrot.slane %v2378, 1
      %v2380 = vadd.f32 %v2378, %v2379
      %v2381 = vadd.f32 %v2355, %v2356
      %v2382 = vrot.slane %v2381, 4
      %v2383 = vadd.f32 %v2381, %v2382
      %v2384 = vrot.slane %v2383, 2
      %v2385 = vadd.f32 %v2383, %v2384
      %v2386 = vrot.slane %v2385, 1
      %v2387 = vadd.f32 %v2385, %v2386
      %v2388 = vadd.f32 %v2357, %v2358
      %v2389 = vrot.slane %v2388, 4
      %v2390 = vadd.f32 %v2388, %v2389
      %v2391 = vrot.slane %v2390, 2
      %v2392 = vadd.f32 %v2390, %v2391
      %v2393 = vrot.slane %v2392, 1
      %v2394 = vadd.f32 %v2392, %v2393
      %v2395 = vadd.f32 %v2359, %v2360
      %v2396 = vrot.slane %v2395, 4
      %v2397 = vadd.f32 %v2395, %v2396
      %v2398 = vrot.slane %v2397, 2
      %v2399 = vadd.f32 %v2397, %v2398
      %v2400 = vrot.slane %v2399, 1
      %v2401 = vadd.f32 %v2399, %v2400
      %v2402 = vadd.f32 %v2361, %v2362
      %v2403 = vrot.slane %v2402, 4
      %v2404 = vadd.f32 %v2402, %v2403
      %v2405 = vrot.slane %v2404, 2
      %v2406 = vadd.f32 %v2404, %v2405
      %v2407 = vrot.slane %v2406, 1
      %v2408 = vadd.f32 %v2406, %v2407
      %v2409 = vadd.f32 %v2363, %v2364
      %v2410 = vrot.slane %v2409, 4
      %v2411 = vadd.f32 %v2409, %v2410
      %v2412 = vrot.slane %v2411, 2
      %v2413 = vadd.f32 %v2411, %v2412
      %v2414 = vrot.slane %v2413, 1
      %v2415 = vadd.f32 %v2413, %v2414
      %v2416 = vadd.f32 %v2365, %v2366
      %v2417 = vrot.slane %v2416, 4
      %v2418 = vadd.f32 %v2416, %v2417
      %v2419 = vrot.slane %v2418, 2
      %v2420 = vadd.f32 %v2418, %v2419
      %v2421 = vrot.slane %v2420, 1
      %v2422 = vadd.f32 %v2420, %v2421
      %v2423 = vpack.c.bf16 %v2373, %v2373
      %v2424 = vpack.c.bf16 %v2380, %v2380
      %v2425 = vpack.c.bf16 %v2387, %v2387
      %v2426 = vpack.c.bf16 %v2394, %v2394
      %v2427 = vpack.c.bf16 %v2401, %v2401
      %v2428 = vpack.c.bf16 %v2408, %v2408
      %v2429 = vpack.c.bf16 %v2415, %v2415
      %v2430 = vpack.c.bf16 %v2422, %v2422
      %v2439 = vunpack.c.l.b16 %v2423
      %v2440 = vunpack.c.l.b16 %v2424
      %v2441 = vunpack.c.l.b16 %v2425
      %v2442 = vunpack.c.l.b16 %v2426
      %v2443 = vunpack.c.l.b16 %v2427
      %v2444 = vunpack.c.l.b16 %v2428
      %v2445 = vunpack.c.l.b16 %v2429
      %v2446 = vunpack.c.l.b16 %v2430
      %v2447 = vsel %vm1231, %v2440, %v2439
      %v2448 = vsel %vm1233, %v2441, %v2447
      %v2449 = vsel %vm1235, %v2442, %v2448
      %v2450 = vsel %vm1237, %v2443, %v2449
      %v2451 = vsel %vm1239, %v2444, %v2450
      %v2452 = vsel %vm1241, %v2445, %v2451
      %v2453 = vsel %vm1243, %v2446, %v2452
      %v2454 = vpack.c.b16 %v2453, %v2453
      %2456 = vmatprep.subr.bf16.mxu0 %v1565
      %2457 = vmatpush1.bf16.msra.mxu0 %v1564
      %2458 = vmatprep.subr.bf16.mxu0 %v1569
      %2459 = vmatpush1.bf16.msra.mxu0 %v1568
      %2460 = vmatprep.subr.bf16.mxu0 %v1573
      %2461 = vmatpush1.bf16.msra.mxu0 %v1572
      %2462 = vmatprep.subr.bf16.mxu0 %v1577
      %2463 = vmatpush1.bf16.msra.mxu0 %v1576
      %2464 = vmatprep.subr.bf16.mxu0 %v1581
      %2465 = vmatpush1.bf16.msra.mxu0 %v1580
      %2466 = vmatprep.subr.bf16.mxu0 %v1585
      %2467 = vmatpush1.bf16.msra.mxu0 %v1584
      %2468 = vmatprep.subr.bf16.mxu0 %v1589
      %2469 = vmatpush1.bf16.msra.mxu0 %v1588
      %2470 = vmatprep.subr.bf16.mxu0 %v1593
      %2471 = vmatpush1.bf16.msra.mxu0 %v1592
      %2472 = vmatprep.subr.bf16.mxu0 0
      %2473 = vmatpush1.bf16.msra.mxu0 0
      %2474 = vmatprep.subr.bf16.mxu0 0
      %2475 = vmatpush1.bf16.msra.mxu0 0
      %2476 = vmatprep.subr.bf16.mxu0 0
      %2477 = vmatpush1.bf16.msra.mxu0 0
      %2478 = vmatprep.subr.bf16.mxu0 0
      %2479 = vmatpush1.bf16.msra.mxu0 0
      %2480 = vmatprep.subr.bf16.mxu0 0
      %2481 = vmatpush1.bf16.msra.mxu0 0
      %2482 = vmatprep.subr.bf16.mxu0 0
      %2483 = vmatpush1.bf16.msra.mxu0 0
      %2484 = vmatprep.subr.bf16.mxu0 0
      %2485 = vmatpush1.bf16.msra.mxu0 0
      %2486 = vmatprep.subr.bf16.mxu0 0
      %2487 = vmatpush1.bf16.msra.mxu0 0
      %2488 = vmatprep.mubr.bf16.mxu0 0
      %2489 = vmatmul.mubr.bf16.gmra.mrb[0].mxu0 %v2454
      %v2490 = vpop.f32.mrb[0].mxu0
      %v2491 = vadd.f32 0.0, %v2490
      %v2492 = vpop.f32.mrb[0].mxu0
      %v2493 = vadd.f32 0.0, %v2492
      %v2494 = vpop.f32.mrb[0].mxu0
      %v2495 = vpop.f32.mrb[0].mxu0
      %2496 = vdwg.mxu0
      %2497 = vmatprep.subr.bf16.mxu0 %v1567
      %2498 = vmatpush1.bf16.msra.mxu0 %v1566
      %2499 = vmatprep.subr.bf16.mxu0 %v1571
      %2500 = vmatpush1.bf16.msra.mxu0 %v1570
      %2501 = vmatprep.subr.bf16.mxu0 %v1575
      %2502 = vmatpush1.bf16.msra.mxu0 %v1574
      %2503 = vmatprep.subr.bf16.mxu0 %v1579
      %2504 = vmatpush1.bf16.msra.mxu0 %v1578
      %2505 = vmatprep.subr.bf16.mxu0 %v1583
      %2506 = vmatpush1.bf16.msra.mxu0 %v1582
      %2507 = vmatprep.subr.bf16.mxu0 %v1587
      %2508 = vmatpush1.bf16.msra.mxu0 %v1586
      %2509 = vmatprep.subr.bf16.mxu0 %v1591
      %2510 = vmatpush1.bf16.msra.mxu0 %v1590
      %2511 = vmatprep.subr.bf16.mxu0 %v1595
      %2512 = vmatpush1.bf16.msra.mxu0 %v1594
      %2513 = vmatprep.subr.bf16.mxu0 0
      %2514 = vmatpush1.bf16.msra.mxu0 0
      %2515 = vmatprep.subr.bf16.mxu0 0
      %2516 = vmatpush1.bf16.msra.mxu0 0
      %2517 = vmatprep.subr.bf16.mxu0 0
      %2518 = vmatpush1.bf16.msra.mxu0 0
      %2519 = vmatprep.subr.bf16.mxu0 0
      %2520 = vmatpush1.bf16.msra.mxu0 0
      %2521 = vmatprep.subr.bf16.mxu0 0
      %2522 = vmatpush1.bf16.msra.mxu0 0
      %2523 = vmatprep.subr.bf16.mxu0 0
      %2524 = vmatpush1.bf16.msra.mxu0 0
      %2525 = vmatprep.subr.bf16.mxu0 0
      %2526 = vmatpush1.bf16.msra.mxu0 0
      %2527 = vmatprep.subr.bf16.mxu0 0
      %2528 = vmatpush1.bf16.msra.mxu0 0
      %2529 = vmatprep.mubr.bf16.mxu0 0
      %2530 = vmatmul.mubr.bf16.gmra.mrb[0].mxu0 %v2454
      %v2531 = vpop.f32.mrb[0].mxu0
      %v2532 = vadd.f32 0.0, %v2531
      %v2533 = vpop.f32.mrb[0].mxu0
      %v2534 = vadd.f32 0.0, %v2533
      %v2535 = vpop.f32.mrb[0].mxu0
      %v2536 = vpop.f32.mrb[0].mxu0
      %2537 = vdwg.mxu0
      %s2538 = scalar_lea.vmem %s575, 12
      %v2539 = vld [vmem:[%s2538] sm:$0xff]
      %v2540 = vld [vmem:[%s2538 + $0x8] sm:$0xf]
      %v2541 = vunpack.c.l.bf16 %v2539
      %v2542 = vunpack.c.h.bf16 %v2539
      %v2543 = vunpack.c.l.bf16 %v2540
      %v2544 = vadd.f32 %v2541, %v2491
      %v2545 = vadd.f32 %v2542, %v2493
      %v2546 = vadd.f32 %v2543, %v2532
      %v2547 = vadd.f32 %v2544, %v1982
      %v2548 = vxor.u32 %v2547, 2147483648
      %v2549 = vmul.f32 %v2548, 1.442695
      %v2550 = vpow.pop %v2549
      %v2551 = vadd.f32 %v2550, 1.0
      %v2552 = vrcp.pop %v2551
      %v2553 = vmul.f32 1.0, %v2552
      %v2554 = vadd.f32 %v2545, %v1983
      %v2555 = vxor.u32 %v2554, 2147483648
      %v2556 = vmul.f32 %v2555, 1.442695
      %v2557 = vpow.pop %v2556
      %v2558 = vadd.f32 %v2557, 1.0
      %v2559 = vrcp.pop %v2558
      %v2560 = vmul.f32 1.0, %v2559
      %v2561 = vmul.f32 %v2553, %v1984
      %v2562 = vadd.f32 %v2546, %v2561
      %v2563 = vtanh.pop %v2562
      %v2564 = vsub.f32 1.0, %v2560
      %v2565 = vmul.f32 %v2564, %v2563
      %v2566 = vmul.f32 %v2560, %v1744
      %v2567 = vadd.f32 %v2565, %v2566
      %s2568 = sadd.s32 %s1739, 1
      %p2569 = scmp.lt.s32.totalorder %s2568, 6
      %s2570 = scalar_select %p2569, 1, 0
      %v2571 = vstv %s2570
      %vm2572 = vcmp.eq.s32.totalorder %v2571, 1
      %v2573 = vsel %vm2572, %v2567, %v1744
      %s2574 = scalar_lea.vmem %s615, 8
      %2575 = vst [vmem:[%s2574] sm:$0xff] %v2573
      %s2576 = scalar_lea.vmem %s584, 4
      %v2577 = vld [vmem:[%s2576] sm:$0xf]
      %v2578 = vunpack.c.l.bf16 %v2577
      %v2579 = vpack.c.bf16 %v2573, %v2573
      %2580 = vmatprep.subr.bf16.mxu0 0
      %2581 = vmatpush1.bf16.msra.mxu0 %v1781
      %2582 = vmatprep.subr.bf16.mxu0 0
      %2583 = vmatpush1.bf16.msra.mxu0 %v1782
      %2584 = vmatprep.subr.bf16.mxu0 0
      %2585 = vmatpush1.bf16.msra.mxu0 %v1783
      %2586 = vmatprep.subr.bf16.mxu0 0
      %2587 = vmatpush1.bf16.msra.mxu0 %v1784
      %2588 = vmatprep.subr.bf16.mxu0 0
      %2589 = vmatpush1.bf16.msra.mxu0 %v1785
      %2590 = vmatprep.subr.bf16.mxu0 0
      %2591 = vmatpush1.bf16.msra.mxu0 %v1786
      %2592 = vmatprep.subr.bf16.mxu0 0
      %2593 = vmatpush1.bf16.msra.mxu0 %v1787
      %2594 = vmatprep.subr.bf16.mxu0 0
      %2595 = vmatpush1.bf16.msra.mxu0 %v1788
      %2596 = vmatprep.subr.bf16.mxu0 0
      %2597 = vmatpush1.bf16.msra.mxu0 0
      %2598 = vmatprep.subr.bf16.mxu0 0
      %2599 = vmatpush1.bf16.msra.mxu0 0
      %2600 = vmatprep.subr.bf16.mxu0 0
      %2601 = vmatpush1.bf16.msra.mxu0 0
      %2602 = vmatprep.subr.bf16.mxu0 0
      %2603 = vmatpush1.bf16.msra.mxu0 0
      %2604 = vmatprep.subr.bf16.mxu0 0
      %2605 = vmatpush1.bf16.msra.mxu0 0
      %2606 = vmatprep.subr.bf16.mxu0 0
      %2607 = vmatpush1.bf16.msra.mxu0 0
      %2608 = vmatprep.subr.bf16.mxu0 0
      %2609 = vmatpush1.bf16.msra.mxu0 0
      %2610 = vmatprep.subr.bf16.mxu0 0
      %2611 = vmatpush1.bf16.msra.mxu0 0
      %2612 = vmatprep.mubr.bf16.mxu0 0
      %2613 = vmatmul.mubr.bf16.gmra.mrb[0].mxu0 %v2579
      %v2614 = vpop.f32.mrb[0].mxu0
      %v2615 = vadd.f32 0.0, %v2614
      %v2616 = vpop.f32.mrb[0].mxu0
      %v2617 = vpop.f32.mrb[0].mxu0
      %v2618 = vpop.f32.mrb[0].mxu0
      %2619 = vdwg.mxu0
      %v2620 = vadd.f32 %v2578, %v2615
      %v2621 = vadd.f32 %v2620, %v2534
      %s2622 = scalar_lea.vmem %s624, 8
      %2623 = vst [vmem:[%s2622] sm:$0xff] %v2621
      %2624 = vmatprep.subr.mxu0 %v673
      %2625 = vmatpush1.msra.mxu0 %v672
      %2626 = vmatprep.subr.mxu0 %v677
      %2627 = vmatpush1.msra.mxu0 %v676
      %2628 = vmatprep.subr.mxu0 %v681
      %2629 = vmatpush1.msra.mxu0 %v680
      %2630 = vmatprep.subr.mxu0 %v685
      %2631 = vmatpush1.msra.mxu0 %v684
      %2632 = vmatprep.subr.mxu0 %v689
      %2633 = vmatpush1.msra.mxu0 %v688
      %2634 = vmatprep.subr.mxu0 %v693
      %2635 = vmatpush1.msra.mxu0 %v692
      %2636 = vmatprep.subr.mxu0 %v697
      %2637 = vmatpush1.msra.mxu0 %v696
      %2638 = vmatprep.subr.mxu0 %v701
      %2639 = vmatpush1.msra.mxu0 %v700
      %2640 = vmatprep.subr.mxu0 %v705
      %2641 = vmatpush1.msra.mxu0 %v704
      %2642 = vmatprep.subr.mxu0 %v709
      %2643 = vmatpush1.msra.mxu0 %v708
      %2644 = vmatprep.subr.mxu0 %v713
      %2645 = vmatpush1.msra.mxu0 %v712
      %2646 = vmatprep.subr.mxu0 %v717
      %2647 = vmatpush1.msra.mxu0 %v716
      %2648 = vmatprep.subr.mxu0 %v721
      %2649 = vmatpush1.msra.mxu0 %v720
      %2650 = vmatprep.subr.mxu0 %v725
      %2651 = vmatpush1.msra.mxu0 %v724
      %2652 = vmatprep.subr.mxu0 %v729
      %2653 = vmatpush1.msra.mxu0 %v728
      %2654 = vmatprep.subr.mxu0 %v733
      %2655 = vmatpush1.msra.mxu0 %v732
      %2656 = vmatprep.subr.mxu0 0.0
      %2657 = vmatpush1.msra.mxu0 0.0
      %2658 = vmatprep.subr.mxu0 0.0
      %2659 = vmatpush1.msra.mxu0 0.0
      %2660 = vmatprep.subr.mxu0 0.0
      %2661 = vmatpush1.msra.mxu0 0.0
      %2662 = vmatprep.subr.mxu0 0.0
      %2663 = vmatpush1.msra.mxu0 0.0
      %2664 = vmatprep.subr.mxu0 0.0
      %2665 = vmatpush1.msra.mxu0 0.0
      %2666 = vmatprep.subr.mxu0 0.0
      %2667 = vmatpush1.msra.mxu0 0.0
      %2668 = vmatprep.subr.mxu0 0.0
      %2669 = vmatpush1.msra.mxu0 0.0
      %2670 = vmatprep.subr.mxu0 0.0
      %2671 = vmatpush1.msra.mxu0 0.0
      %2672 = vmatprep.subr.mxu0 0.0
      %2673 = vmatpush1.msra.mxu0 0.0
      %2674 = vmatprep.subr.mxu0 0.0
      %2675 = vmatpush1.msra.mxu0 0.0
      %2676 = vmatprep.subr.mxu0 0.0
      %2677 = vmatpush1.msra.mxu0 0.0
      %2678 = vmatprep.subr.mxu0 0.0
      %2679 = vmatpush1.msra.mxu0 0.0
      %2680 = vmatprep.subr.mxu0 0.0
      %2681 = vmatpush1.msra.mxu0 0.0
      %2682 = vmatprep.subr.mxu0 0.0
      %2683 = vmatpush1.msra.mxu0 0.0
      %2684 = vmatprep.subr.mxu0 0.0
      %2685 = vmatpush1.msra.mxu0 0.0
      %2686 = vmatprep.subr.mxu0 0.0
      %2687 = vmatpush1.msra.mxu0 0.0
      %2688 = vmatprep.mubr.f32.mxu0 0.0
      %2689 = vmatmul.mubr.f32.gmra.mrb[0].mxu0 %v2573
      %v2690 = vpop.f32.mrb[0].mxu0
      %v2691 = vadd.f32 0.0, %v2690
      %v2692 = vpop.f32.mrb[0].mxu0
      %v2693 = vadd.f32 0.0, %v2692
      %2694 = vdwg.mxu0
      %2695 = vmatprep.subr.mxu0 %v675
      %2696 = vmatpush1.msra.mxu0 %v674
      %2697 = vmatprep.subr.mxu0 %v679
      %2698 = vmatpush1.msra.mxu0 %v678
      %2699 = vmatprep.subr.mxu0 %v683
      %2700 = vmatpush1.msra.mxu0 %v682
      %2701 = vmatprep.subr.mxu0 %v687
      %2702 = vmatpush1.msra.mxu0 %v686
      %2703 = vmatprep.subr.mxu0 %v691
      %2704 = vmatpush1.msra.mxu0 %v690
      %2705 = vmatprep.subr.mxu0 %v695
      %2706 = vmatpush1.msra.mxu0 %v694
      %2707 = vmatprep.subr.mxu0 %v699
      %2708 = vmatpush1.msra.mxu0 %v698
      %2709 = vmatprep.subr.mxu0 %v703
      %2710 = vmatpush1.msra.mxu0 %v702
      %2711 = vmatprep.subr.mxu0 %v707
      %2712 = vmatpush1.msra.mxu0 %v706
      %2713 = vmatprep.subr.mxu0 %v711
      %2714 = vmatpush1.msra.mxu0 %v710
      %2715 = vmatprep.subr.mxu0 %v715
      %2716 = vmatpush1.msra.mxu0 %v714
      %2717 = vmatprep.subr.mxu0 %v719
      %2718 = vmatpush1.msra.mxu0 %v718
      %2719 = vmatprep.subr.mxu0 %v723
      %2720 = vmatpush1.msra.mxu0 %v722
      %2721 = vmatprep.subr.mxu0 %v727
      %2722 = vmatpush1.msra.mxu0 %v726
      %2723 = vmatprep.subr.mxu0 %v731
      %2724 = vmatpush1.msra.mxu0 %v730
      %2725 = vmatprep.subr.mxu0 %v735
      %2726 = vmatpush1.msra.mxu0 %v734
      %2727 = vmatprep.subr.mxu0 0.0
      %2728 = vmatpush1.msra.mxu0 0.0
      %2729 = vmatprep.subr.mxu0 0.0
      %2730 = vmatpush1.msra.mxu0 0.0
      %2731 = vmatprep.subr.mxu0 0.0
      %2732 = vmatpush1.msra.mxu0 0.0
      %2733 = vmatprep.subr.mxu0 0.0
      %2734 = vmatpush1.msra.mxu0 0.0
      %2735 = vmatprep.subr.mxu0 0.0
      %2736 = vmatpush1.msra.mxu0 0.0
      %2737 = vmatprep.subr.mxu0 0.0
      %2738 = vmatpush1.msra.mxu0 0.0
      %2739 = vmatprep.subr.mxu0 0.0
      %2740 = vmatpush1.msra.mxu0 0.0
      %2741 = vmatprep.subr.mxu0 0.0
      %2742 = vmatpush1.msra.mxu0 0.0
      %2743 = vmatprep.subr.mxu0 0.0
      %2744 = vmatpush1.msra.mxu0 0.0
      %2745 = vmatprep.subr.mxu0 0.0
      %2746 = vmatpush1.msra.mxu0 0.0
      %2747 = vmatprep.subr.mxu0 0.0
      %2748 = vmatpush1.msra.mxu0 0.0
      %2749 = vmatprep.subr.mxu0 0.0
      %2750 = vmatpush1.msra.mxu0 0.0
      %2751 = vmatprep.subr.mxu0 0.0
      %2752 = vmatpush1.msra.mxu0 0.0
      %2753 = vmatprep.subr.mxu0 0.0
      %2754 = vmatpush1.msra.mxu0 0.0
      %2755 = vmatprep.subr.mxu0 0.0
      %2756 = vmatpush1.msra.mxu0 0.0
      %2757 = vmatprep.subr.mxu0 0.0
      %2758 = vmatpush1.msra.mxu0 0.0
      %2759 = vmatprep.mubr.f32.mxu0 0.0
      %2760 = vmatmul.mubr.f32.gmra.mrb[0].mxu0 %v2573
      %v2761 = vpop.f32.mrb[0].mxu0
      %v2762 = vadd.f32 0.0, %v2761
      %v2763 = vpop.f32.mrb[0].mxu0
      %v2764 = vadd.f32 0.0, %v2763
      %2765 = vdwg.mxu0
      %v2766 = vadd.f32 %v2693, %v932
      %v2767 = vadd.f32 %v2762, %v936
      %v2768 = vadd.f32 %v2764, %v940
      %v2770 = vcombine.high %v2691, %v2691
      %v2772 = vunpack.c.l.s4 1966171168
      %v2773 = vunpack.c.0.s8 %v2772
      %v2774 = vlaneseq
      %v2775 = vshrl.u32 %v2774, 7
      %v2776 = vsub.s32 %v2773, %v2775
      %v2777 = vrot.slane %v2691, %v2776
      %v2779 = vunpack.c.l.s4 1966171168
      %v2780 = vunpack.c.0.s8 %v2779
      %v2781 = vlaneseq
      %v2782 = vshrl.u32 %v2781, 7
      %v2783 = vsub.s32 %v2780, %v2782
      %v2784 = vrot.slane %v2770, %v2783
      %v2785 = vcombine.high %v2777, %v2777
      %v2786 = vcombine.high %v2784, %v2784
      %v2788 = vunpack.c.l.s4 1966171168
      %v2789 = vunpack.c.0.s8 %v2788
      %v2790 = vlaneseq
      %v2791 = vshrl.u32 %v2790, 7
      %v2792 = vsub.s32 %v2789, %v2791
      %v2793 = vrot.slane %v2777, %v2792
      %v2795 = vunpack.c.l.s4 1966171168
      %v2796 = vunpack.c.0.s8 %v2795
      %v2797 = vlaneseq
      %v2798 = vshrl.u32 %v2797, 7
      %v2799 = vsub.s32 %v2796, %v2798
      %v2800 = vrot.slane %v2784, %v2799
      %v2802 = vunpack.c.l.s4 1966171168
      %v2803 = vunpack.c.0.s8 %v2802
      %v2804 = vlaneseq
      %v2805 = vshrl.u32 %v2804, 7
      %v2806 = vsub.s32 %v2803, %v2805
      %v2807 = vrot.slane %v2785, %v2806
      %v2809 = vunpack.c.l.s4 1966171168
      %v2810 = vunpack.c.0.s8 %v2809
      %v2811 = vlaneseq
      %v2812 = vshrl.u32 %v2811, 7
      %v2813 = vsub.s32 %v2810, %v2812
      %v2814 = vrot.slane %v2786, %v2813
      %v2815 = vcombine.high %v2793, %v2793
      %v2816 = vcombine.high %v2800, %v2800
      %v2817 = vcombine.high %v2807, %v2807
      %v2818 = vcombine.high %v2814, %v2814
      %v2819 = vlaneseq
      %v2820 = vshrl.u32 %v2819, 7
      %v2821 = vsub.s32 0, %v2820
      %v2822 = vrot.slane %v2793, %v2821
      %v2823 = vlaneseq
      %v2824 = vshrl.u32 %v2823, 7
      %v2825 = vsub.s32 0, %v2824
      %v2826 = vrot.slane %v2807, %v2825
      %v2827 = vlaneseq
      %v2828 = vshrl.u32 %v2827, 7
      %v2829 = vsub.s32 0, %v2828
      %v2830 = vrot.slane %v2815, %v2829
      %v2831 = vlaneseq
      %v2832 = vshrl.u32 %v2831, 7
      %v2833 = vsub.s32 0, %v2832
      %v2834 = vrot.slane %v2817, %v2833
      %v2835 = vlaneseq
      %v2836 = vshrl.u32 %v2835, 7
      %v2837 = vsub.s32 0, %v2836
      %v2838 = vrot.slane %v2800, %v2837
      %v2839 = vlaneseq
      %v2840 = vshrl.u32 %v2839, 7
      %v2841 = vsub.s32 0, %v2840
      %v2842 = vrot.slane %v2814, %v2841
      %v2843 = vlaneseq
      %v2844 = vshrl.u32 %v2843, 7
      %v2845 = vsub.s32 0, %v2844
      %v2846 = vrot.slane %v2816, %v2845
      %v2847 = vlaneseq
      %v2848 = vshrl.u32 %v2847, 7
      %v2849 = vsub.s32 0, %v2848
      %v2850 = vrot.slane %v2818, %v2849
      %v2859 = vadd.f32 %v2822, %v997
      %v2860 = vadd.f32 %v2822, %v998
      %v2861 = vadd.f32 %v2826, %v999
      %v2862 = vadd.f32 %v2826, %v1000
      %v2863 = vadd.f32 %v2830, %v1001
      %v2864 = vadd.f32 %v2830, %v1002
      %v2865 = vadd.f32 %v2834, %v1003
      %v2866 = vadd.f32 %v2834, %v1004
      %v2867 = vadd.f32 %v2838, %v1005
      %v2868 = vadd.f32 %v2838, %v1006
      %v2869 = vadd.f32 %v2842, %v1007
      %v2870 = vadd.f32 %v2842, %v1008
      %v2871 = vadd.f32 %v2846, %v1009
      %v2872 = vadd.f32 %v2846, %v1010
      %v2873 = vadd.f32 %v2850, %v1011
      %v2874 = vadd.f32 %v2850, %v1012
      %v2875 = vtanh.pop %v2859
      %v2876 = vtanh.pop %v2860
      %v2877 = vtanh.pop %v2861
      %v2878 = vtanh.pop %v2862
      %v2879 = vtanh.pop %v2863
      %v2880 = vtanh.pop %v2864
      %v2881 = vtanh.pop %v2865
      %v2882 = vtanh.pop %v2866
      %v2883 = vtanh.pop %v2867
      %v2884 = vtanh.pop %v2868
      %v2885 = vtanh.pop %v2869
      %v2886 = vtanh.pop %v2870
      %v2887 = vtanh.pop %v2871
      %v2888 = vtanh.pop %v2872
      %v2889 = vtanh.pop %v2873
      %v2890 = vtanh.pop %v2874
      %v2891 = vmul.f32 %v2875, %v1089
      %v2892 = vmul.f32 %v2876, %v1089
      %v2893 = vmul.f32 %v2877, %v1089
      %v2894 = vmul.f32 %v2878, %v1089
      %v2895 = vmul.f32 %v2879, %v1089
      %v2896 = vmul.f32 %v2880, %v1089
      %v2897 = vmul.f32 %v2881, %v1089
      %v2898 = vmul.f32 %v2882, %v1089
      %v2899 = vmul.f32 %v2883, %v1089
      %v2900 = vmul.f32 %v2884, %v1089
      %v2901 = vmul.f32 %v2885, %v1089
      %v2902 = vmul.f32 %v2886, %v1089
      %v2903 = vmul.f32 %v2887, %v1089
      %v2904 = vmul.f32 %v2888, %v1089
      %v2905 = vmul.f32 %v2889, %v1089
      %v2906 = vmul.f32 %v2890, %v1089
      %2907 = vadd.xlane.f32.xlu0 %v2891
      %v2908 = vpop.xlane.xlu0 %2907
      %2909 = vadd.xlane.f32.xlu0 %v2892
      %v2910 = vpop.xlane.xlu0 %2909
      %2911 = vadd.xlane.f32.xlu0 %v2893
      %v2912 = vpop.xlane.xlu0 %2911
      %2913 = vadd.xlane.f32.xlu0 %v2894
      %v2914 = vpop.xlane.xlu0 %2913
      %2915 = vadd.xlane.f32.xlu0 %v2895
      %v2916 = vpop.xlane.xlu0 %2915
      %2917 = vadd.xlane.f32.xlu0 %v2896
      %v2918 = vpop.xlane.xlu0 %2917
      %2919 = vadd.xlane.f32.xlu0 %v2897
      %v2920 = vpop.xlane.xlu0 %2919
      %2921 = vadd.xlane.f32.xlu0 %v2898
      %v2922 = vpop.xlane.xlu0 %2921
      %2923 = vadd.xlane.f32.xlu0 %v2899
      %v2924 = vpop.xlane.xlu0 %2923
      %2925 = vadd.xlane.f32.xlu0 %v2900
      %v2926 = vpop.xlane.xlu0 %2925
      %2927 = vadd.xlane.f32.xlu0 %v2901
      %v2928 = vpop.xlane.xlu0 %2927
      %2929 = vadd.xlane.f32.xlu0 %v2902
      %v2930 = vpop.xlane.xlu0 %2929
      %2931 = vadd.xlane.f32.xlu0 %v2903
      %v2932 = vpop.xlane.xlu0 %2931
      %2933 = vadd.xlane.f32.xlu0 %v2904
      %v2934 = vpop.xlane.xlu0 %2933
      %2935 = vadd.xlane.f32.xlu0 %v2905
      %v2936 = vpop.xlane.xlu0 %2935
      %2937 = vadd.xlane.f32.xlu0 %v2906
      %v2938 = vpop.xlane.xlu0 %2937
      %v2955 = vlaneseq
      %v2956 = vshrl.u32 %v2955, 7
      %v2957 = vsub.s32 %v1156, %v2956
      %v2958 = vrot.slane %v2908, %v2957
      %v2959 = vlaneseq
      %v2960 = vshrl.u32 %v2959, 7
      %v2961 = vsub.s32 %v1161, %v2960
      %v2962 = vrot.slane %v2910, %v2961
      %v2963 = vsel %vm1166, %v2962, %v2958
      %v2964 = vlaneseq
      %v2965 = vshrl.u32 %v2964, 7
      %v2966 = vsub.s32 %v1156, %v2965
      %v2967 = vrot.slane %v2912, %v2966
      %v2968 = vlaneseq
      %v2969 = vshrl.u32 %v2968, 7
      %v2970 = vsub.s32 %v1161, %v2969
      %v2971 = vrot.slane %v2914, %v2970
      %v2972 = vsel %vm1166, %v2971, %v2967
      %v2973 = vlaneseq
      %v2974 = vshrl.u32 %v2973, 7
      %v2975 = vsub.s32 %v1156, %v2974
      %v2976 = vrot.slane %v2916, %v2975
      %v2977 = vlaneseq
      %v2978 = vshrl.u32 %v2977, 7
      %v2979 = vsub.s32 %v1161, %v2978
      %v2980 = vrot.slane %v2918, %v2979
      %v2981 = vsel %vm1166, %v2980, %v2976
      %v2982 = vlaneseq
      %v2983 = vshrl.u32 %v2982, 7
      %v2984 = vsub.s32 %v1156, %v2983
      %v2985 = vrot.slane %v2920, %v2984
      %v2986 = vlaneseq
      %v2987 = vshrl.u32 %v2986, 7
      %v2988 = vsub.s32 %v1161, %v2987
      %v2989 = vrot.slane %v2922, %v2988
      %v2990 = vsel %vm1166, %v2989, %v2985
      %v2991 = vlaneseq
      %v2992 = vshrl.u32 %v2991, 7
      %v2993 = vsub.s32 %v1156, %v2992
      %v2994 = vrot.slane %v2924, %v2993
      %v2995 = vlaneseq
      %v2996 = vshrl.u32 %v2995, 7
      %v2997 = vsub.s32 %v1161, %v2996
      %v2998 = vrot.slane %v2926, %v2997
      %v2999 = vsel %vm1166, %v2998, %v2994
      %v3000 = vlaneseq
      %v3001 = vshrl.u32 %v3000, 7
      %v3002 = vsub.s32 %v1156, %v3001
      %v3003 = vrot.slane %v2928, %v3002
      %v3004 = vlaneseq
      %v3005 = vshrl.u32 %v3004, 7
      %v3006 = vsub.s32 %v1161, %v3005
      %v3007 = vrot.slane %v2930, %v3006
      %v3008 = vsel %vm1166, %v3007, %v3003
      %v3009 = vlaneseq
      %v3010 = vshrl.u32 %v3009, 7
      %v3011 = vsub.s32 %v1156, %v3010
      %v3012 = vrot.slane %v2932, %v3011
      %v3013 = vlaneseq
      %v3014 = vshrl.u32 %v3013, 7
      %v3015 = vsub.s32 %v1161, %v3014
      %v3016 = vrot.slane %v2934, %v3015
      %v3017 = vsel %vm1166, %v3016, %v3012
      %v3018 = vlaneseq
      %v3019 = vshrl.u32 %v3018, 7
      %v3020 = vsub.s32 %v1156, %v3019
      %v3021 = vrot.slane %v2936, %v3020
      %v3022 = vlaneseq
      %v3023 = vshrl.u32 %v3022, 7
      %v3024 = vsub.s32 %v1161, %v3023
      %v3025 = vrot.slane %v2938, %v3024
      %v3026 = vsel %vm1166, %v3025, %v3021
      %v3027 = vsel %vm1231, %v2972, %v2963
      %v3028 = vsel %vm1233, %v2981, %v3027
      %v3029 = vsel %vm1235, %v2990, %v3028
      %v3030 = vsel %vm1237, %v2999, %v3029
      %v3031 = vsel %vm1239, %v3008, %v3030
      %v3032 = vsel %vm1241, %v3017, %v3031
      %v3033 = vsel %vm1243, %v3026, %v3032
      %v3035 = vsel %vm670, %v3033, -1e+30
      %v3036 = vsel %vm1247, %v3035, -inf
      %3037 = vmax.xlane.f32.xlu0 %v3036
      %v3038 = vpop.xlane.xlu0 %3037
      %v3039 = vsub.f32 %v3035, %v3038
      %v3040 = vmul.f32 %v3039, 1.442695
      %v3041 = vpow.pop %v3040
      %v3042 = vsel %vm1247, %v3041, 0.0
      %3043 = vadd.xlane.f32.xlu0 %v3042
      %v3044 = vpop.xlane.xlu0 %3043
      %v3045 = vrcp.pop %v3044
      %v3046 = vmul.f32 %v3041, %v3045
      %v3047 = vlaneseq
      %v3048 = vshrl.u32 %v3047, 7
      %v3049 = vsub.s32 0, %v3048
      %v3050 = vrot.slane %v3046, %v3049
      %3052 = vbcast.lane.b32.xlu0 %v3050, 256
      %v3053 = vpop.permute.xlu0 %3052
      %s3055 = sor.u32 256, 8
      %3056 = vbcast.lane.b32.xlu0 %v3050, %s3055
      %v3057 = vpop.permute.xlu0 %3056
      %v3058 = vlaneseq
      %v3059 = vshrl.u32 %v3058, 7
      %v3060 = vsub.s32 1, %v3059
      %v3061 = vrot.slane %v3046, %v3060
      %3063 = vbcast.lane.b32.xlu0 %v3061, 256
      %v3064 = vpop.permute.xlu0 %3063
      %s3066 = sor.u32 256, 8
      %3067 = vbcast.lane.b32.xlu0 %v3061, %s3066
      %v3068 = vpop.permute.xlu0 %3067
      %v3069 = vlaneseq
      %v3070 = vshrl.u32 %v3069, 7
      %v3071 = vsub.s32 2, %v3070
      %v3072 = vrot.slane %v3046, %v3071
      %3074 = vbcast.lane.b32.xlu0 %v3072, 256
      %v3075 = vpop.permute.xlu0 %3074
      %s3077 = sor.u32 256, 8
      %3078 = vbcast.lane.b32.xlu0 %v3072, %s3077
      %v3079 = vpop.permute.xlu0 %3078
      %v3080 = vlaneseq
      %v3081 = vshrl.u32 %v3080, 7
      %v3082 = vsub.s32 3, %v3081
      %v3083 = vrot.slane %v3046, %v3082
      %3085 = vbcast.lane.b32.xlu0 %v3083, 256
      %v3086 = vpop.permute.xlu0 %3085
      %s3088 = sor.u32 256, 8
      %3089 = vbcast.lane.b32.xlu0 %v3083, %s3088
      %v3090 = vpop.permute.xlu0 %3089
      %v3091 = vlaneseq
      %v3092 = vshrl.u32 %v3091, 7
      %v3093 = vsub.s32 4, %v3092
      %v3094 = vrot.slane %v3046, %v3093
      %3096 = vbcast.lane.b32.xlu0 %v3094, 256
      %v3097 = vpop.permute.xlu0 %3096
      %s3099 = sor.u32 256, 8
      %3100 = vbcast.lane.b32.xlu0 %v3094, %s3099
      %v3101 = vpop.permute.xlu0 %3100
      %v3102 = vlaneseq
      %v3103 = vshrl.u32 %v3102, 7
      %v3104 = vsub.s32 5, %v3103
      %v3105 = vrot.slane %v3046, %v3104
      %3107 = vbcast.lane.b32.xlu0 %v3105, 256
      %v3108 = vpop.permute.xlu0 %3107
      %s3110 = sor.u32 256, 8
      %3111 = vbcast.lane.b32.xlu0 %v3105, %s3110
      %v3112 = vpop.permute.xlu0 %3111
      %v3113 = vlaneseq
      %v3114 = vshrl.u32 %v3113, 7
      %v3115 = vsub.s32 6, %v3114
      %v3116 = vrot.slane %v3046, %v3115
      %3118 = vbcast.lane.b32.xlu0 %v3116, 256
      %v3119 = vpop.permute.xlu0 %3118
      %s3121 = sor.u32 256, 8
      %3122 = vbcast.lane.b32.xlu0 %v3116, %s3121
      %v3123 = vpop.permute.xlu0 %3122
      %v3124 = vlaneseq
      %v3125 = vshrl.u32 %v3124, 7
      %v3126 = vsub.s32 7, %v3125
      %v3127 = vrot.slane %v3046, %v3126
      %3129 = vbcast.lane.b32.xlu0 %v3127, 256
      %v3130 = vpop.permute.xlu0 %3129
      %s3132 = sor.u32 256, 8
      %3133 = vbcast.lane.b32.xlu0 %v3127, %s3132
      %v3134 = vpop.permute.xlu0 %3133
      %v3135 = vmul.f32 %v3053, %v1347
      %v3136 = vmul.f32 %v3057, %v1348
      %v3137 = vmul.f32 %v3064, %v1349
      %v3138 = vmul.f32 %v3068, %v1350
      %v3139 = vmul.f32 %v3075, %v1351
      %v3140 = vmul.f32 %v3079, %v1352
      %v3141 = vmul.f32 %v3086, %v1353
      %v3142 = vmul.f32 %v3090, %v1354
      %v3143 = vmul.f32 %v3097, %v1355
      %v3144 = vmul.f32 %v3101, %v1356
      %v3145 = vmul.f32 %v3108, %v1357
      %v3146 = vmul.f32 %v3112, %v1358
      %v3147 = vmul.f32 %v3119, %v1359
      %v3148 = vmul.f32 %v3123, %v1360
      %v3149 = vmul.f32 %v3130, %v1361
      %v3150 = vmul.f32 %v3134, %v1362
      %v3151 = vadd.f32 %v3135, %v3136
      %v3152 = vrot.slane %v3151, 4
      %v3153 = vadd.f32 %v3151, %v3152
      %v3154 = vrot.slane %v3153, 2
      %v3155 = vadd.f32 %v3153, %v3154
      %v3156 = vrot.slane %v3155, 1
      %v3157 = vadd.f32 %v3155, %v3156
      %v3158 = vadd.f32 %v3137, %v3138
      %v3159 = vrot.slane %v3158, 4
      %v3160 = vadd.f32 %v3158, %v3159
      %v3161 = vrot.slane %v3160, 2
      %v3162 = vadd.f32 %v3160, %v3161
      %v3163 = vrot.slane %v3162, 1
      %v3164 = vadd.f32 %v3162, %v3163
      %v3165 = vadd.f32 %v3139, %v3140
      %v3166 = vrot.slane %v3165, 4
      %v3167 = vadd.f32 %v3165, %v3166
      %v3168 = vrot.slane %v3167, 2
      %v3169 = vadd.f32 %v3167, %v3168
      %v3170 = vrot.slane %v3169, 1
      %v3171 = vadd.f32 %v3169, %v3170
      %v3172 = vadd.f32 %v3141, %v3142
      %v3173 = vrot.slane %v3172, 4
      %v3174 = vadd.f32 %v3172, %v3173
      %v3175 = vrot.slane %v3174, 2
      %v3176 = vadd.f32 %v3174, %v3175
      %v3177 = vrot.slane %v3176, 1
      %v3178 = vadd.f32 %v3176, %v3177
      %v3179 = vadd.f32 %v3143, %v3144
      %v3180 = vrot.slane %v3179, 4
      %v3181 = vadd.f32 %v3179, %v3180
      %v3182 = vrot.slane %v3181, 2
      %v3183 = vadd.f32 %v3181, %v3182
      %v3184 = vrot.slane %v3183, 1
      %v3185 = vadd.f32 %v3183, %v3184
      %v3186 = vadd.f32 %v3145, %v3146
      %v3187 = vrot.slane %v3186, 4
      %v3188 = vadd.f32 %v3186, %v3187
      %v3189 = vrot.slane %v3188, 2
      %v3190 = vadd.f32 %v3188, %v3189
      %v3191 = vrot.slane %v3190, 1
      %v3192 = vadd.f32 %v3190, %v3191
      %v3193 = vadd.f32 %v3147, %v3148
      %v3194 = vrot.slane %v3193, 4
      %v3195 = vadd.f32 %v3193, %v3194
      %v3196 = vrot.slane %v3195, 2
      %v3197 = vadd.f32 %v3195, %v3196
      %v3198 = vrot.slane %v3197, 1
      %v3199 = vadd.f32 %v3197, %v3198
      %v3200 = vadd.f32 %v3149, %v3150
      %v3201 = vrot.slane %v3200, 4
      %v3202 = vadd.f32 %v3200, %v3201
      %v3203 = vrot.slane %v3202, 2
      %v3204 = vadd.f32 %v3202, %v3203
      %v3205 = vrot.slane %v3204, 1
      %v3206 = vadd.f32 %v3204, %v3205
      %v3207 = vpack.c.bf16 %v3157, %v3157
      %v3208 = vpack.c.bf16 %v3164, %v3164
      %v3209 = vpack.c.bf16 %v3171, %v3171
      %v3210 = vpack.c.bf16 %v3178, %v3178
      %v3211 = vpack.c.bf16 %v3185, %v3185
      %v3212 = vpack.c.bf16 %v3192, %v3192
      %v3213 = vpack.c.bf16 %v3199, %v3199
      %v3214 = vpack.c.bf16 %v3206, %v3206
      %v3223 = vunpack.c.l.b16 %v3207
      %v3224 = vunpack.c.l.b16 %v3208
      %v3225 = vunpack.c.l.b16 %v3209
      %v3226 = vunpack.c.l.b16 %v3210
      %v3227 = vunpack.c.l.b16 %v3211
      %v3228 = vunpack.c.l.b16 %v3212
      %v3229 = vunpack.c.l.b16 %v3213
      %v3230 = vunpack.c.l.b16 %v3214
      %v3231 = vsel %vm1231, %v3224, %v3223
      %v3232 = vsel %vm1233, %v3225, %v3231
      %v3233 = vsel %vm1235, %v3226, %v3232
      %v3234 = vsel %vm1237, %v3227, %v3233
      %v3235 = vsel %vm1239, %v3228, %v3234
      %v3236 = vsel %vm1241, %v3229, %v3235
      %v3237 = vsel %vm1243, %v3230, %v3236
      %v3238 = vpack.c.b16 %v3237, %v3237
      %3240 = vmatprep.subr.bf16.mxu0 %v1565
      %3241 = vmatpush1.bf16.msra.mxu0 %v1564
      %3242 = vmatprep.subr.bf16.mxu0 %v1569
      %3243 = vmatpush1.bf16.msra.mxu0 %v1568
      %3244 = vmatprep.subr.bf16.mxu0 %v1573
      %3245 = vmatpush1.bf16.msra.mxu0 %v1572
      %3246 = vmatprep.subr.bf16.mxu0 %v1577
      %3247 = vmatpush1.bf16.msra.mxu0 %v1576
      %3248 = vmatprep.subr.bf16.mxu0 %v1581
      %3249 = vmatpush1.bf16.msra.mxu0 %v1580
      %3250 = vmatprep.subr.bf16.mxu0 %v1585
      %3251 = vmatpush1.bf16.msra.mxu0 %v1584
      %3252 = vmatprep.subr.bf16.mxu0 %v1589
      %3253 = vmatpush1.bf16.msra.mxu0 %v1588
      %3254 = vmatprep.subr.bf16.mxu0 %v1593
      %3255 = vmatpush1.bf16.msra.mxu0 %v1592
      %3256 = vmatprep.subr.bf16.mxu0 0
      %3257 = vmatpush1.bf16.msra.mxu0 0
      %3258 = vmatprep.subr.bf16.mxu0 0
      %3259 = vmatpush1.bf16.msra.mxu0 0
      %3260 = vmatprep.subr.bf16.mxu0 0
      %3261 = vmatpush1.bf16.msra.mxu0 0
      %3262 = vmatprep.subr.bf16.mxu0 0
      %3263 = vmatpush1.bf16.msra.mxu0 0
      %3264 = vmatprep.subr.bf16.mxu0 0
      %3265 = vmatpush1.bf16.msra.mxu0 0
      %3266 = vmatprep.subr.bf16.mxu0 0
      %3267 = vmatpush1.bf16.msra.mxu0 0
      %3268 = vmatprep.subr.bf16.mxu0 0
      %3269 = vmatpush1.bf16.msra.mxu0 0
      %3270 = vmatprep.subr.bf16.mxu0 0
      %3271 = vmatpush1.bf16.msra.mxu0 0
      %3272 = vmatprep.mubr.bf16.mxu0 0
      %3273 = vmatmul.mubr.bf16.gmra.mrb[0].mxu0 %v3238
      %v3274 = vpop.f32.mrb[0].mxu0
      %v3275 = vadd.f32 0.0, %v3274
      %v3276 = vpop.f32.mrb[0].mxu0
      %v3277 = vadd.f32 0.0, %v3276
      %v3278 = vpop.f32.mrb[0].mxu0
      %v3279 = vpop.f32.mrb[0].mxu0
      %3280 = vdwg.mxu0
      %3281 = vmatprep.subr.bf16.mxu0 %v1567
      %3282 = vmatpush1.bf16.msra.mxu0 %v1566
      %3283 = vmatprep.subr.bf16.mxu0 %v1571
      %3284 = vmatpush1.bf16.msra.mxu0 %v1570
      %3285 = vmatprep.subr.bf16.mxu0 %v1575
      %3286 = vmatpush1.bf16.msra.mxu0 %v1574
      %3287 = vmatprep.subr.bf16.mxu0 %v1579
      %3288 = vmatpush1.bf16.msra.mxu0 %v1578
      %3289 = vmatprep.subr.bf16.mxu0 %v1583
      %3290 = vmatpush1.bf16.msra.mxu0 %v1582
      %3291 = vmatprep.subr.bf16.mxu0 %v1587
      %3292 = vmatpush1.bf16.msra.mxu0 %v1586
      %3293 = vmatprep.subr.bf16.mxu0 %v1591
      %3294 = vmatpush1.bf16.msra.mxu0 %v1590
      %3295 = vmatprep.subr.bf16.mxu0 %v1595
      %3296 = vmatpush1.bf16.msra.mxu0 %v1594
      %3297 = vmatprep.subr.bf16.mxu0 0
      %3298 = vmatpush1.bf16.msra.mxu0 0
      %3299 = vmatprep.subr.bf16.mxu0 0
      %3300 = vmatpush1.bf16.msra.mxu0 0
      %3301 = vmatprep.subr.bf16.mxu0 0
      %3302 = vmatpush1.bf16.msra.mxu0 0
      %3303 = vmatprep.subr.bf16.mxu0 0
      %3304 = vmatpush1.bf16.msra.mxu0 0
      %3305 = vmatprep.subr.bf16.mxu0 0
      %3306 = vmatpush1.bf16.msra.mxu0 0
      %3307 = vmatprep.subr.bf16.mxu0 0
      %3308 = vmatpush1.bf16.msra.mxu0 0
      %3309 = vmatprep.subr.bf16.mxu0 0
      %3310 = vmatpush1.bf16.msra.mxu0 0
      %3311 = vmatprep.subr.bf16.mxu0 0
      %3312 = vmatpush1.bf16.msra.mxu0 0
      %3313 = vmatprep.mubr.bf16.mxu0 0
      %3314 = vmatmul.mubr.bf16.gmra.mrb[0].mxu0 %v3238
      %v3315 = vpop.f32.mrb[0].mxu0
      %v3316 = vadd.f32 0.0, %v3315
      %v3317 = vpop.f32.mrb[0].mxu0
      %v3318 = vadd.f32 0.0, %v3317
      %v3319 = vpop.f32.mrb[0].mxu0
      %v3320 = vpop.f32.mrb[0].mxu0
      %3321 = vdwg.mxu0
      %s3322 = scalar_lea.vmem %s575, 24
      %v3323 = vld [vmem:[%s3322] sm:$0xff]
      %v3324 = vld [vmem:[%s3322 + $0x8] sm:$0xf]
      %v3325 = vunpack.c.l.bf16 %v3323
      %v3326 = vunpack.c.h.bf16 %v3323
      %v3327 = vunpack.c.l.bf16 %v3324
      %v3328 = vadd.f32 %v3325, %v3275
      %v3329 = vadd.f32 %v3326, %v3277
      %v3330 = vadd.f32 %v3327, %v3316
      %v3331 = vadd.f32 %v3328, %v2766
      %v3332 = vxor.u32 %v3331, 2147483648
      %v3333 = vmul.f32 %v3332, 1.442695
      %v3334 = vpow.pop %v3333
      %v3335 = vadd.f32 %v3334, 1.0
      %v3336 = vrcp.pop %v3335
      %v3337 = vmul.f32 1.0, %v3336
      %v3338 = vadd.f32 %v3329, %v2767
      %v3339 = vxor.u32 %v3338, 2147483648
      %v3340 = vmul.f32 %v3339, 1.442695
      %v3341 = vpow.pop %v3340
      %v3342 = vadd.f32 %v3341, 1.0
      %v3343 = vrcp.pop %v3342
      %v3344 = vmul.f32 1.0, %v3343
      %v3345 = vmul.f32 %v3337, %v2768
      %v3346 = vadd.f32 %v3330, %v3345
      %v3347 = vtanh.pop %v3346
      %v3348 = vsub.f32 1.0, %v3344
      %v3349 = vmul.f32 %v3348, %v3347
      %v3350 = vmul.f32 %v3344, %v2573
      %v3351 = vadd.f32 %v3349, %v3350
      %s3352 = sadd.s32 %s1739, 2
      %p3353 = scmp.lt.s32.totalorder %s3352, 6
      %s3354 = scalar_select %p3353, 1, 0
      %v3355 = vstv %s3354
      %vm3356 = vcmp.eq.s32.totalorder %v3355, 1
      %v3357 = vsel %vm3356, %v3351, %v2573
      %s3358 = scalar_lea.vmem %s615, 16
      %3359 = vst [vmem:[%s3358] sm:$0xff] %v3357
      %s3360 = scalar_lea.vmem %s584, 8
      %v3361 = vld [vmem:[%s3360] sm:$0xf]
      %v3362 = vunpack.c.l.bf16 %v3361
      %v3363 = vpack.c.bf16 %v3357, %v3357
      %3364 = vmatprep.subr.bf16.mxu0 0
      %3365 = vmatpush1.bf16.msra.mxu0 %v1781
      %3366 = vmatprep.subr.bf16.mxu0 0
      %3367 = vmatpush1.bf16.msra.mxu0 %v1782
      %3368 = vmatprep.subr.bf16.mxu0 0
      %3369 = vmatpush1.bf16.msra.mxu0 %v1783
      %3370 = vmatprep.subr.bf16.mxu0 0
      %3371 = vmatpush1.bf16.msra.mxu0 %v1784
      %3372 = vmatprep.subr.bf16.mxu0 0
      %3373 = vmatpush1.bf16.msra.mxu0 %v1785
      %3374 = vmatprep.subr.bf16.mxu0 0
      %3375 = vmatpush1.bf16.msra.mxu0 %v1786
      %3376 = vmatprep.subr.bf16.mxu0 0
      %3377 = vmatpush1.bf16.msra.mxu0 %v1787
      %3378 = vmatprep.subr.bf16.mxu0 0
      %3379 = vmatpush1.bf16.msra.mxu0 %v1788
      %3380 = vmatprep.subr.bf16.mxu0 0
      %3381 = vmatpush1.bf16.msra.mxu0 0
      %3382 = vmatprep.subr.bf16.mxu0 0
      %3383 = vmatpush1.bf16.msra.mxu0 0
      %3384 = vmatprep.subr.bf16.mxu0 0
      %3385 = vmatpush1.bf16.msra.mxu0 0
      %3386 = vmatprep.subr.bf16.mxu0 0
      %3387 = vmatpush1.bf16.msra.mxu0 0
      %3388 = vmatprep.subr.bf16.mxu0 0
      %3389 = vmatpush1.bf16.msra.mxu0 0
      %3390 = vmatprep.subr.bf16.mxu0 0
      %3391 = vmatpush1.bf16.msra.mxu0 0
      %3392 = vmatprep.subr.bf16.mxu0 0
      %3393 = vmatpush1.bf16.msra.mxu0 0
      %3394 = vmatprep.subr.bf16.mxu0 0
      %3395 = vmatpush1.bf16.msra.mxu0 0
      %3396 = vmatprep.mubr.bf16.mxu0 0
      %3397 = vmatmul.mubr.bf16.gmra.mrb[0].mxu0 %v3363
      %v3398 = vpop.f32.mrb[0].mxu0
      %v3399 = vadd.f32 0.0, %v3398
      %v3400 = vpop.f32.mrb[0].mxu0
      %v3401 = vpop.f32.mrb[0].mxu0
      %v3402 = vpop.f32.mrb[0].mxu0
      %3403 = vdwg.mxu0
      %v3404 = vadd.f32 %v3362, %v3399
      %v3405 = vadd.f32 %v3404, %v3318
      %s3406 = scalar_lea.vmem %s624, 16
      %3407 = vst [vmem:[%s3406] sm:$0xff] %v3405
      %3408 = vmatprep.subr.mxu0 %v673
      %3409 = vmatpush1.msra.mxu0 %v672
      %3410 = vmatprep.subr.mxu0 %v677
      %3411 = vmatpush1.msra.mxu0 %v676
      %3412 = vmatprep.subr.mxu0 %v681
      %3413 = vmatpush1.msra.mxu0 %v680
      %3414 = vmatprep.subr.mxu0 %v685
      %3415 = vmatpush1.msra.mxu0 %v684
      %3416 = vmatprep.subr.mxu0 %v689
      %3417 = vmatpush1.msra.mxu0 %v688
      %3418 = vmatprep.subr.mxu0 %v693
      %3419 = vmatpush1.msra.mxu0 %v692
      %3420 = vmatprep.subr.mxu0 %v697
      %3421 = vmatpush1.msra.mxu0 %v696
      %3422 = vmatprep.subr.mxu0 %v701
      %3423 = vmatpush1.msra.mxu0 %v700
      %3424 = vmatprep.subr.mxu0 %v705
      %3425 = vmatpush1.msra.mxu0 %v704
      %3426 = vmatprep.subr.mxu0 %v709
      %3427 = vmatpush1.msra.mxu0 %v708
      %3428 = vmatprep.subr.mxu0 %v713
      %3429 = vmatpush1.msra.mxu0 %v712
      %3430 = vmatprep.subr.mxu0 %v717
      %3431 = vmatpush1.msra.mxu0 %v716
      %3432 = vmatprep.subr.mxu0 %v721
      %3433 = vmatpush1.msra.mxu0 %v720
      %3434 = vmatprep.subr.mxu0 %v725
      %3435 = vmatpush1.msra.mxu0 %v724
      %3436 = vmatprep.subr.mxu0 %v729
      %3437 = vmatpush1.msra.mxu0 %v728
      %3438 = vmatprep.subr.mxu0 %v733
      %3439 = vmatpush1.msra.mxu0 %v732
      %3440 = vmatprep.subr.mxu0 0.0
      %3441 = vmatpush1.msra.mxu0 0.0
      %3442 = vmatprep.subr.mxu0 0.0
      %3443 = vmatpush1.msra.mxu0 0.0
      %3444 = vmatprep.subr.mxu0 0.0
      %3445 = vmatpush1.msra.mxu0 0.0
      %3446 = vmatprep.subr.mxu0 0.0
      %3447 = vmatpush1.msra.mxu0 0.0
      %3448 = vmatprep.subr.mxu0 0.0
      %3449 = vmatpush1.msra.mxu0 0.0
      %3450 = vmatprep.subr.mxu0 0.0
      %3451 = vmatpush1.msra.mxu0 0.0
      %3452 = vmatprep.subr.mxu0 0.0
      %3453 = vmatpush1.msra.mxu0 0.0
      %3454 = vmatprep.subr.mxu0 0.0
      %3455 = vmatpush1.msra.mxu0 0.0
      %3456 = vmatprep.subr.mxu0 0.0
      %3457 = vmatpush1.msra.mxu0 0.0
      %3458 = vmatprep.subr.mxu0 0.0
      %3459 = vmatpush1.msra.mxu0 0.0
      %3460 = vmatprep.subr.mxu0 0.0
      %3461 = vmatpush1.msra.mxu0 0.0
      %3462 = vmatprep.subr.mxu0 0.0
      %3463 = vmatpush1.msra.mxu0 0.0
      %3464 = vmatprep.subr.mxu0 0.0
      %3465 = vmatpush1.msra.mxu0 0.0
      %3466 = vmatprep.subr.mxu0 0.0
      %3467 = vmatpush1.msra.mxu0 0.0
      %3468 = vmatprep.subr.mxu0 0.0
      %3469 = vmatpush1.msra.mxu0 0.0
      %3470 = vmatprep.subr.mxu0 0.0
      %3471 = vmatpush1.msra.mxu0 0.0
      %3472 = vmatprep.mubr.f32.mxu0 0.0
      %3473 = vmatmul.mubr.f32.gmra.mrb[0].mxu0 %v3357
      %v3474 = vpop.f32.mrb[0].mxu0
      %v3475 = vadd.f32 0.0, %v3474
      %v3476 = vpop.f32.mrb[0].mxu0
      %v3477 = vadd.f32 0.0, %v3476
      %3478 = vdwg.mxu0
      %3479 = vmatprep.subr.mxu0 %v675
      %3480 = vmatpush1.msra.mxu0 %v674
      %3481 = vmatprep.subr.mxu0 %v679
      %3482 = vmatpush1.msra.mxu0 %v678
      %3483 = vmatprep.subr.mxu0 %v683
      %3484 = vmatpush1.msra.mxu0 %v682
      %3485 = vmatprep.subr.mxu0 %v687
      %3486 = vmatpush1.msra.mxu0 %v686
      %3487 = vmatprep.subr.mxu0 %v691
      %3488 = vmatpush1.msra.mxu0 %v690
      %3489 = vmatprep.subr.mxu0 %v695
      %3490 = vmatpush1.msra.mxu0 %v694
      %3491 = vmatprep.subr.mxu0 %v699
      %3492 = vmatpush1.msra.mxu0 %v698
      %3493 = vmatprep.subr.mxu0 %v703
      %3494 = vmatpush1.msra.mxu0 %v702
      %3495 = vmatprep.subr.mxu0 %v707
      %3496 = vmatpush1.msra.mxu0 %v706
      %3497 = vmatprep.subr.mxu0 %v711
      %3498 = vmatpush1.msra.mxu0 %v710
      %3499 = vmatprep.subr.mxu0 %v715
      %3500 = vmatpush1.msra.mxu0 %v714
      %3501 = vmatprep.subr.mxu0 %v719
      %3502 = vmatpush1.msra.mxu0 %v718
      %3503 = vmatprep.subr.mxu0 %v723
      %3504 = vmatpush1.msra.mxu0 %v722
      %3505 = vmatprep.subr.mxu0 %v727
      %3506 = vmatpush1.msra.mxu0 %v726
      %3507 = vmatprep.subr.mxu0 %v731
      %3508 = vmatpush1.msra.mxu0 %v730
      %3509 = vmatprep.subr.mxu0 %v735
      %3510 = vmatpush1.msra.mxu0 %v734
      %3511 = vmatprep.subr.mxu0 0.0
      %3512 = vmatpush1.msra.mxu0 0.0
      %3513 = vmatprep.subr.mxu0 0.0
      %3514 = vmatpush1.msra.mxu0 0.0
      %3515 = vmatprep.subr.mxu0 0.0
      %3516 = vmatpush1.msra.mxu0 0.0
      %3517 = vmatprep.subr.mxu0 0.0
      %3518 = vmatpush1.msra.mxu0 0.0
      %3519 = vmatprep.subr.mxu0 0.0
      %3520 = vmatpush1.msra.mxu0 0.0
      %3521 = vmatprep.subr.mxu0 0.0
      %3522 = vmatpush1.msra.mxu0 0.0
      %3523 = vmatprep.subr.mxu0 0.0
      %3524 = vmatpush1.msra.mxu0 0.0
      %3525 = vmatprep.subr.mxu0 0.0
      %3526 = vmatpush1.msra.mxu0 0.0
      %3527 = vmatprep.subr.mxu0 0.0
      %3528 = vmatpush1.msra.mxu0 0.0
      %3529 = vmatprep.subr.mxu0 0.0
      %3530 = vmatpush1.msra.mxu0 0.0
      %3531 = vmatprep.subr.mxu0 0.0
      %3532 = vmatpush1.msra.mxu0 0.0
      %3533 = vmatprep.subr.mxu0 0.0
      %3534 = vmatpush1.msra.mxu0 0.0
      %3535 = vmatprep.subr.mxu0 0.0
      %3536 = vmatpush1.msra.mxu0 0.0
      %3537 = vmatprep.subr.mxu0 0.0
      %3538 = vmatpush1.msra.mxu0 0.0
      %3539 = vmatprep.subr.mxu0 0.0
      %3540 = vmatpush1.msra.mxu0 0.0
      %3541 = vmatprep.subr.mxu0 0.0
      %3542 = vmatpush1.msra.mxu0 0.0
      %3543 = vmatprep.mubr.f32.mxu0 0.0
      %3544 = vmatmul.mubr.f32.gmra.mrb[0].mxu0 %v3357
      %v3545 = vpop.f32.mrb[0].mxu0
      %v3546 = vadd.f32 0.0, %v3545
      %v3547 = vpop.f32.mrb[0].mxu0
      %v3548 = vadd.f32 0.0, %v3547
      %3549 = vdwg.mxu0
      %v3550 = vadd.f32 %v3477, %v932
      %v3551 = vadd.f32 %v3546, %v936
      %v3552 = vadd.f32 %v3548, %v940
      %v3554 = vcombine.high %v3475, %v3475
      %v3556 = vunpack.c.l.s4 1966171168
      %v3557 = vunpack.c.0.s8 %v3556
      %v3558 = vlaneseq
      %v3559 = vshrl.u32 %v3558, 7
      %v3560 = vsub.s32 %v3557, %v3559
      %v3561 = vrot.slane %v3475, %v3560
      %v3563 = vunpack.c.l.s4 1966171168
      %v3564 = vunpack.c.0.s8 %v3563
      %v3565 = vlaneseq
      %v3566 = vshrl.u32 %v3565, 7
      %v3567 = vsub.s32 %v3564, %v3566
      %v3568 = vrot.slane %v3554, %v3567
      %v3569 = vcombine.high %v3561, %v3561
      %v3570 = vcombine.high %v3568, %v3568
      %v3572 = vunpack.c.l.s4 1966171168
      %v3573 = vunpack.c.0.s8 %v3572
      %v3574 = vlaneseq
      %v3575 = vshrl.u32 %v3574, 7
      %v3576 = vsub.s32 %v3573, %v3575
      %v3577 = vrot.slane %v3561, %v3576
      %v3579 = vunpack.c.l.s4 1966171168
      %v3580 = vunpack.c.0.s8 %v3579
      %v3581 = vlaneseq
      %v3582 = vshrl.u32 %v3581, 7
      %v3583 = vsub.s32 %v3580, %v3582
      %v3584 = vrot.slane %v3568, %v3583
      %v3586 = vunpack.c.l.s4 1966171168
      %v3587 = vunpack.c.0.s8 %v3586
      %v3588 = vlaneseq
      %v3589 = vshrl.u32 %v3588, 7
      %v3590 = vsub.s32 %v3587, %v3589
      %v3591 = vrot.slane %v3569, %v3590
      %v3593 = vunpack.c.l.s4 1966171168
      %v3594 = vunpack.c.0.s8 %v3593
      %v3595 = vlaneseq
      %v3596 = vshrl.u32 %v3595, 7
      %v3597 = vsub.s32 %v3594, %v3596
      %v3598 = vrot.slane %v3570, %v3597
      %v3599 = vcombine.high %v3577, %v3577
      %v3600 = vcombine.high %v3584, %v3584
      %v3601 = vcombine.high %v3591, %v3591
      %v3602 = vcombine.high %v3598, %v3598
      %v3603 = vlaneseq
      %v3604 = vshrl.u32 %v3603, 7
      %v3605 = vsub.s32 0, %v3604
      %v3606 = vrot.slane %v3577, %v3605
      %v3607 = vlaneseq
      %v3608 = vshrl.u32 %v3607, 7
      %v3609 = vsub.s32 0, %v3608
      %v3610 = vrot.slane %v3591, %v3609
      %v3611 = vlaneseq
      %v3612 = vshrl.u32 %v3611, 7
      %v3613 = vsub.s32 0, %v3612
      %v3614 = vrot.slane %v3599, %v3613
      %v3615 = vlaneseq
      %v3616 = vshrl.u32 %v3615, 7
      %v3617 = vsub.s32 0, %v3616
      %v3618 = vrot.slane %v3601, %v3617
      %v3619 = vlaneseq
      %v3620 = vshrl.u32 %v3619, 7
      %v3621 = vsub.s32 0, %v3620
      %v3622 = vrot.slane %v3584, %v3621
      %v3623 = vlaneseq
      %v3624 = vshrl.u32 %v3623, 7
      %v3625 = vsub.s32 0, %v3624
      %v3626 = vrot.slane %v3598, %v3625
      %v3627 = vlaneseq
      %v3628 = vshrl.u32 %v3627, 7
      %v3629 = vsub.s32 0, %v3628
      %v3630 = vrot.slane %v3600, %v3629
      %v3631 = vlaneseq
      %v3632 = vshrl.u32 %v3631, 7
      %v3633 = vsub.s32 0, %v3632
      %v3634 = vrot.slane %v3602, %v3633
      %v3643 = vadd.f32 %v3606, %v997
      %v3644 = vadd.f32 %v3606, %v998
      %v3645 = vadd.f32 %v3610, %v999
      %v3646 = vadd.f32 %v3610, %v1000
      %v3647 = vadd.f32 %v3614, %v1001
      %v3648 = vadd.f32 %v3614, %v1002
      %v3649 = vadd.f32 %v3618, %v1003
      %v3650 = vadd.f32 %v3618, %v1004
      %v3651 = vadd.f32 %v3622, %v1005
      %v3652 = vadd.f32 %v3622, %v1006
      %v3653 = vadd.f32 %v3626, %v1007
      %v3654 = vadd.f32 %v3626, %v1008
      %v3655 = vadd.f32 %v3630, %v1009
      %v3656 = vadd.f32 %v3630, %v1010
      %v3657 = vadd.f32 %v3634, %v1011
      %v3658 = vadd.f32 %v3634, %v1012
      %v3659 = vtanh.pop %v3643
      %v3660 = vtanh.pop %v3644
      %v3661 = vtanh.pop %v3645
      %v3662 = vtanh.pop %v3646
      %v3663 = vtanh.pop %v3647
      %v3664 = vtanh.pop %v3648
      %v3665 = vtanh.pop %v3649
      %v3666 = vtanh.pop %v3650
      %v3667 = vtanh.pop %v3651
      %v3668 = vtanh.pop %v3652
      %v3669 = vtanh.pop %v3653
      %v3670 = vtanh.pop %v3654
      %v3671 = vtanh.pop %v3655
      %v3672 = vtanh.pop %v3656
      %v3673 = vtanh.pop %v3657
      %v3674 = vtanh.pop %v3658
      %v3675 = vmul.f32 %v3659, %v1089
      %v3676 = vmul.f32 %v3660, %v1089
      %v3677 = vmul.f32 %v3661, %v1089
      %v3678 = vmul.f32 %v3662, %v1089
      %v3679 = vmul.f32 %v3663, %v1089
      %v3680 = vmul.f32 %v3664, %v1089
      %v3681 = vmul.f32 %v3665, %v1089
      %v3682 = vmul.f32 %v3666, %v1089
      %v3683 = vmul.f32 %v3667, %v1089
      %v3684 = vmul.f32 %v3668, %v1089
      %v3685 = vmul.f32 %v3669, %v1089
      %v3686 = vmul.f32 %v3670, %v1089
      %v3687 = vmul.f32 %v3671, %v1089
      %v3688 = vmul.f32 %v3672, %v1089
      %v3689 = vmul.f32 %v3673, %v1089
      %v3690 = vmul.f32 %v3674, %v1089
      %3691 = vadd.xlane.f32.xlu0 %v3675
      %v3692 = vpop.xlane.xlu0 %3691
      %3693 = vadd.xlane.f32.xlu0 %v3676
      %v3694 = vpop.xlane.xlu0 %3693
      %3695 = vadd.xlane.f32.xlu0 %v3677
      %v3696 = vpop.xlane.xlu0 %3695
      %3697 = vadd.xlane.f32.xlu0 %v3678
      %v3698 = vpop.xlane.xlu0 %3697
      %3699 = vadd.xlane.f32.xlu0 %v3679
      %v3700 = vpop.xlane.xlu0 %3699
      %3701 = vadd.xlane.f32.xlu0 %v3680
      %v3702 = vpop.xlane.xlu0 %3701
      %3703 = vadd.xlane.f32.xlu0 %v3681
      %v3704 = vpop.xlane.xlu0 %3703
      %3705 = vadd.xlane.f32.xlu0 %v3682
      %v3706 = vpop.xlane.xlu0 %3705
      %3707 = vadd.xlane.f32.xlu0 %v3683
      %v3708 = vpop.xlane.xlu0 %3707
      %3709 = vadd.xlane.f32.xlu0 %v3684
      %v3710 = vpop.xlane.xlu0 %3709
      %3711 = vadd.xlane.f32.xlu0 %v3685
      %v3712 = vpop.xlane.xlu0 %3711
      %3713 = vadd.xlane.f32.xlu0 %v3686
      %v3714 = vpop.xlane.xlu0 %3713
      %3715 = vadd.xlane.f32.xlu0 %v3687
      %v3716 = vpop.xlane.xlu0 %3715
      %3717 = vadd.xlane.f32.xlu0 %v3688
      %v3718 = vpop.xlane.xlu0 %3717
      %3719 = vadd.xlane.f32.xlu0 %v3689
      %v3720 = vpop.xlane.xlu0 %3719
      %3721 = vadd.xlane.f32.xlu0 %v3690
      %v3722 = vpop.xlane.xlu0 %3721
      %v3739 = vlaneseq
      %v3740 = vshrl.u32 %v3739, 7
      %v3741 = vsub.s32 %v1156, %v3740
      %v3742 = vrot.slane %v3692, %v3741
      %v3743 = vlaneseq
      %v3744 = vshrl.u32 %v3743, 7
      %v3745 = vsub.s32 %v1161, %v3744
      %v3746 = vrot.slane %v3694, %v3745
      %v3747 = vsel %vm1166, %v3746, %v3742
      %v3748 = vlaneseq
      %v3749 = vshrl.u32 %v3748, 7
      %v3750 = vsub.s32 %v1156, %v3749
      %v3751 = vrot.slane %v3696, %v3750
      %v3752 = vlaneseq
      %v3753 = vshrl.u32 %v3752, 7
      %v3754 = vsub.s32 %v1161, %v3753
      %v3755 = vrot.slane %v3698, %v3754
      %v3756 = vsel %vm1166, %v3755, %v3751
      %v3757 = vlaneseq
      %v3758 = vshrl.u32 %v3757, 7
      %v3759 = vsub.s32 %v1156, %v3758
      %v3760 = vrot.slane %v3700, %v3759
      %v3761 = vlaneseq
      %v3762 = vshrl.u32 %v3761, 7
      %v3763 = vsub.s32 %v1161, %v3762
      %v3764 = vrot.slane %v3702, %v3763
      %v3765 = vsel %vm1166, %v3764, %v3760
      %v3766 = vlaneseq
      %v3767 = vshrl.u32 %v3766, 7
      %v3768 = vsub.s32 %v1156, %v3767
      %v3769 = vrot.slane %v3704, %v3768
      %v3770 = vlaneseq
      %v3771 = vshrl.u32 %v3770, 7
      %v3772 = vsub.s32 %v1161, %v3771
      %v3773 = vrot.slane %v3706, %v3772
      %v3774 = vsel %vm1166, %v3773, %v3769
      %v3775 = vlaneseq
      %v3776 = vshrl.u32 %v3775, 7
      %v3777 = vsub.s32 %v1156, %v3776
      %v3778 = vrot.slane %v3708, %v3777
      %v3779 = vlaneseq
      %v3780 = vshrl.u32 %v3779, 7
      %v3781 = vsub.s32 %v1161, %v3780
      %v3782 = vrot.slane %v3710, %v3781
      %v3783 = vsel %vm1166, %v3782, %v3778
      %v3784 = vlaneseq
      %v3785 = vshrl.u32 %v3784, 7
      %v3786 = vsub.s32 %v1156, %v3785
      %v3787 = vrot.slane %v3712, %v3786
      %v3788 = vlaneseq
      %v3789 = vshrl.u32 %v3788, 7
      %v3790 = vsub.s32 %v1161, %v3789
      %v3791 = vrot.slane %v3714, %v3790
      %v3792 = vsel %vm1166, %v3791, %v3787
      %v3793 = vlaneseq
      %v3794 = vshrl.u32 %v3793, 7
      %v3795 = vsub.s32 %v1156, %v3794
      %v3796 = vrot.slane %v3716, %v3795
      %v3797 = vlaneseq
      %v3798 = vshrl.u32 %v3797, 7
      %v3799 = vsub.s32 %v1161, %v3798
      %v3800 = vrot.slane %v3718, %v3799
      %v3801 = vsel %vm1166, %v3800, %v3796
      %v3802 = vlaneseq
      %v3803 = vshrl.u32 %v3802, 7
      %v3804 = vsub.s32 %v1156, %v3803
      %v3805 = vrot.slane %v3720, %v3804
      %v3806 = vlaneseq
      %v3807 = vshrl.u32 %v3806, 7
      %v3808 = vsub.s32 %v1161, %v3807
      %v3809 = vrot.slane %v3722, %v3808
      %v3810 = vsel %vm1166, %v3809, %v3805
      %v3811 = vsel %vm1231, %v3756, %v3747
      %v3812 = vsel %vm1233, %v3765, %v3811
      %v3813 = vsel %vm1235, %v3774, %v3812
      %v3814 = vsel %vm1237, %v3783, %v3813
      %v3815 = vsel %vm1239, %v3792, %v3814
      %v3816 = vsel %vm1241, %v3801, %v3815
      %v3817 = vsel %vm1243, %v3810, %v3816
      %v3819 = vsel %vm670, %v3817, -1e+30
      %v3820 = vsel %vm1247, %v3819, -inf
      %3821 = vmax.xlane.f32.xlu0 %v3820
      %v3822 = vpop.xlane.xlu0 %3821
      %v3823 = vsub.f32 %v3819, %v3822
      %v3824 = vmul.f32 %v3823, 1.442695
      %v3825 = vpow.pop %v3824
      %v3826 = vsel %vm1247, %v3825, 0.0
      %3827 = vadd.xlane.f32.xlu0 %v3826
      %v3828 = vpop.xlane.xlu0 %3827
      %v3829 = vrcp.pop %v3828
      %v3830 = vmul.f32 %v3825, %v3829
      %v3831 = vlaneseq
      %v3832 = vshrl.u32 %v3831, 7
      %v3833 = vsub.s32 0, %v3832
      %v3834 = vrot.slane %v3830, %v3833
      %3836 = vbcast.lane.b32.xlu0 %v3834, 256
      %v3837 = vpop.permute.xlu0 %3836
      %s3839 = sor.u32 256, 8
      %3840 = vbcast.lane.b32.xlu0 %v3834, %s3839
      %v3841 = vpop.permute.xlu0 %3840
      %v3842 = vlaneseq
      %v3843 = vshrl.u32 %v3842, 7
      %v3844 = vsub.s32 1, %v3843
      %v3845 = vrot.slane %v3830, %v3844
      %3847 = vbcast.lane.b32.xlu0 %v3845, 256
      %v3848 = vpop.permute.xlu0 %3847
      %s3850 = sor.u32 256, 8
      %3851 = vbcast.lane.b32.xlu0 %v3845, %s3850
      %v3852 = vpop.permute.xlu0 %3851
      %v3853 = vlaneseq
      %v3854 = vshrl.u32 %v3853, 7
      %v3855 = vsub.s32 2, %v3854
      %v3856 = vrot.slane %v3830, %v3855
      %3858 = vbcast.lane.b32.xlu0 %v3856, 256
      %v3859 = vpop.permute.xlu0 %3858
      %s3861 = sor.u32 256, 8
      %3862 = vbcast.lane.b32.xlu0 %v3856, %s3861
      %v3863 = vpop.permute.xlu0 %3862
      %v3864 = vlaneseq
      %v3865 = vshrl.u32 %v3864, 7
      %v3866 = vsub.s32 3, %v3865
      %v3867 = vrot.slane %v3830, %v3866
      %3869 = vbcast.lane.b32.xlu0 %v3867, 256
      %v3870 = vpop.permute.xlu0 %3869
      %s3872 = sor.u32 256, 8
      %3873 = vbcast.lane.b32.xlu0 %v3867, %s3872
      %v3874 = vpop.permute.xlu0 %3873
      %v3875 = vlaneseq
      %v3876 = vshrl.u32 %v3875, 7
      %v3877 = vsub.s32 4, %v3876
      %v3878 = vrot.slane %v3830, %v3877
      %3880 = vbcast.lane.b32.xlu0 %v3878, 256
      %v3881 = vpop.permute.xlu0 %3880
      %s3883 = sor.u32 256, 8
      %3884 = vbcast.lane.b32.xlu0 %v3878, %s3883
      %v3885 = vpop.permute.xlu0 %3884
      %v3886 = vlaneseq
      %v3887 = vshrl.u32 %v3886, 7
      %v3888 = vsub.s32 5, %v3887
      %v3889 = vrot.slane %v3830, %v3888
      %3891 = vbcast.lane.b32.xlu0 %v3889, 256
      %v3892 = vpop.permute.xlu0 %3891
      %s3894 = sor.u32 256, 8
      %3895 = vbcast.lane.b32.xlu0 %v3889, %s3894
      %v3896 = vpop.permute.xlu0 %3895
      %v3897 = vlaneseq
      %v3898 = vshrl.u32 %v3897, 7
      %v3899 = vsub.s32 6, %v3898
      %v3900 = vrot.slane %v3830, %v3899
      %3902 = vbcast.lane.b32.xlu0 %v3900, 256
      %v3903 = vpop.permute.xlu0 %3902
      %s3905 = sor.u32 256, 8
      %3906 = vbcast.lane.b32.xlu0 %v3900, %s3905
      %v3907 = vpop.permute.xlu0 %3906
      %v3908 = vlaneseq
      %v3909 = vshrl.u32 %v3908, 7
      %v3910 = vsub.s32 7, %v3909
      %v3911 = vrot.slane %v3830, %v3910
      %3913 = vbcast.lane.b32.xlu0 %v3911, 256
      %v3914 = vpop.permute.xlu0 %3913
      %s3916 = sor.u32 256, 8
      %3917 = vbcast.lane.b32.xlu0 %v3911, %s3916
      %v3918 = vpop.permute.xlu0 %3917
      %v3919 = vmul.f32 %v3837, %v1347
      %v3920 = vmul.f32 %v3841, %v1348
      %v3921 = vmul.f32 %v3848, %v1349
      %v3922 = vmul.f32 %v3852, %v1350
      %v3923 = vmul.f32 %v3859, %v1351
      %v3924 = vmul.f32 %v3863, %v1352
      %v3925 = vmul.f32 %v3870, %v1353
      %v3926 = vmul.f32 %v3874, %v1354
      %v3927 = vmul.f32 %v3881, %v1355
      %v3928 = vmul.f32 %v3885, %v1356
      %v3929 = vmul.f32 %v3892, %v1357
      %v3930 = vmul.f32 %v3896, %v1358
      %v3931 = vmul.f32 %v3903, %v1359
      %v3932 = vmul.f32 %v3907, %v1360
      %v3933 = vmul.f32 %v3914, %v1361
      %v3934 = vmul.f32 %v3918, %v1362
      %v3935 = vadd.f32 %v3919, %v3920
      %v3936 = vrot.slane %v3935, 4
      %v3937 = vadd.f32 %v3935, %v3936
      %v3938 = vrot.slane %v3937, 2
      %v3939 = vadd.f32 %v3937, %v3938
      %v3940 = vrot.slane %v3939, 1
      %v3941 = vadd.f32 %v3939, %v3940
      %v3942 = vadd.f32 %v3921, %v3922
      %v3943 = vrot.slane %v3942, 4
      %v3944 = vadd.f32 %v3942, %v3943
      %v3945 = vrot.slane %v3944, 2
      %v3946 = vadd.f32 %v3944, %v3945
      %v3947 = vrot.slane %v3946, 1
      %v3948 = vadd.f32 %v3946, %v3947
      %v3949 = vadd.f32 %v3923, %v3924
      %v3950 = vrot.slane %v3949, 4
      %v3951 = vadd.f32 %v3949, %v3950
      %v3952 = vrot.slane %v3951, 2
      %v3953 = vadd.f32 %v3951, %v3952
      %v3954 = vrot.slane %v3953, 1
      %v3955 = vadd.f32 %v3953, %v3954
      %v3956 = vadd.f32 %v3925, %v3926
      %v3957 = vrot.slane %v3956, 4
      %v3958 = vadd.f32 %v3956, %v3957
      %v3959 = vrot.slane %v3958, 2
      %v3960 = vadd.f32 %v3958, %v3959
      %v3961 = vrot.slane %v3960, 1
      %v3962 = vadd.f32 %v3960, %v3961
      %v3963 = vadd.f32 %v3927, %v3928
      %v3964 = vrot.slane %v3963, 4
      %v3965 = vadd.f32 %v3963, %v3964
      %v3966 = vrot.slane %v3965, 2
      %v3967 = vadd.f32 %v3965, %v3966
      %v3968 = vrot.slane %v3967, 1
      %v3969 = vadd.f32 %v3967, %v3968
      %v3970 = vadd.f32 %v3929, %v3930
      %v3971 = vrot.slane %v3970, 4
      %v3972 = vadd.f32 %v3970, %v3971
      %v3973 = vrot.slane %v3972, 2
      %v3974 = vadd.f32 %v3972, %v3973
      %v3975 = vrot.slane %v3974, 1
      %v3976 = vadd.f32 %v3974, %v3975
      %v3977 = vadd.f32 %v3931, %v3932
      %v3978 = vrot.slane %v3977, 4
      %v3979 = vadd.f32 %v3977, %v3978
      %v3980 = vrot.slane %v3979, 2
      %v3981 = vadd.f32 %v3979, %v3980
      %v3982 = vrot.slane %v3981, 1
      %v3983 = vadd.f32 %v3981, %v3982
      %v3984 = vadd.f32 %v3933, %v3934
      %v3985 = vrot.slane %v3984, 4
      %v3986 = vadd.f32 %v3984, %v3985
      %v3987 = vrot.slane %v3986, 2
      %v3988 = vadd.f32 %v3986, %v3987
      %v3989 = vrot.slane %v3988, 1
      %v3990 = vadd.f32 %v3988, %v3989
      %v3991 = vpack.c.bf16 %v3941, %v3941
      %v3992 = vpack.c.bf16 %v3948, %v3948
      %v3993 = vpack.c.bf16 %v3955, %v3955
      %v3994 = vpack.c.bf16 %v3962, %v3962
      %v3995 = vpack.c.bf16 %v3969, %v3969
      %v3996 = vpack.c.bf16 %v3976, %v3976
      %v3997 = vpack.c.bf16 %v3983, %v3983
      %v3998 = vpack.c.bf16 %v3990, %v3990
      %v4007 = vunpack.c.l.b16 %v3991
      %v4008 = vunpack.c.l.b16 %v3992
      %v4009 = vunpack.c.l.b16 %v3993
      %v4010 = vunpack.c.l.b16 %v3994
      %v4011 = vunpack.c.l.b16 %v3995
      %v4012 = vunpack.c.l.b16 %v3996
      %v4013 = vunpack.c.l.b16 %v3997
      %v4014 = vunpack.c.l.b16 %v3998
      %v4015 = vsel %vm1231, %v4008, %v4007
      %v4016 = vsel %vm1233, %v4009, %v4015
      %v4017 = vsel %vm1235, %v4010, %v4016
      %v4018 = vsel %vm1237, %v4011, %v4017
      %v4019 = vsel %vm1239, %v4012, %v4018
      %v4020 = vsel %vm1241, %v4013, %v4019
      %v4021 = vsel %vm1243, %v4014, %v4020
      %v4022 = vpack.c.b16 %v4021, %v4021
      %4024 = vmatprep.subr.bf16.mxu0 %v1565
      %4025 = vmatpush1.bf16.msra.mxu0 %v1564
      %4026 = vmatprep.subr.bf16.mxu0 %v1569
      %4027 = vmatpush1.bf16.msra.mxu0 %v1568
      %4028 = vmatprep.subr.bf16.mxu0 %v1573
      %4029 = vmatpush1.bf16.msra.mxu0 %v1572
      %4030 = vmatprep.subr.bf16.mxu0 %v1577
      %4031 = vmatpush1.bf16.msra.mxu0 %v1576
      %4032 = vmatprep.subr.bf16.mxu0 %v1581
      %4033 = vmatpush1.bf16.msra.mxu0 %v1580
      %4034 = vmatprep.subr.bf16.mxu0 %v1585
      %4035 = vmatpush1.bf16.msra.mxu0 %v1584
      %4036 = vmatprep.subr.bf16.mxu0 %v1589
      %4037 = vmatpush1.bf16.msra.mxu0 %v1588
      %4038 = vmatprep.subr.bf16.mxu0 %v1593
      %4039 = vmatpush1.bf16.msra.mxu0 %v1592
      %4040 = vmatprep.subr.bf16.mxu0 0
      %4041 = vmatpush1.bf16.msra.mxu0 0
      %4042 = vmatprep.subr.bf16.mxu0 0
      %4043 = vmatpush1.bf16.msra.mxu0 0
      %4044 = vmatprep.subr.bf16.mxu0 0
      %4045 = vmatpush1.bf16.msra.mxu0 0
      %4046 = vmatprep.subr.bf16.mxu0 0
      %4047 = vmatpush1.bf16.msra.mxu0 0
      %4048 = vmatprep.subr.bf16.mxu0 0
      %4049 = vmatpush1.bf16.msra.mxu0 0
      %4050 = vmatprep.subr.bf16.mxu0 0
      %4051 = vmatpush1.bf16.msra.mxu0 0
      %4052 = vmatprep.subr.bf16.mxu0 0
      %4053 = vmatpush1.bf16.msra.mxu0 0
      %4054 = vmatprep.subr.bf16.mxu0 0
      %4055 = vmatpush1.bf16.msra.mxu0 0
      %4056 = vmatprep.mubr.bf16.mxu0 0
      %4057 = vmatmul.mubr.bf16.gmra.mrb[0].mxu0 %v4022
      %v4058 = vpop.f32.mrb[0].mxu0
      %v4059 = vadd.f32 0.0, %v4058
      %v4060 = vpop.f32.mrb[0].mxu0
      %v4061 = vadd.f32 0.0, %v4060
      %v4062 = vpop.f32.mrb[0].mxu0
      %v4063 = vpop.f32.mrb[0].mxu0
      %4064 = vdwg.mxu0
      %4065 = vmatprep.subr.bf16.mxu0 %v1567
      %4066 = vmatpush1.bf16.msra.mxu0 %v1566
      %4067 = vmatprep.subr.bf16.mxu0 %v1571
      %4068 = vmatpush1.bf16.msra.mxu0 %v1570
      %4069 = vmatprep.subr.bf16.mxu0 %v1575
      %4070 = vmatpush1.bf16.msra.mxu0 %v1574
      %4071 = vmatprep.subr.bf16.mxu0 %v1579
      %4072 = vmatpush1.bf16.msra.mxu0 %v1578
      %4073 = vmatprep.subr.bf16.mxu0 %v1583
      %4074 = vmatpush1.bf16.msra.mxu0 %v1582
      %4075 = vmatprep.subr.bf16.mxu0 %v1587
      %4076 = vmatpush1.bf16.msra.mxu0 %v1586
      %4077 = vmatprep.subr.bf16.mxu0 %v1591
      %4078 = vmatpush1.bf16.msra.mxu0 %v1590
      %4079 = vmatprep.subr.bf16.mxu0 %v1595
      %4080 = vmatpush1.bf16.msra.mxu0 %v1594
      %4081 = vmatprep.subr.bf16.mxu0 0
      %4082 = vmatpush1.bf16.msra.mxu0 0
      %4083 = vmatprep.subr.bf16.mxu0 0
      %4084 = vmatpush1.bf16.msra.mxu0 0
      %4085 = vmatprep.subr.bf16.mxu0 0
      %4086 = vmatpush1.bf16.msra.mxu0 0
      %4087 = vmatprep.subr.bf16.mxu0 0
      %4088 = vmatpush1.bf16.msra.mxu0 0
      %4089 = vmatprep.subr.bf16.mxu0 0
      %4090 = vmatpush1.bf16.msra.mxu0 0
      %4091 = vmatprep.subr.bf16.mxu0 0
      %4092 = vmatpush1.bf16.msra.mxu0 0
      %4093 = vmatprep.subr.bf16.mxu0 0
      %4094 = vmatpush1.bf16.msra.mxu0 0
      %4095 = vmatprep.subr.bf16.mxu0 0
      %4096 = vmatpush1.bf16.msra.mxu0 0
      %4097 = vmatprep.mubr.bf16.mxu0 0
      %4098 = vmatmul.mubr.bf16.gmra.mrb[0].mxu0 %v4022
      %v4099 = vpop.f32.mrb[0].mxu0
      %v4100 = vadd.f32 0.0, %v4099
      %v4101 = vpop.f32.mrb[0].mxu0
      %v4102 = vadd.f32 0.0, %v4101
      %v4103 = vpop.f32.mrb[0].mxu0
      %v4104 = vpop.f32.mrb[0].mxu0
      %4105 = vdwg.mxu0
      %s4106 = scalar_lea.vmem %s575, 36
      %v4107 = vld [vmem:[%s4106] sm:$0xff]
      %v4108 = vld [vmem:[%s4106 + $0x8] sm:$0xf]
      %v4109 = vunpack.c.l.bf16 %v4107
      %v4110 = vunpack.c.h.bf16 %v4107
      %v4111 = vunpack.c.l.bf16 %v4108
      %v4112 = vadd.f32 %v4109, %v4059
      %v4113 = vadd.f32 %v4110, %v4061
      %v4114 = vadd.f32 %v4111, %v4100
      %v4115 = vadd.f32 %v4112, %v3550
      %v4116 = vxor.u32 %v4115, 2147483648
      %v4117 = vmul.f32 %v4116, 1.442695
      %v4118 = vpow.pop %v4117
      %v4119 = vadd.f32 %v4118, 1.0
      %v4120 = vrcp.pop %v4119
      %v4121 = vmul.f32 1.0, %v4120
      %v4122 = vadd.f32 %v4113, %v3551
      %v4123 = vxor.u32 %v4122, 2147483648
      %v4124 = vmul.f32 %v4123, 1.442695
      %v4125 = vpow.pop %v4124
      %v4126 = vadd.f32 %v4125, 1.0
      %v4127 = vrcp.pop %v4126
      %v4128 = vmul.f32 1.0, %v4127
      %v4129 = vmul.f32 %v4121, %v3552
      %v4130 = vadd.f32 %v4114, %v4129
      %v4131 = vtanh.pop %v4130
      %v4132 = vsub.f32 1.0, %v4128
      %v4133 = vmul.f32 %v4132, %v4131
      %v4134 = vmul.f32 %v4128, %v3357
      %v4135 = vadd.f32 %v4133, %v4134
      %s4136 = sadd.s32 %s1739, 3
      %p4137 = scmp.lt.s32.totalorder %s4136, 6
      %s4138 = scalar_select %p4137, 1, 0
      %v4139 = vstv %s4138
      %vm4140 = vcmp.eq.s32.totalorder %v4139, 1
      %v4141 = vsel %vm4140, %v4135, %v3357
      %s4142 = scalar_lea.vmem %s615, 24
      %4143 = vst [vmem:[%s4142] sm:$0xff] %v4141
      %s4144 = scalar_lea.vmem %s584, 12
      %v4145 = vld [vmem:[%s4144] sm:$0xf]
      %v4146 = vunpack.c.l.bf16 %v4145
      %v4147 = vpack.c.bf16 %v4141, %v4141
      %4148 = vmatprep.subr.bf16.mxu0 0
      %4149 = vmatpush1.bf16.msra.mxu0 %v1781
      %4150 = vmatprep.subr.bf16.mxu0 0
      %4151 = vmatpush1.bf16.msra.mxu0 %v1782
      %4152 = vmatprep.subr.bf16.mxu0 0
      %4153 = vmatpush1.bf16.msra.mxu0 %v1783
      %4154 = vmatprep.subr.bf16.mxu0 0
      %4155 = vmatpush1.bf16.msra.mxu0 %v1784
      %4156 = vmatprep.subr.bf16.mxu0 0
      %4157 = vmatpush1.bf16.msra.mxu0 %v1785
      %4158 = vmatprep.subr.bf16.mxu0 0
      %4159 = vmatpush1.bf16.msra.mxu0 %v1786
      %4160 = vmatprep.subr.bf16.mxu0 0
      %4161 = vmatpush1.bf16.msra.mxu0 %v1787
      %4162 = vmatprep.subr.bf16.mxu0 0
      %4163 = vmatpush1.bf16.msra.mxu0 %v1788
      %4164 = vmatprep.subr.bf16.mxu0 0
      %4165 = vmatpush1.bf16.msra.mxu0 0
      %4166 = vmatprep.subr.bf16.mxu0 0
      %4167 = vmatpush1.bf16.msra.mxu0 0
      %4168 = vmatprep.subr.bf16.mxu0 0
      %4169 = vmatpush1.bf16.msra.mxu0 0
      %4170 = vmatprep.subr.bf16.mxu0 0
      %4171 = vmatpush1.bf16.msra.mxu0 0
      %4172 = vmatprep.subr.bf16.mxu0 0
      %4173 = vmatpush1.bf16.msra.mxu0 0
      %4174 = vmatprep.subr.bf16.mxu0 0
      %4175 = vmatpush1.bf16.msra.mxu0 0
      %4176 = vmatprep.subr.bf16.mxu0 0
      %4177 = vmatpush1.bf16.msra.mxu0 0
      %4178 = vmatprep.subr.bf16.mxu0 0
      %4179 = vmatpush1.bf16.msra.mxu0 0
      %4180 = vmatprep.mubr.bf16.mxu0 0
      %4181 = vmatmul.mubr.bf16.gmra.mrb[0].mxu0 %v4147
      %v4182 = vpop.f32.mrb[0].mxu0
      %v4183 = vadd.f32 0.0, %v4182
      %v4184 = vpop.f32.mrb[0].mxu0
      %v4185 = vpop.f32.mrb[0].mxu0
      %v4186 = vpop.f32.mrb[0].mxu0
      %4187 = vdwg.mxu0
      %v4188 = vadd.f32 %v4146, %v4183
      %v4189 = vadd.f32 %v4188, %v4102
      %s4190 = scalar_lea.vmem %s624, 24
      %4191 = vst [vmem:[%s4190] sm:$0xff] %v4189
      %4192 = vst [vmem:[#allocation2] sm:$0xff] %v4141
      %4193 = vst [vmem:[%s629] sm:$0xff] %v4141
      %s4194 = smul.u32 4, %s30
      %p4195 = scmp.lt.s32.totalorder %s4194, 7
      %s4196 = scalar_select %p4195, %s4194, 7
      %p4197 = scmp.lt.s32.totalorder %s29, 0
      %s4198 = scalar_select %p4197, %s29, 0
      %s4199 = sadd.s32 %s4198, %s4196
      %s4200 = smul.addr %s4199, 8
      %s4201 = scalar_lea.vmem %s11, %s4200
      %s4202 = smul.u32 4, %s30
      %p4203 = scmp.lt.s32.totalorder %s4202, 7
      %s4204 = scalar_select %p4203, %s4202, 7
      %p4205 = scmp.lt.s32.totalorder %s29, 0
      %s4206 = scalar_select %p4205, %s29, 0
      %s4207 = sadd.s32 %s4206, %s4204
      %s4208 = smul.addr %s4207, 8
      %s4209 = scalar_lea.vmem %s12, %s4208
      %p4210 = scmp.lt.s32.totalorder %s29, 0
      %s4211 = scalar_select %p4210, %s29, 0
      %s4212 = smul.addr %s4211, 8
      %s4213 = scalar_lea.vmem %s13, %s4212
      // Predicated region
      $region69: #{_lambda_.1} parent=63 // pred_check
        %p4214 = pneg %p322
      $region70: #{_lambda_.1} parent=63 // pred_check_branch
        %4216 = sbr.rel (%p4214) target = $region72
      $region71: #{_lambda_.1} parent=63 // pred_region
        %s4217 = smul.u32 4, %s30
      $region72: #{_lambda_.1} parent=63 // pred_fallthru
        _
      // Predicated region
      $region73: #{_lambda_.1} parent=63 // pred_check
        %p4218 = pneg %p350
      $region74: #{_lambda_.1} parent=63 // pred_check_branch
        %4220 = sbr.rel (%p4218) target = $region76
      $region75: #{_lambda_.1} parent=63 // pred_region
        %s4221 = smul.u32 4, %s30
      $region76: #{_lambda_.1} parent=63 // pred_fallthru
        _
      // Predicated region
      $region77: #{_lambda_.1} parent=63 // pred_check
        %p4222 = pneg %p376
      $region78: #{_lambda_.1} parent=63 // pred_check_branch
        %4224 = sbr.rel (%p4222) target = $region80
      $region79: #{_lambda_.1} parent=63 // pred_region
        _
      $region80: #{_lambda_.1} parent=63 // pred_fallthru
        _
      // Predicated region
      $region81: #{_lambda_.1} parent=63 // pred_check
        %p4225 = pneg %p376
      $region82: #{_lambda_.1} parent=63 // pred_check_branch
        %4227 = sbr.rel (%p4225) target = $region84
      $region83: #{_lambda_.1} parent=63 // pred_region
        %p4228 = scmp.lt.s32.totalorder %s29, 0
        %s4229 = scalar_select %p4228, %s29, 0
        %s4230 = smul.addr %s4229, 8
        %s4231 = scalar_lea.vmem %s13, %s4230
      $region84: #{_lambda_.1} parent=63 // pred_fallthru
        _
    $region64: #{_lambda_.1} parent=5 // pred_fallthru
      _
    %p4232 = scmp.le.s32.totalorder 2, %s20
    // Predicated region
    $region85: #{_lambda_.1} parent=5 // pred_check
      %p4233 = pneg %p4232
    $region86: #{_lambda_.1} parent=5 // pred_check_branch
      %4235 = sbr.rel (%p4233) target = $region88
    $region87: #{_lambda_.1} parent=5 // pred_region
      %s4236 = ssub.s32 %s20, 2
      // Predicated region
      $region89: #{_lambda_.1} parent=87 // pred_check
        %p4237 = pneg %p328
      $region90: #{_lambda_.1} parent=87 // pred_check_branch
        %4239 = sbr.rel (%p4237) target = $region92
      $region91: #{_lambda_.1} parent=87 // pred_region
        %s4240 = smul.u32 4, %s32
        %p4241 = scmp.lt.s32.totalorder %s4240, 7
        %s4242 = scalar_select %p4241, %s4240, 7
        %p4243 = scmp.lt.s32.totalorder %s31, 0
        %s4244 = scalar_select %p4243, %s31, 0
        %s4245 = sadd.s32 %s4244, %s4242
        %s4246 = smul.addr %s4245, 8
        %s4247 = scalar_lea.vmem %s11, %s4246
      $region92: #{_lambda_.1} parent=87 // pred_fallthru
        _
      // Predicated region
      $region93: #{_lambda_.1} parent=87 // pred_check
        %p4248 = pneg %p356
      $region94: #{_lambda_.1} parent=87 // pred_check_branch
        %4250 = sbr.rel (%p4248) target = $region96
      $region95: #{_lambda_.1} parent=87 // pred_region
        %s4251 = smul.u32 4, %s32
        %p4252 = scmp.lt.s32.totalorder %s4251, 7
        %s4253 = scalar_select %p4252, %s4251, 7
        %p4254 = scmp.lt.s32.totalorder %s31, 0
        %s4255 = scalar_select %p4254, %s31, 0
        %s4256 = sadd.s32 %s4255, %s4253
        %s4257 = smul.addr %s4256, 8
        %s4258 = scalar_lea.vmem %s12, %s4257
      $region96: #{_lambda_.1} parent=87 // pred_fallthru
        _
    $region88: #{_lambda_.1} parent=5 // pred_fallthru
      _
  $region6: #{_lambda_.1} parent=0 // loop_footer
    %s24 = sadd.s32 1, %s20
  $region7: #{_lambda_.1} parent=0 // loop_footer_branch
    %19 = sbr.rel target = $region3
  $region8: #{_lambda_.1} parent=0 // loop_exit
    _

</llo_original>
